<compile_context>
chip_gen: v7x
topology: tpu7x:2x2x1
jax: 0.10.0
libtpu: 0.0.40
codegen_flags: <defaults>
</compile_context>

<pallas_src>
import math
import functools

import jax
import jax.numpy as jnp
from jax.experimental import pallas as pl
from jax.experimental.pallas import tpu as pltpu


def _round_up(v, m):
    return (v + m - 1) // m * m


def _cdiv(a, b):
    return -(-a // b)


# -----------------------------------------------------------------------------
# Pallas kernel: fused VAE forward for one batch tile
# -----------------------------------------------------------------------------
def vae_kernel(
    x_ref, eps_ref,
    # encoder
    w1_ref, b1_ref, w2_ref, b2_ref, w3_ref, b3_ref,
    # fused latent heads: columns are [mu | logvar], each latent-padded
    wh_ref, bh_ref,
    # decoder
    dw1_ref, db1_ref, dw2_ref, db2_ref, dw3_ref, db3_ref, dw4_ref, db4_ref,
    # outputs
    xhat_ref, heads_ref,
):
    f32 = jnp.float32
    act_dtype = w1_ref.dtype        # bf16 inter-layer activations

    def linear(h, w_ref, b_ref):
        # MXU matmul in the weight dtype (bf16), f32 accumulation, f32 bias.
        return (jnp.dot(h.astype(w_ref.dtype), w_ref[...],
                        preferred_element_type=f32)
                + b_ref[...].astype(f32))

    def linrelu(h, w_ref, b_ref):
        # ReLU on the f32 accumulation, keep the live activation in bf16.
        return jnp.maximum(linear(h, w_ref, b_ref), 0.0).astype(act_dtype)

    x = x_ref[...]                  # bf16, lane-padded to d_pad

    # ---- encoder: 3x (Linear -> ReLU) ----
    h = linrelu(x, w1_ref, b1_ref)
    h = linrelu(h, w2_ref, b2_ref)
    h = linrelu(h, w3_ref, b3_ref)

    # ---- fused latent heads: one 256-lane matmul -> [mu | logvar] ----
    zp = eps_ref.shape[-1]
    heads = linear(h, wh_ref, bh_ref)           # (TB, 2*zp), f32
    mu = heads[:, :zp]
    logvar = heads[:, zp:]

    # ---- reparametrize: z = mu + exp(logvar / 2) * eps  (f32 elementwise) ----
    z = mu + jnp.exp(logvar * 0.5) * eps_ref[...].astype(f32)

    # ---- decoder: 3x (Linear -> ReLU), Linear -> Sigmoid ----
    d = linrelu(z, dw1_ref, db1_ref)
    d = linrelu(d, dw2_ref, db2_ref)
    d = linrelu(d, dw3_ref, db3_ref)
    x_hat = jax.nn.sigmoid(linear(d, dw4_ref, db4_ref))

    xhat_ref[...] = x_hat.astype(xhat_ref.dtype)
    heads_ref[...] = heads.astype(heads_ref.dtype)


# -----------------------------------------------------------------------------
# Parameter init (deterministic, PyTorch-nn.Linear-style uniform), stored as
# W_t with shape (in, out) so y = x @ W_t + b matches nn.Linear.
# -----------------------------------------------------------------------------
def _linear_params(key, fan_in, fan_out):
    kw, kb = jax.random.split(key)
    bound = 1.0 / math.sqrt(fan_in)
    w_t = jax.random.uniform(kw, (fan_in, fan_out), jnp.float32, -bound, bound)
    b = jax.random.uniform(kb, (1, fan_out), jnp.float32, -bound, bound)
    return w_t, b


def init_vae_params(key, input_size, latent_size=15, hidden_dim=256):
    keys = jax.random.split(key, 9)
    p = {}
    p["w1"], p["b1"] = _linear_params(keys[0], input_size, hidden_dim)
    p["w2"], p["b2"] = _linear_params(keys[1], hidden_dim, hidden_dim)
    p["w3"], p["b3"] = _linear_params(keys[2], hidden_dim, hidden_dim)
    p["wmu"], p["bmu"] = _linear_params(keys[3], hidden_dim, latent_size)
    p["wlv"], p["blv"] = _linear_params(keys[4], hidden_dim, latent_size)
    p["dw1"], p["db1"] = _linear_params(keys[5], latent_size, hidden_dim)
    p["dw2"], p["db2"] = _linear_params(keys[6], hidden_dim, hidden_dim)
    p["dw3"], p["db3"] = _linear_params(keys[7], hidden_dim, hidden_dim)
    p["dw4"], p["db4"] = _linear_params(keys[8], hidden_dim, input_size)
    return p


# -----------------------------------------------------------------------------
# Pad / fuse / cast params into kernel layout (done once, outside the kernel)
# -----------------------------------------------------------------------------
def prepare_kernel_params(params, input_size, latent_size, hidden_dim,
                          matmul_dtype=jnp.bfloat16):
    """Zero-pads D to a multiple of 128, pads latent to 128 lanes, fuses the
    mu/logvar heads into one (hidden, 2*ZP) matrix, and casts weights to
    `matmul_dtype` (biases stay f32; they are added after f32 accumulation)."""
    d_pad = _round_up(input_size, 128)
    zp = _round_up(latent_size, 128)

    def pad2(a, rows, cols):
        return jnp.pad(a, ((0, rows - a.shape[0]), (0, cols - a.shape[1])))

    w1 = pad2(params["w1"], d_pad, hidden_dim)
    wmu = pad2(params["wmu"], hidden_dim, zp)
    wlv = pad2(params["wlv"], hidden_dim, zp)
    wh = jnp.concatenate([wmu, wlv], axis=1)            # (hidden, 2*zp)
    bmu = pad2(params["bmu"], 1, zp)
    blv = pad2(params["blv"], 1, zp)
    bh = jnp.concatenate([bmu, blv], axis=1)            # (1, 2*zp)
    dw1 = pad2(params["dw1"], zp, hidden_dim)           # padded z lanes are 0
    dw4 = pad2(params["dw4"], hidden_dim, d_pad)
    db4 = pad2(params["db4"], 1, d_pad)

    cast = lambda w: w.astype(matmul_dtype)
    return dict(
        w1=cast(w1), b1=params["b1"],
        w2=cast(params["w2"]), b2=params["b2"],
        w3=cast(params["w3"]), b3=params["b3"],
        wh=cast(wh), bh=bh,
        dw1=cast(dw1), db1=params["db1"],
        dw2=cast(params["dw2"]), db2=params["db2"],
        dw3=cast(params["dw3"]), db3=params["db3"],
        dw4=cast(dw4), db4=db4,
    )


# -----------------------------------------------------------------------------
# Trace-time device tuning
# -----------------------------------------------------------------------------
def _vmem_limit_bytes():
    """48 MiB on 64-MiB-VMEM chips (v7x), 96 MiB on 128-MiB chips (v5e/v6e)."""
    try:
        cap = int(pltpu.get_tpu_info().vmem_capacity_bytes)
    except Exception:
        cap = 64 << 20                                   # conservative default
    return (96 << 20) if cap >= (100 << 20) else (48 << 20)


def _select_tb(N, d_pad, zp, hidden_dim, weight_bytes, vmem_limit):
    """Pick the batch tile: VMEM-guarded, >=2 tiles when feasible (v7x
    megacore), and sized to bound batch-padding waste."""
    # Per-row pipelined-buffer bytes: x + x_hat bf16 (double-buffered),
    # eps + heads f32 (double-buffered), plus live in-kernel temporaries.
    per_row = (2 * (2 * d_pad * 2 + zp * 4 + 2 * zp * 4)
               + 8 * max(d_pad, hidden_dim) + 8 * hidden_dim)
    budget = max(per_row * 8, vmem_limit - weight_bytes - (6 << 20))
    cap_rows = 1024 if vmem_limit > (64 << 20) else 512
    cap = max(8, min(cap_rows, (budget // per_row) // 8 * 8))
    # >=2 grid steps when there is enough real work for both v7x TCs.
    min_tiles = 2 if N >= 16 else 1
    n_tiles = max(min_tiles, _cdiv(N, cap))
    return min(cap, _round_up(_cdiv(N, n_tiles), 8))


# -----------------------------------------------------------------------------
# Wrapper
# -----------------------------------------------------------------------------
@functools.partial(
    jax.jit,
    static_argnames=("latent_size", "hidden_dim", "single_buffer_weights"))
def vae_forward(x, eps, kparams, latent_size=15, hidden_dim=256,
                single_buffer_weights=True):
    """x: (N, 1, H, W) float32; eps: (N, Z) float32 standard normal."""
    N, C, H, W = x.shape
    D = C * H * W
    d_pad = kparams["dw4"].shape[1]
    zp = kparams["dw1"].shape[0]

    ordered = [
        kparams["w1"], kparams["b1"], kparams["w2"], kparams["b2"],
        kparams["w3"], kparams["b3"], kparams["wh"], kparams["bh"],
        kparams["dw1"], kparams["db1"], kparams["dw2"], kparams["db2"],
        kparams["dw3"], kparams["db3"], kparams["dw4"], kparams["db4"],
    ]
    weight_bytes = sum(int(a.size) * a.dtype.itemsize for a in ordered)

    vmem_limit = _vmem_limit_bytes()
    tb = _select_tb(N, d_pad, zp, hidden_dim, weight_bytes, vmem_limit)
    n_pad = _round_up(N, tb)

    # bf16 input (halves steady-state HBM read traffic); skip pads when no-op.
    x_flat = x.reshape(N, D).astype(jnp.bfloat16)
    if (n_pad, d_pad) != (N, D):
        x_flat = jnp.pad(x_flat, ((0, n_pad - N), (0, d_pad - D)))
    eps_p = eps.astype(jnp.float32)
    if (n_pad, zp) != eps_p.shape:
        eps_p = jnp.pad(eps_p, ((0, n_pad - N), (0, zp - latent_size)))

    def tile_spec(cols):
        return pl.BlockSpec((tb, cols), lambda i: (i, 0))

    if single_buffer_weights:
        def resident_spec(arr):
            # Full-array block, constant index_map, single buffer: stays
            # VMEM-resident across batch tiles with no 2nd pipeline buffer.
            return pl.BlockSpec(arr.shape, lambda i: (0, 0),
                                pipeline_mode=pl.Buffered(1))
    else:
        def resident_spec(arr):
            return pl.BlockSpec(arr.shape, lambda i: (0, 0))

    hd = hidden_dim
    flops = 2 * n_pad * (d_pad * hd + 4 * hd * hd + hd * 2 * zp
                         + zp * hd + hd * d_pad)
    transcendentals = n_pad * (zp + d_pad)               # exp + sigmoid
    bytes_accessed = (x_flat.size * 2 + eps_p.size * 4
                      + n_pad * (d_pad * 2 + 2 * zp * 4)
                      + weight_bytes)

    x_hat_p, heads_p = pl.pallas_call(
        vae_kernel,
        out_shape=(
            jax.ShapeDtypeStruct((n_pad, d_pad), jnp.bfloat16),
            jax.ShapeDtypeStruct((n_pad, 2 * zp), jnp.float32),
        ),
        grid=(n_pad // tb,),
        in_specs=[tile_spec(d_pad), tile_spec(zp)]
                 + [resident_spec(a) for a in ordered],
        out_specs=(tile_spec(d_pad), tile_spec(2 * zp)),
        compiler_params=pltpu.CompilerParams(
            dimension_semantics=("parallel",),
            vmem_limit_bytes=vmem_limit,
        ),
        cost_estimate=pl.CostEstimate(
            flops=flops,
            transcendentals=transcendentals,
            bytes_accessed=bytes_accessed,
        ),
    )(x_flat, eps_p, *ordered)

    x_hat = x_hat_p[:N, :D].astype(jnp.float32).reshape(N, C, H, W)
    mu = heads_p[:N, :latent_size]
    logvar = heads_p[:N, zp:zp + latent_size]
    return x_hat, mu, logvar


def run_vae(x, eps, kparams, latent_size, hidden_dim):
    """Run with single-buffered resident weights; fall back to default
    double-buffering if the runtime rejects pl.Buffered(1)."""
    try:
        out = vae_forward(x, eps, kparams, latent_size=latent_size,
                          hidden_dim=hidden_dim, single_buffer_weights=True)
        jax.block_until_ready(out)
        return out
    except Exception:
        out = vae_forward(x, eps, kparams, latent_size=latent_size,
                          hidden_dim=hidden_dim, single_buffer_weights=False)
        jax.block_until_ready(out)
        return out


# -----------------------------------------------------------------------------
# References for sanity checking
# -----------------------------------------------------------------------------
def vae_reference_f32(x, eps, params):
    N = x.shape[0]
    h = x.reshape(N, -1)
    h = jnp.maximum(h @ params["w1"] + params["b1"], 0.0)
    h = jnp.maximum(h @ params["w2"] + params["b2"], 0.0)
    h = jnp.maximum(h @ params["w3"] + params["b3"], 0.0)
    mu = h @ params["wmu"] + params["bmu"]
    logvar = h @ params["wlv"] + params["blv"]
    z = mu + jnp.exp(logvar * 0.5) * eps
    d = jnp.maximum(z @ params["dw1"] + params["db1"], 0.0)
    d = jnp.maximum(d @ params["dw2"] + params["db2"], 0.0)
    d = jnp.maximum(d @ params["dw3"] + params["db3"], 0.0)
    x_hat = jax.nn.sigmoid(d @ params["dw4"] + params["db4"])
    return x_hat.reshape(x.shape), mu, logvar


def vae_reference_matched(x, eps, params, mdt=jnp.bfloat16):
    """Mirrors the kernel's numerics: bf16 matmul operands + bf16 inter-layer
    activations, f32 accumulation, f32 reparametrize/sigmoid, bf16 x_hat."""
    f32 = jnp.float32

    def lin(h, w, b):
        return jnp.dot(h.astype(mdt), w.astype(mdt),
                       preferred_element_type=f32) + b.astype(f32)

    def linrelu(h, w, b):
        return jnp.maximum(lin(h, w, b), 0.0).astype(mdt)

    N = x.shape[0]
    h = x.reshape(N, -1).astype(mdt)
    h = linrelu(h, params["w1"], params["b1"])
    h = linrelu(h, params["w2"], params["b2"])
    h = linrelu(h, params["w3"], params["b3"])
    mu = lin(h, params["wmu"], params["bmu"])
    logvar = lin(h, params["wlv"], params["blv"])
    z = mu + jnp.exp(logvar * 0.5) * eps
    d = linrelu(z, params["dw1"], params["db1"])
    d = linrelu(d, params["dw2"], params["db2"])
    d = linrelu(d, params["dw3"], params["db3"])
    x_hat = jax.nn.sigmoid(lin(d, params["dw4"], params["db4"]))
    x_hat = x_hat.astype(mdt).astype(f32)
    return x_hat.reshape(x.shape), mu, logvar


if __name__ == "__main__":
    # Module-consistent small shapes: N=2, 1x16x16 images -> input_size=256.
    N, H, W = 2, 16, 16
    input_size = H * W
    latent_size = 15
    hidden_dim = 256

    key = jax.random.PRNGKey(0)
    k_x, k_eps, k_params = jax.random.split(key, 3)

    x = jax.random.uniform(k_x, (N, 1, H, W), jnp.float32)         # image input
    eps = jax.random.normal(k_eps, (N, latent_size), jnp.float32)  # reparam noise
    params = init_vae_params(k_params, input_size, latent_size, hidden_dim)
    kparams = prepare_kernel_params(params, input_size, latent_size, hidden_dim)

    x_hat, mu, logvar = run_vae(x, eps, kparams, latent_size, hidden_dim)

    assert x_hat.shape == (N, 1, H, W)
    assert mu.shape == (N, latent_size) and logvar.shape == (N, latent_size)

    # Strict check vs a reference that mirrors the kernel's bf16 numerics.
    xm, mm, lm = vae_reference_matched(x, eps, params)
    assert jnp.allclose(x_hat, xm, atol=1e-2, rtol=1e-2)
    assert jnp.allclose(mu, mm, atol=5e-3, rtol=1e-2)
    assert jnp.allclose(logvar, lm, atol=5e-3, rtol=1e-2)

    # Loose check vs the pure-f32 reference (bf16 matmuls/activations).
    xf, mf, lf = vae_reference_f32(x, eps, params)
    assert jnp.allclose(x_hat, xf, atol=1e-1, rtol=1e-1)
    assert jnp.allclose(mu, mf, atol=1e-1, rtol=1e-1)
    assert jnp.allclose(logvar, lf, atol=1e-1, rtol=1e-1)

    print("KERNEL_OK")
</pallas_src>

<mosaic_0001>
module attributes {stable_mosaic.version = 11 : i64} {
  func.func @vae_kernel(%arg0: i32, %arg1: memref<8x256xbf16, #tpu.memory_space<vmem>>, %arg2: memref<8x128xf32, #tpu.memory_space<vmem>>, %arg3: memref<256x256xbf16, #tpu.memory_space<vmem>>, %arg4: memref<1x256xf32, #tpu.memory_space<vmem>>, %arg5: memref<256x256xbf16, #tpu.memory_space<vmem>>, %arg6: memref<1x256xf32, #tpu.memory_space<vmem>>, %arg7: memref<256x256xbf16, #tpu.memory_space<vmem>>, %arg8: memref<1x256xf32, #tpu.memory_space<vmem>>, %arg9: memref<256x256xbf16, #tpu.memory_space<vmem>>, %arg10: memref<1x256xf32, #tpu.memory_space<vmem>>, %arg11: memref<128x256xbf16, #tpu.memory_space<vmem>>, %arg12: memref<1x256xf32, #tpu.memory_space<vmem>>, %arg13: memref<256x256xbf16, #tpu.memory_space<vmem>>, %arg14: memref<1x256xf32, #tpu.memory_space<vmem>>, %arg15: memref<256x256xbf16, #tpu.memory_space<vmem>>, %arg16: memref<1x256xf32, #tpu.memory_space<vmem>>, %arg17: memref<256x256xbf16, #tpu.memory_space<vmem>>, %arg18: memref<1x256xf32, #tpu.memory_space<vmem>>, %arg19: memref<8x256xbf16, #tpu.memory_space<vmem>>, %arg20: memref<8x256xf32, #tpu.memory_space<vmem>>) attributes {dimension_semantics = [#tpu.dimension_semantics<parallel>], iteration_bounds = array<i64: 1>, scalar_prefetch = 0 : i64, scratch_operands = 0 : i64, tpu.core_type = #tpu.core_type<tc>, window_params = [{transform_indices = @transform_0, window_bounds = array<i64: 8, 256>}, {transform_indices = @transform_1, window_bounds = array<i64: 8, 128>}, {pipeline_mode = #tpu.pipeline_mode<synchronous>, transform_indices = @transform_2, window_bounds = array<i64: 256, 256>}, {pipeline_mode = #tpu.pipeline_mode<synchronous>, transform_indices = @transform_3, window_bounds = array<i64: 1, 256>}, {pipeline_mode = #tpu.pipeline_mode<synchronous>, transform_indices = @transform_4, window_bounds = array<i64: 256, 256>}, {pipeline_mode = #tpu.pipeline_mode<synchronous>, transform_indices = @transform_5, window_bounds = array<i64: 1, 256>}, {pipeline_mode = #tpu.pipeline_mode<synchronous>, transform_indices = @transform_6, window_bounds = array<i64: 256, 256>}, {pipeline_mode = #tpu.pipeline_mode<synchronous>, transform_indices = @transform_7, window_bounds = array<i64: 1, 256>}, {pipeline_mode = #tpu.pipeline_mode<synchronous>, transform_indices = @transform_8, window_bounds = array<i64: 256, 256>}, {pipeline_mode = #tpu.pipeline_mode<synchronous>, transform_indices = @transform_9, window_bounds = array<i64: 1, 256>}, {pipeline_mode = #tpu.pipeline_mode<synchronous>, transform_indices = @transform_10, window_bounds = array<i64: 128, 256>}, {pipeline_mode = #tpu.pipeline_mode<synchronous>, transform_indices = @transform_11, window_bounds = array<i64: 1, 256>}, {pipeline_mode = #tpu.pipeline_mode<synchronous>, transform_indices = @transform_12, window_bounds = array<i64: 256, 256>}, {pipeline_mode = #tpu.pipeline_mode<synchronous>, transform_indices = @transform_13, window_bounds = array<i64: 1, 256>}, {pipeline_mode = #tpu.pipeline_mode<synchronous>, transform_indices = @transform_14, window_bounds = array<i64: 256, 256>}, {pipeline_mode = #tpu.pipeline_mode<synchronous>, transform_indices = @transform_15, window_bounds = array<i64: 1, 256>}, {pipeline_mode = #tpu.pipeline_mode<synchronous>, transform_indices = @transform_16, window_bounds = array<i64: 256, 256>}, {pipeline_mode = #tpu.pipeline_mode<synchronous>, transform_indices = @transform_17, window_bounds = array<i64: 1, 256>}, {transform_indices = @transform_18, window_bounds = array<i64: 8, 256>}, {transform_indices = @transform_19, window_bounds = array<i64: 8, 256>}]} {
    %c0 = arith.constant 0 : index
    %c0_0 = arith.constant 0 : index
    %0 = vector.load %arg1[%c0, %c0_0] : memref<8x256xbf16, #tpu.memory_space<vmem>>, vector<8x256xbf16>
    %c0_1 = arith.constant 0 : index
    %c0_2 = arith.constant 0 : index
    %1 = vector.load %arg3[%c0_1, %c0_2] : memref<256x256xbf16, #tpu.memory_space<vmem>>, vector<256x256xbf16>
    %cst = arith.constant dense<0.000000e+00> : vector<8x256xf32>
    %2 = tpu.matmul %0, %1, %cst {dimension_numbers = #tpu.dot_dimension_numbers<[1], [0], [0], [1], [0, 0, 1, 1], [], []>} : vector<8x256xbf16>, vector<256x256xbf16>, vector<8x256xf32> -> vector<8x256xf32>
    %c0_3 = arith.constant 0 : index
    %c0_4 = arith.constant 0 : index
    %3 = vector.load %arg4[%c0_3, %c0_4] : memref<1x256xf32, #tpu.memory_space<vmem>>, vector<1x256xf32>
    %4 = vector.broadcast %3 : vector<1x256xf32> to vector<8x256xf32>
    %5 = arith.addf %2, %4 : vector<8x256xf32>
    %cst_5 = arith.constant 0.000000e+00 : f32
    %6 = vector.broadcast %cst_5 : f32 to vector<8x256xf32>
    %7 = arith.maximumf %5, %6 : vector<8x256xf32>
    %8 = arith.truncf %7 : vector<8x256xf32> to vector<8x256xbf16>
    %c0_6 = arith.constant 0 : index
    %c0_7 = arith.constant 0 : index
    %9 = vector.load %arg5[%c0_6, %c0_7] : memref<256x256xbf16, #tpu.memory_space<vmem>>, vector<256x256xbf16>
    %cst_8 = arith.constant dense<0.000000e+00> : vector<8x256xf32>
    %10 = tpu.matmul %8, %9, %cst_8 {dimension_numbers = #tpu.dot_dimension_numbers<[1], [0], [0], [1], [0, 0, 1, 1], [], []>} : vector<8x256xbf16>, vector<256x256xbf16>, vector<8x256xf32> -> vector<8x256xf32>
    %c0_9 = arith.constant 0 : index
    %c0_10 = arith.constant 0 : index
    %11 = vector.load %arg6[%c0_9, %c0_10] : memref<1x256xf32, #tpu.memory_space<vmem>>, vector<1x256xf32>
    %12 = vector.broadcast %11 : vector<1x256xf32> to vector<8x256xf32>
    %13 = arith.addf %10, %12 : vector<8x256xf32>
    %cst_11 = arith.constant 0.000000e+00 : f32
    %14 = vector.broadcast %cst_11 : f32 to vector<8x256xf32>
    %15 = arith.maximumf %13, %14 : vector<8x256xf32>
    %16 = arith.truncf %15 : vector<8x256xf32> to vector<8x256xbf16>
    %c0_12 = arith.constant 0 : index
    %c0_13 = arith.constant 0 : index
    %17 = vector.load %arg7[%c0_12, %c0_13] : memref<256x256xbf16, #tpu.memory_space<vmem>>, vector<256x256xbf16>
    %cst_14 = arith.constant dense<0.000000e+00> : vector<8x256xf32>
    %18 = tpu.matmul %16, %17, %cst_14 {dimension_numbers = #tpu.dot_dimension_numbers<[1], [0], [0], [1], [0, 0, 1, 1], [], []>} : vector<8x256xbf16>, vector<256x256xbf16>, vector<8x256xf32> -> vector<8x256xf32>
    %c0_15 = arith.constant 0 : index
    %c0_16 = arith.constant 0 : index
    %19 = vector.load %arg8[%c0_15, %c0_16] : memref<1x256xf32, #tpu.memory_space<vmem>>, vector<1x256xf32>
    %20 = vector.broadcast %19 : vector<1x256xf32> to vector<8x256xf32>
    %21 = arith.addf %18, %20 : vector<8x256xf32>
    %cst_17 = arith.constant 0.000000e+00 : f32
    %22 = vector.broadcast %cst_17 : f32 to vector<8x256xf32>
    %23 = arith.maximumf %21, %22 : vector<8x256xf32>
    %24 = arith.truncf %23 : vector<8x256xf32> to vector<8x256xbf16>
    %c0_18 = arith.constant 0 : index
    %c0_19 = arith.constant 0 : index
    %25 = vector.load %arg9[%c0_18, %c0_19] : memref<256x256xbf16, #tpu.memory_space<vmem>>, vector<256x256xbf16>
    %cst_20 = arith.constant dense<0.000000e+00> : vector<8x256xf32>
    %26 = tpu.matmul %24, %25, %cst_20 {dimension_numbers = #tpu.dot_dimension_numbers<[1], [0], [0], [1], [0, 0, 1, 1], [], []>} : vector<8x256xbf16>, vector<256x256xbf16>, vector<8x256xf32> -> vector<8x256xf32>
    %c0_21 = arith.constant 0 : index
    %c0_22 = arith.constant 0 : index
    %27 = vector.load %arg10[%c0_21, %c0_22] : memref<1x256xf32, #tpu.memory_space<vmem>>, vector<1x256xf32>
    %28 = vector.broadcast %27 : vector<1x256xf32> to vector<8x256xf32>
    %29 = arith.addf %26, %28 : vector<8x256xf32>
    %30 = vector.extract_strided_slice %29 {offsets = [0, 0], sizes = [8, 128], strides = [1, 1]} : vector<8x256xf32> to vector<8x128xf32>
    %31 = vector.extract_strided_slice %29 {offsets = [0, 128], sizes = [8, 128], strides = [1, 1]} : vector<8x256xf32> to vector<8x128xf32>
    %cst_23 = arith.constant 5.000000e-01 : f32
    %32 = vector.broadcast %cst_23 : f32 to vector<8x128xf32>
    %33 = arith.mulf %31, %32 : vector<8x128xf32>
    %34 = math.exp %33 : vector<8x128xf32>
    %c0_24 = arith.constant 0 : index
    %c0_25 = arith.constant 0 : index
    %35 = vector.load %arg2[%c0_24, %c0_25] : memref<8x128xf32, #tpu.memory_space<vmem>>, vector<8x128xf32>
    %36 = arith.mulf %34, %35 : vector<8x128xf32>
    %37 = arith.addf %30, %36 : vector<8x128xf32>
    %38 = arith.truncf %37 : vector<8x128xf32> to vector<8x128xbf16>
    %c0_26 = arith.constant 0 : index
    %c0_27 = arith.constant 0 : index
    %39 = vector.load %arg11[%c0_26, %c0_27] : memref<128x256xbf16, #tpu.memory_space<vmem>>, vector<128x256xbf16>
    %cst_28 = arith.constant dense<0.000000e+00> : vector<8x256xf32>
    %40 = tpu.matmul %38, %39, %cst_28 {dimension_numbers = #tpu.dot_dimension_numbers<[1], [0], [0], [1], [0, 0, 1, 1], [], []>} : vector<8x128xbf16>, vector<128x256xbf16>, vector<8x256xf32> -> vector<8x256xf32>
    %c0_29 = arith.constant 0 : index
    %c0_30 = arith.constant 0 : index
    %41 = vector.load %arg12[%c0_29, %c0_30] : memref<1x256xf32, #tpu.memory_space<vmem>>, vector<1x256xf32>
    %42 = vector.broadcast %41 : vector<1x256xf32> to vector<8x256xf32>
    %43 = arith.addf %40, %42 : vector<8x256xf32>
    %cst_31 = arith.constant 0.000000e+00 : f32
    %44 = vector.broadcast %cst_31 : f32 to vector<8x256xf32>
    %45 = arith.maximumf %43, %44 : vector<8x256xf32>
    %46 = arith.truncf %45 : vector<8x256xf32> to vector<8x256xbf16>
    %c0_32 = arith.constant 0 : index
    %c0_33 = arith.constant 0 : index
    %47 = vector.load %arg13[%c0_32, %c0_33] : memref<256x256xbf16, #tpu.memory_space<vmem>>, vector<256x256xbf16>
    %cst_34 = arith.constant dense<0.000000e+00> : vector<8x256xf32>
    %48 = tpu.matmul %46, %47, %cst_34 {dimension_numbers = #tpu.dot_dimension_numbers<[1], [0], [0], [1], [0, 0, 1, 1], [], []>} : vector<8x256xbf16>, vector<256x256xbf16>, vector<8x256xf32> -> vector<8x256xf32>
    %c0_35 = arith.constant 0 : index
    %c0_36 = arith.constant 0 : index
    %49 = vector.load %arg14[%c0_35, %c0_36] : memref<1x256xf32, #tpu.memory_space<vmem>>, vector<1x256xf32>
    %50 = vector.broadcast %49 : vector<1x256xf32> to vector<8x256xf32>
    %51 = arith.addf %48, %50 : vector<8x256xf32>
    %cst_37 = arith.constant 0.000000e+00 : f32
    %52 = vector.broadcast %cst_37 : f32 to vector<8x256xf32>
    %53 = arith.maximumf %51, %52 : vector<8x256xf32>
    %54 = arith.truncf %53 : vector<8x256xf32> to vector<8x256xbf16>
    %c0_38 = arith.constant 0 : index
    %c0_39 = arith.constant 0 : index
    %55 = vector.load %arg15[%c0_38, %c0_39] : memref<256x256xbf16, #tpu.memory_space<vmem>>, vector<256x256xbf16>
    %cst_40 = arith.constant dense<0.000000e+00> : vector<8x256xf32>
    %56 = tpu.matmul %54, %55, %cst_40 {dimension_numbers = #tpu.dot_dimension_numbers<[1], [0], [0], [1], [0, 0, 1, 1], [], []>} : vector<8x256xbf16>, vector<256x256xbf16>, vector<8x256xf32> -> vector<8x256xf32>
    %c0_41 = arith.constant 0 : index
    %c0_42 = arith.constant 0 : index
    %57 = vector.load %arg16[%c0_41, %c0_42] : memref<1x256xf32, #tpu.memory_space<vmem>>, vector<1x256xf32>
    %58 = vector.broadcast %57 : vector<1x256xf32> to vector<8x256xf32>
    %59 = arith.addf %56, %58 : vector<8x256xf32>
    %cst_43 = arith.constant 0.000000e+00 : f32
    %60 = vector.broadcast %cst_43 : f32 to vector<8x256xf32>
    %61 = arith.maximumf %59, %60 : vector<8x256xf32>
    %62 = arith.truncf %61 : vector<8x256xf32> to vector<8x256xbf16>
    %c0_44 = arith.constant 0 : index
    %c0_45 = arith.constant 0 : index
    %63 = vector.load %arg17[%c0_44, %c0_45] : memref<256x256xbf16, #tpu.memory_space<vmem>>, vector<256x256xbf16>
    %cst_46 = arith.constant dense<0.000000e+00> : vector<8x256xf32>
    %64 = tpu.matmul %62, %63, %cst_46 {dimension_numbers = #tpu.dot_dimension_numbers<[1], [0], [0], [1], [0, 0, 1, 1], [], []>} : vector<8x256xbf16>, vector<256x256xbf16>, vector<8x256xf32> -> vector<8x256xf32>
    %c0_47 = arith.constant 0 : index
    %c0_48 = arith.constant 0 : index
    %65 = vector.load %arg18[%c0_47, %c0_48] : memref<1x256xf32, #tpu.memory_space<vmem>>, vector<1x256xf32>
    %66 = vector.broadcast %65 : vector<1x256xf32> to vector<8x256xf32>
    %67 = arith.addf %64, %66 : vector<8x256xf32>
    %68 = arith.negf %67 : vector<8x256xf32>
    %69 = math.exp %68 : vector<8x256xf32>
    %cst_49 = arith.constant 1.000000e+00 : f32
    %70 = vector.broadcast %cst_49 : f32 to vector<8x256xf32>
    %71 = arith.addf %70, %69 : vector<8x256xf32>
    %72 = arith.divf %70, %71 : vector<8x256xf32>
    %73 = arith.truncf %72 : vector<8x256xf32> to vector<8x256xbf16>
    %c0_50 = arith.constant 0 : index
    %c0_51 = arith.constant 0 : index
    %74 = vector.load %arg19[%c0_50, %c0_51] : memref<8x256xbf16, #tpu.memory_space<vmem>>, vector<8x256xbf16>
    tpu.vector_store %arg19[%c0_50, %c0_51], %73 {strides = array<i32>} : memref<8x256xbf16, #tpu.memory_space<vmem>>, vector<8x256xbf16>,
    %c0_52 = arith.constant 0 : index
    %c0_53 = arith.constant 0 : index
    %75 = vector.load %arg20[%c0_52, %c0_53] : memref<8x256xf32, #tpu.memory_space<vmem>>, vector<8x256xf32>
    tpu.vector_store %arg20[%c0_52, %c0_53], %29 {strides = array<i32>} : memref<8x256xf32, #tpu.memory_space<vmem>>, vector<8x256xf32>,
    return
  }
  func.func @transform_0(%arg0: i32) -> (i32, i32) {
    %c0_i32 = arith.constant 0 : i32
    %c0_i32_0 = arith.constant 0 : i32
    return %arg0, %c0_i32 : i32, i32
  }
  func.func @transform_1(%arg0: i32) -> (i32, i32) {
    %c0_i32 = arith.constant 0 : i32
    %c0_i32_0 = arith.constant 0 : i32
    return %arg0, %c0_i32 : i32, i32
  }
  func.func @transform_2(%arg0: i32) -> (i32, i32) {
    %c0_i32 = arith.constant 0 : i32
    %c0_i32_0 = arith.constant 0 : i32
    %c0_i32_1 = arith.constant 0 : i32
    return %c0_i32, %c0_i32_0 : i32, i32
  }
  func.func @transform_3(%arg0: i32) -> (i32, i32) {
    %c0_i32 = arith.constant 0 : i32
    %c0_i32_0 = arith.constant 0 : i32
    %c0_i32_1 = arith.constant 0 : i32
    return %c0_i32, %c0_i32_0 : i32, i32
  }
  func.func @transform_4(%arg0: i32) -> (i32, i32) {
    %c0_i32 = arith.constant 0 : i32
    %c0_i32_0 = arith.constant 0 : i32
    %c0_i32_1 = arith.constant 0 : i32
    return %c0_i32, %c0_i32_0 : i32, i32
  }
  func.func @transform_5(%arg0: i32) -> (i32, i32) {
    %c0_i32 = arith.constant 0 : i32
    %c0_i32_0 = arith.constant 0 : i32
    %c0_i32_1 = arith.constant 0 : i32
    return %c0_i32, %c0_i32_0 : i32, i32
  }
  func.func @transform_6(%arg0: i32) -> (i32, i32) {
    %c0_i32 = arith.constant 0 : i32
    %c0_i32_0 = arith.constant 0 : i32
    %c0_i32_1 = arith.constant 0 : i32
    return %c0_i32, %c0_i32_0 : i32, i32
  }
  func.func @transform_7(%arg0: i32) -> (i32, i32) {
    %c0_i32 = arith.constant 0 : i32
    %c0_i32_0 = arith.constant 0 : i32
    %c0_i32_1 = arith.constant 0 : i32
    return %c0_i32, %c0_i32_0 : i32, i32
  }
  func.func @transform_8(%arg0: i32) -> (i32, i32) {
    %c0_i32 = arith.constant 0 : i32
    %c0_i32_0 = arith.constant 0 : i32
    %c0_i32_1 = arith.constant 0 : i32
    return %c0_i32, %c0_i32_0 : i32, i32
  }
  func.func @transform_9(%arg0: i32) -> (i32, i32) {
    %c0_i32 = arith.constant 0 : i32
    %c0_i32_0 = arith.constant 0 : i32
    %c0_i32_1 = arith.constant 0 : i32
    return %c0_i32, %c0_i32_0 : i32, i32
  }
  func.func @transform_10(%arg0: i32) -> (i32, i32) {
    %c0_i32 = arith.constant 0 : i32
    %c0_i32_0 = arith.constant 0 : i32
    %c0_i32_1 = arith.constant 0 : i32
    return %c0_i32, %c0_i32_0 : i32, i32
  }
  func.func @transform_11(%arg0: i32) -> (i32, i32) {
    %c0_i32 = arith.constant 0 : i32
    %c0_i32_0 = arith.constant 0 : i32
    %c0_i32_1 = arith.constant 0 : i32
    return %c0_i32, %c0_i32_0 : i32, i32
  }
  func.func @transform_12(%arg0: i32) -> (i32, i32) {
    %c0_i32 = arith.constant 0 : i32
    %c0_i32_0 = arith.constant 0 : i32
    %c0_i32_1 = arith.constant 0 : i32
    return %c0_i32, %c0_i32_0 : i32, i32
  }
  func.func @transform_13(%arg0: i32) -> (i32, i32) {
    %c0_i32 = arith.constant 0 : i32
    %c0_i32_0 = arith.constant 0 : i32
    %c0_i32_1 = arith.constant 0 : i32
    return %c0_i32, %c0_i32_0 : i32, i32
  }
  func.func @transform_14(%arg0: i32) -> (i32, i32) {
    %c0_i32 = arith.constant 0 : i32
    %c0_i32_0 = arith.constant 0 : i32
    %c0_i32_1 = arith.constant 0 : i32
    return %c0_i32, %c0_i32_0 : i32, i32
  }
  func.func @transform_15(%arg0: i32) -> (i32, i32) {
    %c0_i32 = arith.constant 0 : i32
    %c0_i32_0 = arith.constant 0 : i32
    %c0_i32_1 = arith.constant 0 : i32
    return %c0_i32, %c0_i32_0 : i32, i32
  }
  func.func @transform_16(%arg0: i32) -> (i32, i32) {
    %c0_i32 = arith.constant 0 : i32
    %c0_i32_0 = arith.constant 0 : i32
    %c0_i32_1 = arith.constant 0 : i32
    return %c0_i32, %c0_i32_0 : i32, i32
  }
  func.func @transform_17(%arg0: i32) -> (i32, i32) {
    %c0_i32 = arith.constant 0 : i32
    %c0_i32_0 = arith.constant 0 : i32
    %c0_i32_1 = arith.constant 0 : i32
    return %c0_i32, %c0_i32_0 : i32, i32
  }
  func.func @transform_18(%arg0: i32) -> (i32, i32) {
    %c0_i32 = arith.constant 0 : i32
    %c0_i32_0 = arith.constant 0 : i32
    return %arg0, %c0_i32 : i32, i32
  }
  func.func @transform_19(%arg0: i32) -> (i32, i32) {
    %c0_i32 = arith.constant 0 : i32
    %c0_i32_0 = arith.constant 0 : i32
    return %arg0, %c0_i32 : i32, i32
  }
}

module attributes {stable_mosaic.version = 11 : i64} {
  func.func @vae_kernel(%arg0: i32, %arg1: memref<8x256xbf16, #tpu.memory_space<vmem>>, %arg2: memref<8x128xf32, #tpu.memory_space<vmem>>, %arg3: memref<256x256xbf16, #tpu.memory_space<vmem>>, %arg4: memref<1x256xf32, #tpu.memory_space<vmem>>, %arg5: memref<256x256xbf16, #tpu.memory_space<vmem>>, %arg6: memref<1x256xf32, #tpu.memory_space<vmem>>, %arg7: memref<256x256xbf16, #tpu.memory_space<vmem>>, %arg8: memref<1x256xf32, #tpu.memory_space<vmem>>, %arg9: memref<256x256xbf16, #tpu.memory_space<vmem>>, %arg10: memref<1x256xf32, #tpu.memory_space<vmem>>, %arg11: memref<128x256xbf16, #tpu.memory_space<vmem>>, %arg12: memref<1x256xf32, #tpu.memory_space<vmem>>, %arg13: memref<256x256xbf16, #tpu.memory_space<vmem>>, %arg14: memref<1x256xf32, #tpu.memory_space<vmem>>, %arg15: memref<256x256xbf16, #tpu.memory_space<vmem>>, %arg16: memref<1x256xf32, #tpu.memory_space<vmem>>, %arg17: memref<256x256xbf16, #tpu.memory_space<vmem>>, %arg18: memref<1x256xf32, #tpu.memory_space<vmem>>, %arg19: memref<8x256xbf16, #tpu.memory_space<vmem>>, %arg20: memref<8x256xf32, #tpu.memory_space<vmem>>) attributes {dimension_semantics = [#tpu.dimension_semantics<parallel>], iteration_bounds = array<i64: 1>, scalar_prefetch = 0 : i64, scratch_operands = 0 : i64, tpu.core_type = #tpu.core_type<tc>, window_params = [{transform_indices = @transform_0, window_bounds = array<i64: 8, 256>}, {transform_indices = @transform_1, window_bounds = array<i64: 8, 128>}, {pipeline_mode = #tpu.pipeline_mode<synchronous>, transform_indices = @transform_2, window_bounds = array<i64: 256, 256>}, {pipeline_mode = #tpu.pipeline_mode<synchronous>, transform_indices = @transform_3, window_bounds = array<i64: 1, 256>}, {pipeline_mode = #tpu.pipeline_mode<synchronous>, transform_indices = @transform_4, window_bounds = array<i64: 256, 256>}, {pipeline_mode = #tpu.pipeline_mode<synchronous>, transform_indices = @transform_5, window_bounds = array<i64: 1, 256>}, {pipeline_mode = #tpu.pipeline_mode<synchronous>, transform_indices = @transform_6, window_bounds = array<i64: 256, 256>}, {pipeline_mode = #tpu.pipeline_mode<synchronous>, transform_indices = @transform_7, window_bounds = array<i64: 1, 256>}, {pipeline_mode = #tpu.pipeline_mode<synchronous>, transform_indices = @transform_8, window_bounds = array<i64: 256, 256>}, {pipeline_mode = #tpu.pipeline_mode<synchronous>, transform_indices = @transform_9, window_bounds = array<i64: 1, 256>}, {pipeline_mode = #tpu.pipeline_mode<synchronous>, transform_indices = @transform_10, window_bounds = array<i64: 128, 256>}, {pipeline_mode = #tpu.pipeline_mode<synchronous>, transform_indices = @transform_11, window_bounds = array<i64: 1, 256>}, {pipeline_mode = #tpu.pipeline_mode<synchronous>, transform_indices = @transform_12, window_bounds = array<i64: 256, 256>}, {pipeline_mode = #tpu.pipeline_mode<synchronous>, transform_indices = @transform_13, window_bounds = array<i64: 1, 256>}, {pipeline_mode = #tpu.pipeline_mode<synchronous>, transform_indices = @transform_14, window_bounds = array<i64: 256, 256>}, {pipeline_mode = #tpu.pipeline_mode<synchronous>, transform_indices = @transform_15, window_bounds = array<i64: 1, 256>}, {pipeline_mode = #tpu.pipeline_mode<synchronous>, transform_indices = @transform_16, window_bounds = array<i64: 256, 256>}, {pipeline_mode = #tpu.pipeline_mode<synchronous>, transform_indices = @transform_17, window_bounds = array<i64: 1, 256>}, {transform_indices = @transform_18, window_bounds = array<i64: 8, 256>}, {transform_indices = @transform_19, window_bounds = array<i64: 8, 256>}]} {
    %c0 = arith.constant 0 : index
    %c0_0 = arith.constant 0 : index
    %0 = vector.load %arg1[%c0, %c0_0] : memref<8x256xbf16, #tpu.memory_space<vmem>>, vector<8x256xbf16>
    %c0_1 = arith.constant 0 : index
    %c0_2 = arith.constant 0 : index
    %1 = vector.load %arg3[%c0_1, %c0_2] : memref<256x256xbf16, #tpu.memory_space<vmem>>, vector<256x256xbf16>
    %cst = arith.constant dense<0.000000e+00> : vector<8x256xf32>
    %2 = tpu.matmul %0, %1, %cst {dimension_numbers = #tpu.dot_dimension_numbers<[1], [0], [0], [1], [0, 0, 1, 1], [], []>} : vector<8x256xbf16>, vector<256x256xbf16>, vector<8x256xf32> -> vector<8x256xf32>
    %c0_3 = arith.constant 0 : index
    %c0_4 = arith.constant 0 : index
    %3 = vector.load %arg4[%c0_3, %c0_4] : memref<1x256xf32, #tpu.memory_space<vmem>>, vector<1x256xf32>
    %4 = vector.broadcast %3 : vector<1x256xf32> to vector<8x256xf32>
    %5 = arith.addf %2, %4 : vector<8x256xf32>
    %cst_5 = arith.constant 0.000000e+00 : f32
    %6 = vector.broadcast %cst_5 : f32 to vector<8x256xf32>
    %7 = arith.maximumf %5, %6 : vector<8x256xf32>
    %8 = arith.truncf %7 : vector<8x256xf32> to vector<8x256xbf16>
    %c0_6 = arith.constant 0 : index
    %c0_7 = arith.constant 0 : index
    %9 = vector.load %arg5[%c0_6, %c0_7] : memref<256x256xbf16, #tpu.memory_space<vmem>>, vector<256x256xbf16>
    %cst_8 = arith.constant dense<0.000000e+00> : vector<8x256xf32>
    %10 = tpu.matmul %8, %9, %cst_8 {dimension_numbers = #tpu.dot_dimension_numbers<[1], [0], [0], [1], [0, 0, 1, 1], [], []>} : vector<8x256xbf16>, vector<256x256xbf16>, vector<8x256xf32> -> vector<8x256xf32>
    %c0_9 = arith.constant 0 : index
    %c0_10 = arith.constant 0 : index
    %11 = vector.load %arg6[%c0_9, %c0_10] : memref<1x256xf32, #tpu.memory_space<vmem>>, vector<1x256xf32>
    %12 = vector.broadcast %11 : vector<1x256xf32> to vector<8x256xf32>
    %13 = arith.addf %10, %12 : vector<8x256xf32>
    %cst_11 = arith.constant 0.000000e+00 : f32
    %14 = vector.broadcast %cst_11 : f32 to vector<8x256xf32>
    %15 = arith.maximumf %13, %14 : vector<8x256xf32>
    %16 = arith.truncf %15 : vector<8x256xf32> to vector<8x256xbf16>
    %c0_12 = arith.constant 0 : index
    %c0_13 = arith.constant 0 : index
    %17 = vector.load %arg7[%c0_12, %c0_13] : memref<256x256xbf16, #tpu.memory_space<vmem>>, vector<256x256xbf16>
    %cst_14 = arith.constant dense<0.000000e+00> : vector<8x256xf32>
    %18 = tpu.matmul %16, %17, %cst_14 {dimension_numbers = #tpu.dot_dimension_numbers<[1], [0], [0], [1], [0, 0, 1, 1], [], []>} : vector<8x256xbf16>, vector<256x256xbf16>, vector<8x256xf32> -> vector<8x256xf32>
    %c0_15 = arith.constant 0 : index
    %c0_16 = arith.constant 0 : index
    %19 = vector.load %arg8[%c0_15, %c0_16] : memref<1x256xf32, #tpu.memory_space<vmem>>, vector<1x256xf32>
    %20 = vector.broadcast %19 : vector<1x256xf32> to vector<8x256xf32>
    %21 = arith.addf %18, %20 : vector<8x256xf32>
    %cst_17 = arith.constant 0.000000e+00 : f32
    %22 = vector.broadcast %cst_17 : f32 to vector<8x256xf32>
    %23 = arith.maximumf %21, %22 : vector<8x256xf32>
    %24 = arith.truncf %23 : vector<8x256xf32> to vector<8x256xbf16>
    %c0_18 = arith.constant 0 : index
    %c0_19 = arith.constant 0 : index
    %25 = vector.load %arg9[%c0_18, %c0_19] : memref<256x256xbf16, #tpu.memory_space<vmem>>, vector<256x256xbf16>
    %cst_20 = arith.constant dense<0.000000e+00> : vector<8x256xf32>
    %26 = tpu.matmul %24, %25, %cst_20 {dimension_numbers = #tpu.dot_dimension_numbers<[1], [0], [0], [1], [0, 0, 1, 1], [], []>} : vector<8x256xbf16>, vector<256x256xbf16>, vector<8x256xf32> -> vector<8x256xf32>
    %c0_21 = arith.constant 0 : index
    %c0_22 = arith.constant 0 : index
    %27 = vector.load %arg10[%c0_21, %c0_22] : memref<1x256xf32, #tpu.memory_space<vmem>>, vector<1x256xf32>
    %28 = vector.broadcast %27 : vector<1x256xf32> to vector<8x256xf32>
    %29 = arith.addf %26, %28 : vector<8x256xf32>
    %30 = vector.extract_strided_slice %29 {offsets = [0, 0], sizes = [8, 128], strides = [1, 1]} : vector<8x256xf32> to vector<8x128xf32>
    %31 = vector.extract_strided_slice %29 {offsets = [0, 128], sizes = [8, 128], strides = [1, 1]} : vector<8x256xf32> to vector<8x128xf32>
    %cst_23 = arith.constant 5.000000e-01 : f32
    %32 = vector.broadcast %cst_23 : f32 to vector<8x128xf32>
    %33 = arith.mulf %31, %32 : vector<8x128xf32>
    %34 = math.exp %33 : vector<8x128xf32>
    %c0_24 = arith.constant 0 : index
    %c0_25 = arith.constant 0 : index
    %35 = vector.load %arg2[%c0_24, %c0_25] : memref<8x128xf32, #tpu.memory_space<vmem>>, vector<8x128xf32>
    %36 = arith.mulf %34, %35 : vector<8x128xf32>
    %37 = arith.addf %30, %36 : vector<8x128xf32>
    %38 = arith.truncf %37 : vector<8x128xf32> to vector<8x128xbf16>
    %c0_26 = arith.constant 0 : index
    %c0_27 = arith.constant 0 : index
    %39 = vector.load %arg11[%c0_26, %c0_27] : memref<128x256xbf16, #tpu.memory_space<vmem>>, vector<128x256xbf16>
    %cst_28 = arith.constant dense<0.000000e+00> : vector<8x256xf32>
    %40 = tpu.matmul %38, %39, %cst_28 {dimension_numbers = #tpu.dot_dimension_numbers<[1], [0], [0], [1], [0, 0, 1, 1], [], []>} : vector<8x128xbf16>, vector<128x256xbf16>, vector<8x256xf32> -> vector<8x256xf32>
    %c0_29 = arith.constant 0 : index
    %c0_30 = arith.constant 0 : index
    %41 = vector.load %arg12[%c0_29, %c0_30] : memref<1x256xf32, #tpu.memory_space<vmem>>, vector<1x256xf32>
    %42 = vector.broadcast %41 : vector<1x256xf32> to vector<8x256xf32>
    %43 = arith.addf %40, %42 : vector<8x256xf32>
    %cst_31 = arith.constant 0.000000e+00 : f32
    %44 = vector.broadcast %cst_31 : f32 to vector<8x256xf32>
    %45 = arith.maximumf %43, %44 : vector<8x256xf32>
    %46 = arith.truncf %45 : vector<8x256xf32> to vector<8x256xbf16>
    %c0_32 = arith.constant 0 : index
    %c0_33 = arith.constant 0 : index
    %47 = vector.load %arg13[%c0_32, %c0_33] : memref<256x256xbf16, #tpu.memory_space<vmem>>, vector<256x256xbf16>
    %cst_34 = arith.constant dense<0.000000e+00> : vector<8x256xf32>
    %48 = tpu.matmul %46, %47, %cst_34 {dimension_numbers = #tpu.dot_dimension_numbers<[1], [0], [0], [1], [0, 0, 1, 1], [], []>} : vector<8x256xbf16>, vector<256x256xbf16>, vector<8x256xf32> -> vector<8x256xf32>
    %c0_35 = arith.constant 0 : index
    %c0_36 = arith.constant 0 : index
    %49 = vector.load %arg14[%c0_35, %c0_36] : memref<1x256xf32, #tpu.memory_space<vmem>>, vector<1x256xf32>
    %50 = vector.broadcast %49 : vector<1x256xf32> to vector<8x256xf32>
    %51 = arith.addf %48, %50 : vector<8x256xf32>
    %cst_37 = arith.constant 0.000000e+00 : f32
    %52 = vector.broadcast %cst_37 : f32 to vector<8x256xf32>
    %53 = arith.maximumf %51, %52 : vector<8x256xf32>
    %54 = arith.truncf %53 : vector<8x256xf32> to vector<8x256xbf16>
    %c0_38 = arith.constant 0 : index
    %c0_39 = arith.constant 0 : index
    %55 = vector.load %arg15[%c0_38, %c0_39] : memref<256x256xbf16, #tpu.memory_space<vmem>>, vector<256x256xbf16>
    %cst_40 = arith.constant dense<0.000000e+00> : vector<8x256xf32>
    %56 = tpu.matmul %54, %55, %cst_40 {dimension_numbers = #tpu.dot_dimension_numbers<[1], [0], [0], [1], [0, 0, 1, 1], [], []>} : vector<8x256xbf16>, vector<256x256xbf16>, vector<8x256xf32> -> vector<8x256xf32>
    %c0_41 = arith.constant 0 : index
    %c0_42 = arith.constant 0 : index
    %57 = vector.load %arg16[%c0_41, %c0_42] : memref<1x256xf32, #tpu.memory_space<vmem>>, vector<1x256xf32>
    %58 = vector.broadcast %57 : vector<1x256xf32> to vector<8x256xf32>
    %59 = arith.addf %56, %58 : vector<8x256xf32>
    %cst_43 = arith.constant 0.000000e+00 : f32
    %60 = vector.broadcast %cst_43 : f32 to vector<8x256xf32>
    %61 = arith.maximumf %59, %60 : vector<8x256xf32>
    %62 = arith.truncf %61 : vector<8x256xf32> to vector<8x256xbf16>
    %c0_44 = arith.constant 0 : index
    %c0_45 = arith.constant 0 : index
    %63 = vector.load %arg17[%c0_44, %c0_45] : memref<256x256xbf16, #tpu.memory_space<vmem>>, vector<256x256xbf16>
    %cst_46 = arith.constant dense<0.000000e+00> : vector<8x256xf32>
    %64 = tpu.matmul %62, %63, %cst_46 {dimension_numbers = #tpu.dot_dimension_numbers<[1], [0], [0], [1], [0, 0, 1, 1], [], []>} : vector<8x256xbf16>, vector<256x256xbf16>, vector<8x256xf32> -> vector<8x256xf32>
    %c0_47 = arith.constant 0 : index
    %c0_48 = arith.constant 0 : index
    %65 = vector.load %arg18[%c0_47, %c0_48] : memref<1x256xf32, #tpu.memory_space<vmem>>, vector<1x256xf32>
    %66 = vector.broadcast %65 : vector<1x256xf32> to vector<8x256xf32>
    %67 = arith.addf %64, %66 : vector<8x256xf32>
    %68 = arith.negf %67 : vector<8x256xf32>
    %69 = math.exp %68 : vector<8x256xf32>
    %cst_49 = arith.constant 1.000000e+00 : f32
    %70 = vector.broadcast %cst_49 : f32 to vector<8x256xf32>
    %71 = arith.addf %70, %69 : vector<8x256xf32>
    %72 = arith.divf %70, %71 : vector<8x256xf32>
    %73 = arith.truncf %72 : vector<8x256xf32> to vector<8x256xbf16>
    %c0_50 = arith.constant 0 : index
    %c0_51 = arith.constant 0 : index
    %74 = vector.load %arg19[%c0_50, %c0_51] : memref<8x256xbf16, #tpu.memory_space<vmem>>, vector<8x256xbf16>
    tpu.vector_store %arg19[%c0_50, %c0_51], %73 {strides = array<i32>} : memref<8x256xbf16, #tpu.memory_space<vmem>>, vector<8x256xbf16>,
    %c0_52 = arith.constant 0 : index
    %c0_53 = arith.constant 0 : index
    %75 = vector.load %arg20[%c0_52, %c0_53] : memref<8x256xf32, #tpu.memory_space<vmem>>, vector<8x256xf32>
    tpu.vector_store %arg20[%c0_52, %c0_53], %29 {strides = array<i32>} : memref<8x256xf32, #tpu.memory_space<vmem>>, vector<8x256xf32>,
    return
  }
  func.func @transform_0(%arg0: i32) -> (i32, i32) {
    %c0_i32 = arith.constant 0 : i32
    %c0_i32_0 = arith.constant 0 : i32
    return %arg0, %c0_i32 : i32, i32
  }
  func.func @transform_1(%arg0: i32) -> (i32, i32) {
    %c0_i32 = arith.constant 0 : i32
    %c0_i32_0 = arith.constant 0 : i32
    return %arg0, %c0_i32 : i32, i32
  }
  func.func @transform_2(%arg0: i32) -> (i32, i32) {
    %c0_i32 = arith.constant 0 : i32
    %c0_i32_0 = arith.constant 0 : i32
    %c0_i32_1 = arith.constant 0 : i32
    return %c0_i32, %c0_i32_0 : i32, i32
  }
  func.func @transform_3(%arg0: i32) -> (i32, i32) {
    %c0_i32 = arith.constant 0 : i32
    %c0_i32_0 = arith.constant 0 : i32
    %c0_i32_1 = arith.constant 0 : i32
    return %c0_i32, %c0_i32_0 : i32, i32
  }
  func.func @transform_4(%arg0: i32) -> (i32, i32) {
    %c0_i32 = arith.constant 0 : i32
    %c0_i32_0 = arith.constant 0 : i32
    %c0_i32_1 = arith.constant 0 : i32
    return %c0_i32, %c0_i32_0 : i32, i32
  }
  func.func @transform_5(%arg0: i32) -> (i32, i32) {
    %c0_i32 = arith.constant 0 : i32
    %c0_i32_0 = arith.constant 0 : i32
    %c0_i32_1 = arith.constant 0 : i32
    return %c0_i32, %c0_i32_0 : i32, i32
  }
  func.func @transform_6(%arg0: i32) -> (i32, i32) {
    %c0_i32 = arith.constant 0 : i32
    %c0_i32_0 = arith.constant 0 : i32
    %c0_i32_1 = arith.constant 0 : i32
    return %c0_i32, %c0_i32_0 : i32, i32
  }
  func.func @transform_7(%arg0: i32) -> (i32, i32) {
    %c0_i32 = arith.constant 0 : i32
    %c0_i32_0 = arith.constant 0 : i32
    %c0_i32_1 = arith.constant 0 : i32
    return %c0_i32, %c0_i32_0 : i32, i32
  }
  func.func @transform_8(%arg0: i32) -> (i32, i32) {
    %c0_i32 = arith.constant 0 : i32
    %c0_i32_0 = arith.constant 0 : i32
    %c0_i32_1 = arith.constant 0 : i32
    return %c0_i32, %c0_i32_0 : i32, i32
  }
  func.func @transform_9(%arg0: i32) -> (i32, i32) {
    %c0_i32 = arith.constant 0 : i32
    %c0_i32_0 = arith.constant 0 : i32
    %c0_i32_1 = arith.constant 0 : i32
    return %c0_i32, %c0_i32_0 : i32, i32
  }
  func.func @transform_10(%arg0: i32) -> (i32, i32) {
    %c0_i32 = arith.constant 0 : i32
    %c0_i32_0 = arith.constant 0 : i32
    %c0_i32_1 = arith.constant 0 : i32
    return %c0_i32, %c0_i32_0 : i32, i32
  }
  func.func @transform_11(%arg0: i32) -> (i32, i32) {
    %c0_i32 = arith.constant 0 : i32
    %c0_i32_0 = arith.constant 0 : i32
    %c0_i32_1 = arith.constant 0 : i32
    return %c0_i32, %c0_i32_0 : i32, i32
  }
  func.func @transform_12(%arg0: i32) -> (i32, i32) {
    %c0_i32 = arith.constant 0 : i32
    %c0_i32_0 = arith.constant 0 : i32
    %c0_i32_1 = arith.constant 0 : i32
    return %c0_i32, %c0_i32_0 : i32, i32
  }
  func.func @transform_13(%arg0: i32) -> (i32, i32) {
    %c0_i32 = arith.constant 0 : i32
    %c0_i32_0 = arith.constant 0 : i32
    %c0_i32_1 = arith.constant 0 : i32
    return %c0_i32, %c0_i32_0 : i32, i32
  }
  func.func @transform_14(%arg0: i32) -> (i32, i32) {
    %c0_i32 = arith.constant 0 : i32
    %c0_i32_0 = arith.constant 0 : i32
    %c0_i32_1 = arith.constant 0 : i32
    return %c0_i32, %c0_i32_0 : i32, i32
  }
  func.func @transform_15(%arg0: i32) -> (i32, i32) {
    %c0_i32 = arith.constant 0 : i32
    %c0_i32_0 = arith.constant 0 : i32
    %c0_i32_1 = arith.constant 0 : i32
    return %c0_i32, %c0_i32_0 : i32, i32
  }
  func.func @transform_16(%arg0: i32) -> (i32, i32) {
    %c0_i32 = arith.constant 0 : i32
    %c0_i32_0 = arith.constant 0 : i32
    %c0_i32_1 = arith.constant 0 : i32
    return %c0_i32, %c0_i32_0 : i32, i32
  }
  func.func @transform_17(%arg0: i32) -> (i32, i32) {
    %c0_i32 = arith.constant 0 : i32
    %c0_i32_0 = arith.constant 0 : i32
    %c0_i32_1 = arith.constant 0 : i32
    return %c0_i32, %c0_i32_0 : i32, i32
  }
  func.func @transform_18(%arg0: i32) -> (i32, i32) {
    %c0_i32 = arith.constant 0 : i32
    %c0_i32_0 = arith.constant 0 : i32
    return %arg0, %c0_i32 : i32, i32
  }
  func.func @transform_19(%arg0: i32) -> (i32, i32) {
    %c0_i32 = arith.constant 0 : i32
    %c0_i32_0 = arith.constant 0 : i32
    return %arg0, %c0_i32 : i32, i32
  }
}

</mosaic_0001>

<llo_original>
// kernel: vae_forward.1
$region0: #{vae_forward.1}
  #allocation0 [shape = 'u32[]', space=smem, size = 0x4, offset = 0x4, fixed_abs, tag = 'smem constant byte address 0x4 - core index']
  #allocation1 [shape = 'u32[144,128]{1,0:T(1,128)}', space=vmem, size = 0x12000, scoped, tag = 'internal scratch']
  %s0 = inlined_call_operand.vmem [shape: bf16[8,256], index: 0, kind: input, shape index: {}]
  %s1 = inlined_call_operand.vmem [shape: f32[8,128], index: 1, kind: input, shape index: {}]
  %s2 = inlined_call_operand.hbm [shape: bf16[256,256], index: 2, kind: input, shape index: {}]
  %s3 = inlined_call_operand.vmem [shape: f32[1,256], index: 3, kind: input, shape index: {}]
  %s4 = inlined_call_operand.hbm [shape: bf16[256,256], index: 4, kind: input, shape index: {}]
  %s5 = inlined_call_operand.vmem [shape: f32[1,256], index: 5, kind: input, shape index: {}]
  %s6 = inlined_call_operand.hbm [shape: bf16[256,256], index: 6, kind: input, shape index: {}]
  %s7 = inlined_call_operand.vmem [shape: f32[1,256], index: 7, kind: input, shape index: {}]
  %s8 = inlined_call_operand.hbm [shape: bf16[256,256], index: 8, kind: input, shape index: {}]
  %s9 = inlined_call_operand.vmem [shape: f32[1,256], index: 9, kind: input, shape index: {}]
  %s10 = inlined_call_operand.hbm [shape: bf16[128,256], index: 10, kind: input, shape index: {}]
  %s11 = inlined_call_operand.vmem [shape: f32[1,256], index: 11, kind: input, shape index: {}]
  %s12 = inlined_call_operand.hbm [shape: bf16[256,256], index: 12, kind: input, shape index: {}]
  %s13 = inlined_call_operand.vmem [shape: f32[1,256], index: 13, kind: input, shape index: {}]
  %s14 = inlined_call_operand.hbm [shape: bf16[256,256], index: 14, kind: input, shape index: {}]
  %s15 = inlined_call_operand.vmem [shape: f32[1,256], index: 15, kind: input, shape index: {}]
  %s16 = inlined_call_operand.hbm [shape: bf16[256,256], index: 16, kind: input, shape index: {}]
  %s17 = inlined_call_operand.vmem [shape: f32[1,256], index: 17, kind: input, shape index: {}]
  %s18 = inlined_call_operand.vmem [shape: bf16[8,256], index: 18, kind: output, shape index: {0}]
  %s19 = inlined_call_operand.vmem [shape: f32[8,256], index: 19, kind: output, shape index: {1}]
  %20 = xla_tuple %s18, %s19
  %s21 = sld [smem:[#allocation0]]
  $region122: #{vae_forward.1} parent=0
    _
  %s23 = ssub.s32 1, %s21
  %s24 = scalar_select 0, %s23, %s21
  $region1: #{vae_forward.1} parent=0
    #allocation2 [shape = 'u8[131072]{0}', space=vmem, size = 0x20000, scoped, tag = 'input window, operand 2, single buffered']
    #allocation3 [shape = 's32[1]{0}', space=sflag, size = 0x4, scoped, tag = 'scoped memory for vae_forward.1']
    #allocation4 [shape = 'u8[131072]{0}', space=vmem, size = 0x20000, scoped, tag = 'input window, operand 4, single buffered']
    #allocation5 [shape = 's32[1]{0}', space=sflag, size = 0x4, scoped, tag = 'scoped memory for vae_forward.1']
    #allocation6 [shape = 'u8[131072]{0}', space=vmem, size = 0x20000, scoped, tag = 'input window, operand 6, single buffered']
    #allocation7 [shape = 'u8[131072]{0}', space=vmem, size = 0x20000, scoped, tag = 'input window, operand 8, single buffered']
    #allocation8 [shape = 's32[1]{0}', space=sflag, size = 0x4, scoped, tag = 'scoped memory for vae_forward.1']
    #allocation9 [shape = 'u8[65536]{0}', space=vmem, size = 0x10000, scoped, tag = 'input window, operand 10, single buffered']
    #allocation10 [shape = 'u8[131072]{0}', space=vmem, size = 0x20000, scoped, tag = 'input window, operand 12, single buffered']
    #allocation11 [shape = 's32[1]{0}', space=sflag, size = 0x4, scoped, tag = 'scoped memory for vae_forward.1']
    #allocation12 [shape = 'u8[131072]{0}', space=vmem, size = 0x20000, scoped, tag = 'input window, operand 14, single buffered']
    #allocation13 [shape = 'u8[131072]{0}', space=vmem, size = 0x20000, scoped, tag = 'input window, operand 16, single buffered']
    #allocation14 [shape = 's32[1]{0}', space=sflag, size = 0x4, scoped, tag = 'scoped memory for vae_forward.1']
    %25 = vsyncpa [#allocation3], 0
    %26 = vsyncpa [#allocation5], 0
    %27 = vsyncpa [#allocation8], 0
    %28 = vsyncpa [#allocation11], 0
    %29 = vsyncpa [#allocation14], 0
    // Predicated region
    $region2: #{vae_forward.1} parent=1 // pred_check
      _
    $region3: #{vae_forward.1} parent=1 // pred_check_branch
      %31 = sbr.rel (0) target = $region5
    $region4: #{vae_forward.1} parent=1 // pred_region
      _
    $region5: #{vae_forward.1} parent=1 // pred_fallthru
      _
    // Predicated region
    $region6: #{vae_forward.1} parent=1 // pred_check
      _
    $region7: #{vae_forward.1} parent=1 // pred_check_branch
      %33 = sbr.rel (0) target = $region9
    $region8: #{vae_forward.1} parent=1 // pred_region
      _
    $region9: #{vae_forward.1} parent=1 // pred_fallthru
      _
    // Predicated region
    $region10: #{vae_forward.1} parent=1 // pred_check
      _
    $region11: #{vae_forward.1} parent=1 // pred_check_branch
      %35 = sbr.rel (0) target = $region13
    $region12: #{vae_forward.1} parent=1 // pred_region
      %s37 = ssub.s32 4096, 4096
      %38 = vsyncadd [#allocation3], %s37
      %s39 = sshll.u32 [#allocation2], 4
      %s40 = int_to_ptr.vmem [resolvable:$true] %s39
      %45 = dma.hbm_to_vmem [thread:$0]  %s2, 4096, %s40, [#allocation3], 128, 128, 8
    $region13: #{vae_forward.1} parent=1 // pred_fallthru
      _
    // Predicated region
    $region14: #{vae_forward.1} parent=1 // pred_check
      _
    $region15: #{vae_forward.1} parent=1 // pred_check_branch
      %47 = sbr.rel (0) target = $region17
    $region16: #{vae_forward.1} parent=1 // pred_region
      _
    $region17: #{vae_forward.1} parent=1 // pred_fallthru
      _
    // Predicated region
    $region18: #{vae_forward.1} parent=1 // pred_check
      _
    $region19: #{vae_forward.1} parent=1 // pred_check_branch
      %49 = sbr.rel (0) target = $region21
    $region20: #{vae_forward.1} parent=1 // pred_region
      %s51 = ssub.s32 4096, 4096
      %52 = vsyncadd [#allocation5], %s51
      %s53 = sshll.u32 [#allocation4], 4
      %s54 = int_to_ptr.vmem [resolvable:$true] %s53
      %59 = dma.hbm_to_vmem [thread:$0]  %s4, 4096, %s54, [#allocation5], 128, 128, 8
    $region21: #{vae_forward.1} parent=1 // pred_fallthru
      _
    // Predicated region
    $region22: #{vae_forward.1} parent=1 // pred_check
      _
    $region23: #{vae_forward.1} parent=1 // pred_check_branch
      %61 = sbr.rel (0) target = $region25
    $region24: #{vae_forward.1} parent=1 // pred_region
      _
    $region25: #{vae_forward.1} parent=1 // pred_fallthru
      _
    // Predicated region
    $region26: #{vae_forward.1} parent=1 // pred_check
      _
    $region27: #{vae_forward.1} parent=1 // pred_check_branch
      %63 = sbr.rel (0) target = $region29
    $region28: #{vae_forward.1} parent=1 // pred_region
      %s65 = ssub.s32 4096, 4096
      %66 = vsyncadd [#allocation5], %s65
      %s67 = sshll.u32 [#allocation6], 4
      %s68 = int_to_ptr.vmem [resolvable:$true] %s67
      %73 = dma.hbm_to_vmem [thread:$0]  %s6, 4096, %s68, [#allocation5], 128, 128, 8
    $region29: #{vae_forward.1} parent=1 // pred_fallthru
      _
    // Predicated region
    $region30: #{vae_forward.1} parent=1 // pred_check
      _
    $region31: #{vae_forward.1} parent=1 // pred_check_branch
      %75 = sbr.rel (0) target = $region33
    $region32: #{vae_forward.1} parent=1 // pred_region
      _
    $region33: #{vae_forward.1} parent=1 // pred_fallthru
      _
    // Predicated region
    $region34: #{vae_forward.1} parent=1 // pred_check
      _
    $region35: #{vae_forward.1} parent=1 // pred_check_branch
      %77 = sbr.rel (0) target = $region37
    $region36: #{vae_forward.1} parent=1 // pred_region
      %s79 = ssub.s32 4096, 4096
      %80 = vsyncadd [#allocation8], %s79
      %s81 = sshll.u32 [#allocation7], 4
      %s82 = int_to_ptr.vmem [resolvable:$true] %s81
      %87 = dma.hbm_to_vmem [thread:$0]  %s8, 4096, %s82, [#allocation8], 128, 128, 8
    $region37: #{vae_forward.1} parent=1 // pred_fallthru
      _
    // Predicated region
    $region38: #{vae_forward.1} parent=1 // pred_check
      _
    $region39: #{vae_forward.1} parent=1 // pred_check_branch
      %89 = sbr.rel (0) target = $region41
    $region40: #{vae_forward.1} parent=1 // pred_region
      _
    $region41: #{vae_forward.1} parent=1 // pred_fallthru
      _
    // Predicated region
    $region42: #{vae_forward.1} parent=1 // pred_check
      _
    $region43: #{vae_forward.1} parent=1 // pred_check_branch
      %91 = sbr.rel (0) target = $region45
    $region44: #{vae_forward.1} parent=1 // pred_region
      %s93 = ssub.s32 2048, 2048
      %94 = vsyncadd [#allocation8], %s93
      %s95 = sshll.u32 [#allocation9], 4
      %s96 = int_to_ptr.vmem [resolvable:$true] %s95
      %101 = dma.hbm_to_vmem [thread:$0]  %s10, 2048, %s96, [#allocation8], 128, 128, 8
    $region45: #{vae_forward.1} parent=1 // pred_fallthru
      _
    // Predicated region
    $region46: #{vae_forward.1} parent=1 // pred_check
      _
    $region47: #{vae_forward.1} parent=1 // pred_check_branch
      %103 = sbr.rel (0) target = $region49
    $region48: #{vae_forward.1} parent=1 // pred_region
      _
    $region49: #{vae_forward.1} parent=1 // pred_fallthru
      _
    // Predicated region
    $region50: #{vae_forward.1} parent=1 // pred_check
      _
    $region51: #{vae_forward.1} parent=1 // pred_check_branch
      %105 = sbr.rel (0) target = $region53
    $region52: #{vae_forward.1} parent=1 // pred_region
      %s107 = ssub.s32 4096, 4096
      %108 = vsyncadd [#allocation11], %s107
      %s109 = sshll.u32 [#allocation10], 4
      %s110 = int_to_ptr.vmem [resolvable:$true] %s109
      %115 = dma.hbm_to_vmem [thread:$0]  %s12, 4096, %s110, [#allocation11], 128, 128, 8
    $region53: #{vae_forward.1} parent=1 // pred_fallthru
      _
    // Predicated region
    $region54: #{vae_forward.1} parent=1 // pred_check
      _
    $region55: #{vae_forward.1} parent=1 // pred_check_branch
      %117 = sbr.rel (0) target = $region57
    $region56: #{vae_forward.1} parent=1 // pred_region
      _
    $region57: #{vae_forward.1} parent=1 // pred_fallthru
      _
    // Predicated region
    $region58: #{vae_forward.1} parent=1 // pred_check
      _
    $region59: #{vae_forward.1} parent=1 // pred_check_branch
      %119 = sbr.rel (0) target = $region61
    $region60: #{vae_forward.1} parent=1 // pred_region
      %s121 = ssub.s32 4096, 4096
      %122 = vsyncadd [#allocation11], %s121
      %s123 = sshll.u32 [#allocation12], 4
      %s124 = int_to_ptr.vmem [resolvable:$true] %s123
      %129 = dma.hbm_to_vmem [thread:$0]  %s14, 4096, %s124, [#allocation11], 128, 128, 8
    $region61: #{vae_forward.1} parent=1 // pred_fallthru
      _
    // Predicated region
    $region62: #{vae_forward.1} parent=1 // pred_check
      _
    $region63: #{vae_forward.1} parent=1 // pred_check_branch
      %131 = sbr.rel (0) target = $region65
    $region64: #{vae_forward.1} parent=1 // pred_region
      _
    $region65: #{vae_forward.1} parent=1 // pred_fallthru
      _
    // Predicated region
    $region66: #{vae_forward.1} parent=1 // pred_check
      _
    $region67: #{vae_forward.1} parent=1 // pred_check_branch
      %133 = sbr.rel (0) target = $region69
    $region68: #{vae_forward.1} parent=1 // pred_region
      %s135 = ssub.s32 4096, 4096
      %136 = vsyncadd [#allocation14], %s135
      %s137 = sshll.u32 [#allocation13], 4
      %s138 = int_to_ptr.vmem [resolvable:$true] %s137
      %143 = dma.hbm_to_vmem [thread:$0]  %s16, 4096, %s138, [#allocation14], 128, 128, 8
    $region69: #{vae_forward.1} parent=1 // pred_fallthru
      _
    // Predicated region
    $region70: #{vae_forward.1} parent=1 // pred_check
      _
    $region71: #{vae_forward.1} parent=1 // pred_check_branch
      %145 = sbr.rel (0) target = $region73
    $region72: #{vae_forward.1} parent=1 // pred_region
      _
    $region73: #{vae_forward.1} parent=1 // pred_fallthru
      _
    // Predicated region
    $region74: #{vae_forward.1} parent=1 // pred_check
      _
    $region75: #{vae_forward.1} parent=1 // pred_check_branch
      %147 = sbr.rel (0) target = $region77
    $region76: #{vae_forward.1} parent=1 // pred_region
      %148 = dma.done [#allocation3], 4096
    $region77: #{vae_forward.1} parent=1 // pred_fallthru
      _
    // Predicated region
    $region78: #{vae_forward.1} parent=1 // pred_check
      _
    $region79: #{vae_forward.1} parent=1 // pred_check_branch
      %150 = sbr.rel (0) target = $region81
    $region80: #{vae_forward.1} parent=1 // pred_region
      %151 = dma.done [#allocation5], 4096
    $region81: #{vae_forward.1} parent=1 // pred_fallthru
      _
    // Predicated region
    $region82: #{vae_forward.1} parent=1 // pred_check
      _
    $region83: #{vae_forward.1} parent=1 // pred_check_branch
      %153 = sbr.rel (0) target = $region85
    $region84: #{vae_forward.1} parent=1 // pred_region
      %154 = dma.done [#allocation5], 4096
    $region85: #{vae_forward.1} parent=1 // pred_fallthru
      _
    // Predicated region
    $region86: #{vae_forward.1} parent=1 // pred_check
      _
    $region87: #{vae_forward.1} parent=1 // pred_check_branch
      %156 = sbr.rel (0) target = $region89
    $region88: #{vae_forward.1} parent=1 // pred_region
      %157 = dma.done [#allocation8], 4096
    $region89: #{vae_forward.1} parent=1 // pred_fallthru
      _
    // Predicated region
    $region90: #{vae_forward.1} parent=1 // pred_check
      _
    $region91: #{vae_forward.1} parent=1 // pred_check_branch
      %159 = sbr.rel (0) target = $region93
    $region92: #{vae_forward.1} parent=1 // pred_region
      %160 = dma.done [#allocation8], 2048
    $region93: #{vae_forward.1} parent=1 // pred_fallthru
      _
    // Predicated region
    $region94: #{vae_forward.1} parent=1 // pred_check
      _
    $region95: #{vae_forward.1} parent=1 // pred_check_branch
      %162 = sbr.rel (0) target = $region97
    $region96: #{vae_forward.1} parent=1 // pred_region
      %163 = dma.done [#allocation11], 4096
    $region97: #{vae_forward.1} parent=1 // pred_fallthru
      _
    // Predicated region
    $region98: #{vae_forward.1} parent=1 // pred_check
      _
    $region99: #{vae_forward.1} parent=1 // pred_check_branch
      %165 = sbr.rel (0) target = $region101
    $region100: #{vae_forward.1} parent=1 // pred_region
      %166 = dma.done [#allocation11], 4096
    $region101: #{vae_forward.1} parent=1 // pred_fallthru
      _
    // Predicated region
    $region102: #{vae_forward.1} parent=1 // pred_check
      _
    $region103: #{vae_forward.1} parent=1 // pred_check_branch
      %168 = sbr.rel (0) target = $region105
    $region104: #{vae_forward.1} parent=1 // pred_region
      %169 = dma.done [#allocation14], 4096
    $region105: #{vae_forward.1} parent=1 // pred_fallthru
      _
    %v171 = vld [vmem:[%s0] sm:$0xff]
    %v172 = vld [vmem:[#allocation2] sm:$0xff]
    %v173 = vld [vmem:[#allocation2 + $0x8] sm:$0xff]
    %v174 = vld [vmem:[#allocation2 + $0x10] sm:$0xff]
    %v175 = vld [vmem:[#allocation2 + $0x18] sm:$0xff]
    %v176 = vld [vmem:[#allocation2 + $0x20] sm:$0xff]
    %v177 = vld [vmem:[#allocation2 + $0x28] sm:$0xff]
    %v178 = vld [vmem:[#allocation2 + $0x30] sm:$0xff]
    %v179 = vld [vmem:[#allocation2 + $0x38] sm:$0xff]
    %v180 = vld [vmem:[#allocation2 + $0x40] sm:$0xff]
    %v181 = vld [vmem:[#allocation2 + $0x48] sm:$0xff]
    %v182 = vld [vmem:[#allocation2 + $0x50] sm:$0xff]
    %v183 = vld [vmem:[#allocation2 + $0x58] sm:$0xff]
    %v184 = vld [vmem:[#allocation2 + $0x60] sm:$0xff]
    %v185 = vld [vmem:[#allocation2 + $0x68] sm:$0xff]
    %v186 = vld [vmem:[#allocation2 + $0x70] sm:$0xff]
    %v187 = vld [vmem:[#allocation2 + $0x78] sm:$0xff]
    %v188 = vld [vmem:[#allocation2 + $0x80] sm:$0xff]
    %v189 = vld [vmem:[#allocation2 + $0x88] sm:$0xff]
    %v190 = vld [vmem:[#allocation2 + $0x90] sm:$0xff]
    %v191 = vld [vmem:[#allocation2 + $0x98] sm:$0xff]
    %v192 = vld [vmem:[#allocation2 + $0xa0] sm:$0xff]
    %v193 = vld [vmem:[#allocation2 + $0xa8] sm:$0xff]
    %v194 = vld [vmem:[#allocation2 + $0xb0] sm:$0xff]
    %v195 = vld [vmem:[#allocation2 + $0xb8] sm:$0xff]
    %v196 = vld [vmem:[#allocation2 + $0xc0] sm:$0xff]
    %v197 = vld [vmem:[#allocation2 + $0xc8] sm:$0xff]
    %v198 = vld [vmem:[#allocation2 + $0xd0] sm:$0xff]
    %v199 = vld [vmem:[#allocation2 + $0xd8] sm:$0xff]
    %v200 = vld [vmem:[#allocation2 + $0xe0] sm:$0xff]
    %v201 = vld [vmem:[#allocation2 + $0xe8] sm:$0xff]
    %v202 = vld [vmem:[#allocation2 + $0xf0] sm:$0xff]
    %v203 = vld [vmem:[#allocation2 + $0xf8] sm:$0xff]
    %v204 = vld [vmem:[%s3] sm:$0x3]
    %v206 = vlaneseq
    %v207 = vshrl.u32 %v206, 7
    %v208 = vsub.s32 0, %v207
    %v209 = vrot.slane %v204, %v208
    %v210 = vlaneseq
    %v211 = vshrl.u32 %v210, 7
    %v212 = vsub.s32 1, %v211
    %v213 = vrot.slane %v204, %v212
    %v217 = vunpack.c.l.b16 %v171
    %v218 = vunpack.c.h.b16 %v171
    %v219 = vpack.c.b16 %v217, %v217
    %v220 = vpack.c.b16 %v218, %v218
    %v255 = vunpack.c.l.b16 %v172
    %v256 = vunpack.c.h.b16 %v172
    %v257 = vunpack.c.l.b16 %v173
    %v258 = vunpack.c.h.b16 %v173
    %v259 = vunpack.c.l.b16 %v174
    %v260 = vunpack.c.h.b16 %v174
    %v261 = vunpack.c.l.b16 %v175
    %v262 = vunpack.c.h.b16 %v175
    %v263 = vunpack.c.l.b16 %v176
    %v264 = vunpack.c.h.b16 %v176
    %v265 = vunpack.c.l.b16 %v177
    %v266 = vunpack.c.h.b16 %v177
    %v267 = vunpack.c.l.b16 %v178
    %v268 = vunpack.c.h.b16 %v178
    %v269 = vunpack.c.l.b16 %v179
    %v270 = vunpack.c.h.b16 %v179
    %v271 = vunpack.c.l.b16 %v180
    %v272 = vunpack.c.h.b16 %v180
    %v273 = vunpack.c.l.b16 %v181
    %v274 = vunpack.c.h.b16 %v181
    %v275 = vunpack.c.l.b16 %v182
    %v276 = vunpack.c.h.b16 %v182
    %v277 = vunpack.c.l.b16 %v183
    %v278 = vunpack.c.h.b16 %v183
    %v279 = vunpack.c.l.b16 %v184
    %v280 = vunpack.c.h.b16 %v184
    %v281 = vunpack.c.l.b16 %v185
    %v282 = vunpack.c.h.b16 %v185
    %v283 = vunpack.c.l.b16 %v186
    %v284 = vunpack.c.h.b16 %v186
    %v285 = vunpack.c.l.b16 %v187
    %v286 = vunpack.c.h.b16 %v187
    %v287 = vunpack.c.l.b16 %v188
    %v288 = vunpack.c.h.b16 %v188
    %v289 = vunpack.c.l.b16 %v189
    %v290 = vunpack.c.h.b16 %v189
    %v291 = vunpack.c.l.b16 %v190
    %v292 = vunpack.c.h.b16 %v190
    %v293 = vunpack.c.l.b16 %v191
    %v294 = vunpack.c.h.b16 %v191
    %v295 = vunpack.c.l.b16 %v192
    %v296 = vunpack.c.h.b16 %v192
    %v297 = vunpack.c.l.b16 %v193
    %v298 = vunpack.c.h.b16 %v193
    %v299 = vunpack.c.l.b16 %v194
    %v300 = vunpack.c.h.b16 %v194
    %v301 = vunpack.c.l.b16 %v195
    %v302 = vunpack.c.h.b16 %v195
    %v303 = vunpack.c.l.b16 %v196
    %v304 = vunpack.c.h.b16 %v196
    %v305 = vunpack.c.l.b16 %v197
    %v306 = vunpack.c.h.b16 %v197
    %v307 = vunpack.c.l.b16 %v198
    %v308 = vunpack.c.h.b16 %v198
    %v309 = vunpack.c.l.b16 %v199
    %v310 = vunpack.c.h.b16 %v199
    %v311 = vunpack.c.l.b16 %v200
    %v312 = vunpack.c.h.b16 %v200
    %v313 = vunpack.c.l.b16 %v201
    %v314 = vunpack.c.h.b16 %v201
    %v315 = vunpack.c.l.b16 %v202
    %v316 = vunpack.c.h.b16 %v202
    %v317 = vunpack.c.l.b16 %v203
    %v318 = vunpack.c.h.b16 %v203
    %v319 = vpack.c.b16 %v257, %v255
    %v320 = vpack.c.b16 %v258, %v256
    %v321 = vpack.c.b16 %v261, %v259
    %v322 = vpack.c.b16 %v262, %v260
    %v323 = vpack.c.b16 %v265, %v263
    %v324 = vpack.c.b16 %v266, %v264
    %v325 = vpack.c.b16 %v269, %v267
    %v326 = vpack.c.b16 %v270, %v268
    %v327 = vpack.c.b16 %v273, %v271
    %v328 = vpack.c.b16 %v274, %v272
    %v329 = vpack.c.b16 %v277, %v275
    %v330 = vpack.c.b16 %v278, %v276
    %v331 = vpack.c.b16 %v281, %v279
    %v332 = vpack.c.b16 %v282, %v280
    %v333 = vpack.c.b16 %v285, %v283
    %v334 = vpack.c.b16 %v286, %v284
    %v335 = vpack.c.b16 %v289, %v287
    %v336 = vpack.c.b16 %v290, %v288
    %v337 = vpack.c.b16 %v293, %v291
    %v338 = vpack.c.b16 %v294, %v292
    %v339 = vpack.c.b16 %v297, %v295
    %v340 = vpack.c.b16 %v298, %v296
    %v341 = vpack.c.b16 %v301, %v299
    %v342 = vpack.c.b16 %v302, %v300
    %v343 = vpack.c.b16 %v305, %v303
    %v344 = vpack.c.b16 %v306, %v304
    %v345 = vpack.c.b16 %v309, %v307
    %v346 = vpack.c.b16 %v310, %v308
    %v347 = vpack.c.b16 %v313, %v311
    %v348 = vpack.c.b16 %v314, %v312
    %v349 = vpack.c.b16 %v317, %v315
    %v350 = vpack.c.b16 %v318, %v316
    %383 = vmatprep.subr.bf16.mxu0 %v320
    %384 = vmatpush1.bf16.msra.mxu0 %v319
    %385 = vmatprep.subr.bf16.mxu0 %v322
    %386 = vmatpush1.bf16.msra.mxu0 %v321
    %387 = vmatprep.subr.bf16.mxu0 %v324
    %388 = vmatpush1.bf16.msra.mxu0 %v323
    %389 = vmatprep.subr.bf16.mxu0 %v326
    %390 = vmatpush1.bf16.msra.mxu0 %v325
    %391 = vmatprep.subr.bf16.mxu0 %v328
    %392 = vmatpush1.bf16.msra.mxu0 %v327
    %393 = vmatprep.subr.bf16.mxu0 %v330
    %394 = vmatpush1.bf16.msra.mxu0 %v329
    %395 = vmatprep.subr.bf16.mxu0 %v332
    %396 = vmatpush1.bf16.msra.mxu0 %v331
    %397 = vmatprep.subr.bf16.mxu0 %v334
    %398 = vmatpush1.bf16.msra.mxu0 %v333
    %399 = vmatprep.subr.bf16.mxu0 %v336
    %400 = vmatpush1.bf16.msra.mxu0 %v335
    %401 = vmatprep.subr.bf16.mxu0 %v338
    %402 = vmatpush1.bf16.msra.mxu0 %v337
    %403 = vmatprep.subr.bf16.mxu0 %v340
    %404 = vmatpush1.bf16.msra.mxu0 %v339
    %405 = vmatprep.subr.bf16.mxu0 %v342
    %406 = vmatpush1.bf16.msra.mxu0 %v341
    %407 = vmatprep.subr.bf16.mxu0 %v344
    %408 = vmatpush1.bf16.msra.mxu0 %v343
    %409 = vmatprep.subr.bf16.mxu0 %v346
    %410 = vmatpush1.bf16.msra.mxu0 %v345
    %411 = vmatprep.subr.bf16.mxu0 %v348
    %412 = vmatpush1.bf16.msra.mxu0 %v347
    %413 = vmatprep.subr.bf16.mxu0 %v350
    %414 = vmatpush1.bf16.msra.mxu0 %v349
    %415 = vmatprep.mubr.bf16.mxu0 %v220
    %416 = vmatmul.mubr.bf16.gmra.mrb[0].mxu0 %v219
    %v417 = vpop.f32.mrb[0].mxu0
    %v418 = vadd.f32 %v209, %v417
    %v419 = vpop.f32.mrb[0].mxu0
    %v420 = vadd.f32 %v213, %v419
    %v421 = vpop.f32.mrb[0].mxu0
    %v422 = vpop.f32.mrb[0].mxu0
    %423 = vdwg.mxu0
    %v424 = vmax.f32 %v418, 0.0
    %v425 = vmax.f32 %v420, 0.0
    %v426 = vpack.c.bf16 %v424, %v424
    %v427 = vpack.c.bf16 %v425, %v425
    %v428 = vld [vmem:[#allocation4] sm:$0xff]
    %v429 = vld [vmem:[#allocation4 + $0x8] sm:$0xff]
    %v430 = vld [vmem:[#allocation4 + $0x10] sm:$0xff]
    %v431 = vld [vmem:[#allocation4 + $0x18] sm:$0xff]
    %v432 = vld [vmem:[#allocation4 + $0x20] sm:$0xff]
    %v433 = vld [vmem:[#allocation4 + $0x28] sm:$0xff]
    %v434 = vld [vmem:[#allocation4 + $0x30] sm:$0xff]
    %v435 = vld [vmem:[#allocation4 + $0x38] sm:$0xff]
    %v436 = vld [vmem:[#allocation4 + $0x40] sm:$0xff]
    %v437 = vld [vmem:[#allocation4 + $0x48] sm:$0xff]
    %v438 = vld [vmem:[#allocation4 + $0x50] sm:$0xff]
    %v439 = vld [vmem:[#allocation4 + $0x58] sm:$0xff]
    %v440 = vld [vmem:[#allocation4 + $0x60] sm:$0xff]
    %v441 = vld [vmem:[#allocation4 + $0x68] sm:$0xff]
    %v442 = vld [vmem:[#allocation4 + $0x70] sm:$0xff]
    %v443 = vld [vmem:[#allocation4 + $0x78] sm:$0xff]
    %v444 = vld [vmem:[#allocation4 + $0x80] sm:$0xff]
    %v445 = vld [vmem:[#allocation4 + $0x88] sm:$0xff]
    %v446 = vld [vmem:[#allocation4 + $0x90] sm:$0xff]
    %v447 = vld [vmem:[#allocation4 + $0x98] sm:$0xff]
    %v448 = vld [vmem:[#allocation4 + $0xa0] sm:$0xff]
    %v449 = vld [vmem:[#allocation4 + $0xa8] sm:$0xff]
    %v450 = vld [vmem:[#allocation4 + $0xb0] sm:$0xff]
    %v451 = vld [vmem:[#allocation4 + $0xb8] sm:$0xff]
    %v452 = vld [vmem:[#allocation4 + $0xc0] sm:$0xff]
    %v453 = vld [vmem:[#allocation4 + $0xc8] sm:$0xff]
    %v454 = vld [vmem:[#allocation4 + $0xd0] sm:$0xff]
    %v455 = vld [vmem:[#allocation4 + $0xd8] sm:$0xff]
    %v456 = vld [vmem:[#allocation4 + $0xe0] sm:$0xff]
    %v457 = vld [vmem:[#allocation4 + $0xe8] sm:$0xff]
    %v458 = vld [vmem:[#allocation4 + $0xf0] sm:$0xff]
    %v459 = vld [vmem:[#allocation4 + $0xf8] sm:$0xff]
    %v460 = vld [vmem:[%s5] sm:$0x3]
    %v462 = vlaneseq
    %v463 = vshrl.u32 %v462, 7
    %v464 = vsub.s32 0, %v463
    %v465 = vrot.slane %v460, %v464
    %v466 = vlaneseq
    %v467 = vshrl.u32 %v466, 7
    %v468 = vsub.s32 1, %v467
    %v469 = vrot.slane %v460, %v468
    %v504 = vunpack.c.l.b16 %v428
    %v505 = vunpack.c.h.b16 %v428
    %v506 = vunpack.c.l.b16 %v429
    %v507 = vunpack.c.h.b16 %v429
    %v508 = vunpack.c.l.b16 %v430
    %v509 = vunpack.c.h.b16 %v430
    %v510 = vunpack.c.l.b16 %v431
    %v511 = vunpack.c.h.b16 %v431
    %v512 = vunpack.c.l.b16 %v432
    %v513 = vunpack.c.h.b16 %v432
    %v514 = vunpack.c.l.b16 %v433
    %v515 = vunpack.c.h.b16 %v433
    %v516 = vunpack.c.l.b16 %v434
    %v517 = vunpack.c.h.b16 %v434
    %v518 = vunpack.c.l.b16 %v435
    %v519 = vunpack.c.h.b16 %v435
    %v520 = vunpack.c.l.b16 %v436
    %v521 = vunpack.c.h.b16 %v436
    %v522 = vunpack.c.l.b16 %v437
    %v523 = vunpack.c.h.b16 %v437
    %v524 = vunpack.c.l.b16 %v438
    %v525 = vunpack.c.h.b16 %v438
    %v526 = vunpack.c.l.b16 %v439
    %v527 = vunpack.c.h.b16 %v439
    %v528 = vunpack.c.l.b16 %v440
    %v529 = vunpack.c.h.b16 %v440
    %v530 = vunpack.c.l.b16 %v441
    %v531 = vunpack.c.h.b16 %v441
    %v532 = vunpack.c.l.b16 %v442
    %v533 = vunpack.c.h.b16 %v442
    %v534 = vunpack.c.l.b16 %v443
    %v535 = vunpack.c.h.b16 %v443
    %v536 = vunpack.c.l.b16 %v444
    %v537 = vunpack.c.h.b16 %v444
    %v538 = vunpack.c.l.b16 %v445
    %v539 = vunpack.c.h.b16 %v445
    %v540 = vunpack.c.l.b16 %v446
    %v541 = vunpack.c.h.b16 %v446
    %v542 = vunpack.c.l.b16 %v447
    %v543 = vunpack.c.h.b16 %v447
    %v544 = vunpack.c.l.b16 %v448
    %v545 = vunpack.c.h.b16 %v448
    %v546 = vunpack.c.l.b16 %v449
    %v547 = vunpack.c.h.b16 %v449
    %v548 = vunpack.c.l.b16 %v450
    %v549 = vunpack.c.h.b16 %v450
    %v550 = vunpack.c.l.b16 %v451
    %v551 = vunpack.c.h.b16 %v451
    %v552 = vunpack.c.l.b16 %v452
    %v553 = vunpack.c.h.b16 %v452
    %v554 = vunpack.c.l.b16 %v453
    %v555 = vunpack.c.h.b16 %v453
    %v556 = vunpack.c.l.b16 %v454
    %v557 = vunpack.c.h.b16 %v454
    %v558 = vunpack.c.l.b16 %v455
    %v559 = vunpack.c.h.b16 %v455
    %v560 = vunpack.c.l.b16 %v456
    %v561 = vunpack.c.h.b16 %v456
    %v562 = vunpack.c.l.b16 %v457
    %v563 = vunpack.c.h.b16 %v457
    %v564 = vunpack.c.l.b16 %v458
    %v565 = vunpack.c.h.b16 %v458
    %v566 = vunpack.c.l.b16 %v459
    %v567 = vunpack.c.h.b16 %v459
    %v568 = vpack.c.b16 %v506, %v504
    %v569 = vpack.c.b16 %v507, %v505
    %v570 = vpack.c.b16 %v510, %v508
    %v571 = vpack.c.b16 %v511, %v509
    %v572 = vpack.c.b16 %v514, %v512
    %v573 = vpack.c.b16 %v515, %v513
    %v574 = vpack.c.b16 %v518, %v516
    %v575 = vpack.c.b16 %v519, %v517
    %v576 = vpack.c.b16 %v522, %v520
    %v577 = vpack.c.b16 %v523, %v521
    %v578 = vpack.c.b16 %v526, %v524
    %v579 = vpack.c.b16 %v527, %v525
    %v580 = vpack.c.b16 %v530, %v528
    %v581 = vpack.c.b16 %v531, %v529
    %v582 = vpack.c.b16 %v534, %v532
    %v583 = vpack.c.b16 %v535, %v533
    %v584 = vpack.c.b16 %v538, %v536
    %v585 = vpack.c.b16 %v539, %v537
    %v586 = vpack.c.b16 %v542, %v540
    %v587 = vpack.c.b16 %v543, %v541
    %v588 = vpack.c.b16 %v546, %v544
    %v589 = vpack.c.b16 %v547, %v545
    %v590 = vpack.c.b16 %v550, %v548
    %v591 = vpack.c.b16 %v551, %v549
    %v592 = vpack.c.b16 %v554, %v552
    %v593 = vpack.c.b16 %v555, %v553
    %v594 = vpack.c.b16 %v558, %v556
    %v595 = vpack.c.b16 %v559, %v557
    %v596 = vpack.c.b16 %v562, %v560
    %v597 = vpack.c.b16 %v563, %v561
    %v598 = vpack.c.b16 %v566, %v564
    %v599 = vpack.c.b16 %v567, %v565
    %632 = vmatprep.subr.bf16.mxu0 %v569
    %633 = vmatpush1.bf16.msra.mxu0 %v568
    %634 = vmatprep.subr.bf16.mxu0 %v571
    %635 = vmatpush1.bf16.msra.mxu0 %v570
    %636 = vmatprep.subr.bf16.mxu0 %v573
    %637 = vmatpush1.bf16.msra.mxu0 %v572
    %638 = vmatprep.subr.bf16.mxu0 %v575
    %639 = vmatpush1.bf16.msra.mxu0 %v574
    %640 = vmatprep.subr.bf16.mxu0 %v577
    %641 = vmatpush1.bf16.msra.mxu0 %v576
    %642 = vmatprep.subr.bf16.mxu0 %v579
    %643 = vmatpush1.bf16.msra.mxu0 %v578
    %644 = vmatprep.subr.bf16.mxu0 %v581
    %645 = vmatpush1.bf16.msra.mxu0 %v580
    %646 = vmatprep.subr.bf16.mxu0 %v583
    %647 = vmatpush1.bf16.msra.mxu0 %v582
    %648 = vmatprep.subr.bf16.mxu0 %v585
    %649 = vmatpush1.bf16.msra.mxu0 %v584
    %650 = vmatprep.subr.bf16.mxu0 %v587
    %651 = vmatpush1.bf16.msra.mxu0 %v586
    %652 = vmatprep.subr.bf16.mxu0 %v589
    %653 = vmatpush1.bf16.msra.mxu0 %v588
    %654 = vmatprep.subr.bf16.mxu0 %v591
    %655 = vmatpush1.bf16.msra.mxu0 %v590
    %656 = vmatprep.subr.bf16.mxu0 %v593
    %657 = vmatpush1.bf16.msra.mxu0 %v592
    %658 = vmatprep.subr.bf16.mxu0 %v595
    %659 = vmatpush1.bf16.msra.mxu0 %v594
    %660 = vmatprep.subr.bf16.mxu0 %v597
    %661 = vmatpush1.bf16.msra.mxu0 %v596
    %662 = vmatprep.subr.bf16.mxu0 %v599
    %663 = vmatpush1.bf16.msra.mxu0 %v598
    %664 = vmatprep.mubr.bf16.mxu0 %v427
    %665 = vmatmul.mubr.bf16.gmra.mrb[0].mxu0 %v426
    %v666 = vpop.f32.mrb[0].mxu0
    %v667 = vadd.f32 %v465, %v666
    %v668 = vpop.f32.mrb[0].mxu0
    %v669 = vadd.f32 %v469, %v668
    %v670 = vpop.f32.mrb[0].mxu0
    %v671 = vpop.f32.mrb[0].mxu0
    %672 = vdwg.mxu0
    %v673 = vmax.f32 %v667, 0.0
    %v674 = vmax.f32 %v669, 0.0
    %v675 = vpack.c.bf16 %v673, %v673
    %v676 = vpack.c.bf16 %v674, %v674
    %v677 = vld [vmem:[#allocation6] sm:$0xff]
    %v678 = vld [vmem:[#allocation6 + $0x8] sm:$0xff]
    %v679 = vld [vmem:[#allocation6 + $0x10] sm:$0xff]
    %v680 = vld [vmem:[#allocation6 + $0x18] sm:$0xff]
    %v681 = vld [vmem:[#allocation6 + $0x20] sm:$0xff]
    %v682 = vld [vmem:[#allocation6 + $0x28] sm:$0xff]
    %v683 = vld [vmem:[#allocation6 + $0x30] sm:$0xff]
    %v684 = vld [vmem:[#allocation6 + $0x38] sm:$0xff]
    %v685 = vld [vmem:[#allocation6 + $0x40] sm:$0xff]
    %v686 = vld [vmem:[#allocation6 + $0x48] sm:$0xff]
    %v687 = vld [vmem:[#allocation6 + $0x50] sm:$0xff]
    %v688 = vld [vmem:[#allocation6 + $0x58] sm:$0xff]
    %v689 = vld [vmem:[#allocation6 + $0x60] sm:$0xff]
    %v690 = vld [vmem:[#allocation6 + $0x68] sm:$0xff]
    %v691 = vld [vmem:[#allocation6 + $0x70] sm:$0xff]
    %v692 = vld [vmem:[#allocation6 + $0x78] sm:$0xff]
    %v693 = vld [vmem:[#allocation6 + $0x80] sm:$0xff]
    %v694 = vld [vmem:[#allocation6 + $0x88] sm:$0xff]
    %v695 = vld [vmem:[#allocation6 + $0x90] sm:$0xff]
    %v696 = vld [vmem:[#allocation6 + $0x98] sm:$0xff]
    %v697 = vld [vmem:[#allocation6 + $0xa0] sm:$0xff]
    %v698 = vld [vmem:[#allocation6 + $0xa8] sm:$0xff]
    %v699 = vld [vmem:[#allocation6 + $0xb0] sm:$0xff]
    %v700 = vld [vmem:[#allocation6 + $0xb8] sm:$0xff]
    %v701 = vld [vmem:[#allocation6 + $0xc0] sm:$0xff]
    %v702 = vld [vmem:[#allocation6 + $0xc8] sm:$0xff]
    %v703 = vld [vmem:[#allocation6 + $0xd0] sm:$0xff]
    %v704 = vld [vmem:[#allocation6 + $0xd8] sm:$0xff]
    %v705 = vld [vmem:[#allocation6 + $0xe0] sm:$0xff]
    %v706 = vld [vmem:[#allocation6 + $0xe8] sm:$0xff]
    %v707 = vld [vmem:[#allocation6 + $0xf0] sm:$0xff]
    %v708 = vld [vmem:[#allocation6 + $0xf8] sm:$0xff]
    %v709 = vld [vmem:[%s7] sm:$0x3]
    %v711 = vlaneseq
    %v712 = vshrl.u32 %v711, 7
    %v713 = vsub.s32 0, %v712
    %v714 = vrot.slane %v709, %v713
    %v715 = vlaneseq
    %v716 = vshrl.u32 %v715, 7
    %v717 = vsub.s32 1, %v716
    %v718 = vrot.slane %v709, %v717
    %v753 = vunpack.c.l.b16 %v677
    %v754 = vunpack.c.h.b16 %v677
    %v755 = vunpack.c.l.b16 %v678
    %v756 = vunpack.c.h.b16 %v678
    %v757 = vunpack.c.l.b16 %v679
    %v758 = vunpack.c.h.b16 %v679
    %v759 = vunpack.c.l.b16 %v680
    %v760 = vunpack.c.h.b16 %v680
    %v761 = vunpack.c.l.b16 %v681
    %v762 = vunpack.c.h.b16 %v681
    %v763 = vunpack.c.l.b16 %v682
    %v764 = vunpack.c.h.b16 %v682
    %v765 = vunpack.c.l.b16 %v683
    %v766 = vunpack.c.h.b16 %v683
    %v767 = vunpack.c.l.b16 %v684
    %v768 = vunpack.c.h.b16 %v684
    %v769 = vunpack.c.l.b16 %v685
    %v770 = vunpack.c.h.b16 %v685
    %v771 = vunpack.c.l.b16 %v686
    %v772 = vunpack.c.h.b16 %v686
    %v773 = vunpack.c.l.b16 %v687
    %v774 = vunpack.c.h.b16 %v687
    %v775 = vunpack.c.l.b16 %v688
    %v776 = vunpack.c.h.b16 %v688
    %v777 = vunpack.c.l.b16 %v689
    %v778 = vunpack.c.h.b16 %v689
    %v779 = vunpack.c.l.b16 %v690
    %v780 = vunpack.c.h.b16 %v690
    %v781 = vunpack.c.l.b16 %v691
    %v782 = vunpack.c.h.b16 %v691
    %v783 = vunpack.c.l.b16 %v692
    %v784 = vunpack.c.h.b16 %v692
    %v785 = vunpack.c.l.b16 %v693
    %v786 = vunpack.c.h.b16 %v693
    %v787 = vunpack.c.l.b16 %v694
    %v788 = vunpack.c.h.b16 %v694
    %v789 = vunpack.c.l.b16 %v695
    %v790 = vunpack.c.h.b16 %v695
    %v791 = vunpack.c.l.b16 %v696
    %v792 = vunpack.c.h.b16 %v696
    %v793 = vunpack.c.l.b16 %v697
    %v794 = vunpack.c.h.b16 %v697
    %v795 = vunpack.c.l.b16 %v698
    %v796 = vunpack.c.h.b16 %v698
    %v797 = vunpack.c.l.b16 %v699
    %v798 = vunpack.c.h.b16 %v699
    %v799 = vunpack.c.l.b16 %v700
    %v800 = vunpack.c.h.b16 %v700
    %v801 = vunpack.c.l.b16 %v701
    %v802 = vunpack.c.h.b16 %v701
    %v803 = vunpack.c.l.b16 %v702
    %v804 = vunpack.c.h.b16 %v702
    %v805 = vunpack.c.l.b16 %v703
    %v806 = vunpack.c.h.b16 %v703
    %v807 = vunpack.c.l.b16 %v704
    %v808 = vunpack.c.h.b16 %v704
    %v809 = vunpack.c.l.b16 %v705
    %v810 = vunpack.c.h.b16 %v705
    %v811 = vunpack.c.l.b16 %v706
    %v812 = vunpack.c.h.b16 %v706
    %v813 = vunpack.c.l.b16 %v707
    %v814 = vunpack.c.h.b16 %v707
    %v815 = vunpack.c.l.b16 %v708
    %v816 = vunpack.c.h.b16 %v708
    %v817 = vpack.c.b16 %v755, %v753
    %v818 = vpack.c.b16 %v756, %v754
    %v819 = vpack.c.b16 %v759, %v757
    %v820 = vpack.c.b16 %v760, %v758
    %v821 = vpack.c.b16 %v763, %v761
    %v822 = vpack.c.b16 %v764, %v762
    %v823 = vpack.c.b16 %v767, %v765
    %v824 = vpack.c.b16 %v768, %v766
    %v825 = vpack.c.b16 %v771, %v769
    %v826 = vpack.c.b16 %v772, %v770
    %v827 = vpack.c.b16 %v775, %v773
    %v828 = vpack.c.b16 %v776, %v774
    %v829 = vpack.c.b16 %v779, %v777
    %v830 = vpack.c.b16 %v780, %v778
    %v831 = vpack.c.b16 %v783, %v781
    %v832 = vpack.c.b16 %v784, %v782
    %v833 = vpack.c.b16 %v787, %v785
    %v834 = vpack.c.b16 %v788, %v786
    %v835 = vpack.c.b16 %v791, %v789
    %v836 = vpack.c.b16 %v792, %v790
    %v837 = vpack.c.b16 %v795, %v793
    %v838 = vpack.c.b16 %v796, %v794
    %v839 = vpack.c.b16 %v799, %v797
    %v840 = vpack.c.b16 %v800, %v798
    %v841 = vpack.c.b16 %v803, %v801
    %v842 = vpack.c.b16 %v804, %v802
    %v843 = vpack.c.b16 %v807, %v805
    %v844 = vpack.c.b16 %v808, %v806
    %v845 = vpack.c.b16 %v811, %v809
    %v846 = vpack.c.b16 %v812, %v810
    %v847 = vpack.c.b16 %v815, %v813
    %v848 = vpack.c.b16 %v816, %v814
    %881 = vmatprep.subr.bf16.mxu0 %v818
    %882 = vmatpush1.bf16.msra.mxu0 %v817
    %883 = vmatprep.subr.bf16.mxu0 %v820
    %884 = vmatpush1.bf16.msra.mxu0 %v819
    %885 = vmatprep.subr.bf16.mxu0 %v822
    %886 = vmatpush1.bf16.msra.mxu0 %v821
    %887 = vmatprep.subr.bf16.mxu0 %v824
    %888 = vmatpush1.bf16.msra.mxu0 %v823
    %889 = vmatprep.subr.bf16.mxu0 %v826
    %890 = vmatpush1.bf16.msra.mxu0 %v825
    %891 = vmatprep.subr.bf16.mxu0 %v828
    %892 = vmatpush1.bf16.msra.mxu0 %v827
    %893 = vmatprep.subr.bf16.mxu0 %v830
    %894 = vmatpush1.bf16.msra.mxu0 %v829
    %895 = vmatprep.subr.bf16.mxu0 %v832
    %896 = vmatpush1.bf16.msra.mxu0 %v831
    %897 = vmatprep.subr.bf16.mxu0 %v834
    %898 = vmatpush1.bf16.msra.mxu0 %v833
    %899 = vmatprep.subr.bf16.mxu0 %v836
    %900 = vmatpush1.bf16.msra.mxu0 %v835
    %901 = vmatprep.subr.bf16.mxu0 %v838
    %902 = vmatpush1.bf16.msra.mxu0 %v837
    %903 = vmatprep.subr.bf16.mxu0 %v840
    %904 = vmatpush1.bf16.msra.mxu0 %v839
    %905 = vmatprep.subr.bf16.mxu0 %v842
    %906 = vmatpush1.bf16.msra.mxu0 %v841
    %907 = vmatprep.subr.bf16.mxu0 %v844
    %908 = vmatpush1.bf16.msra.mxu0 %v843
    %909 = vmatprep.subr.bf16.mxu0 %v846
    %910 = vmatpush1.bf16.msra.mxu0 %v845
    %911 = vmatprep.subr.bf16.mxu0 %v848
    %912 = vmatpush1.bf16.msra.mxu0 %v847
    %913 = vmatprep.mubr.bf16.mxu0 %v676
    %914 = vmatmul.mubr.bf16.gmra.mrb[0].mxu0 %v675
    %v915 = vpop.f32.mrb[0].mxu0
    %v916 = vadd.f32 %v714, %v915
    %v917 = vpop.f32.mrb[0].mxu0
    %v918 = vadd.f32 %v718, %v917
    %v919 = vpop.f32.mrb[0].mxu0
    %v920 = vpop.f32.mrb[0].mxu0
    %921 = vdwg.mxu0
    %v922 = vmax.f32 %v916, 0.0
    %v923 = vmax.f32 %v918, 0.0
    %v924 = vpack.c.bf16 %v922, %v922
    %v925 = vpack.c.bf16 %v923, %v923
    %v926 = vld [vmem:[#allocation7] sm:$0xff]
    %v927 = vld [vmem:[#allocation7 + $0x8] sm:$0xff]
    %v928 = vld [vmem:[#allocation7 + $0x10] sm:$0xff]
    %v929 = vld [vmem:[#allocation7 + $0x18] sm:$0xff]
    %v930 = vld [vmem:[#allocation7 + $0x20] sm:$0xff]
    %v931 = vld [vmem:[#allocation7 + $0x28] sm:$0xff]
    %v932 = vld [vmem:[#allocation7 + $0x30] sm:$0xff]
    %v933 = vld [vmem:[#allocation7 + $0x38] sm:$0xff]
    %v934 = vld [vmem:[#allocation7 + $0x40] sm:$0xff]
    %v935 = vld [vmem:[#allocation7 + $0x48] sm:$0xff]
    %v936 = vld [vmem:[#allocation7 + $0x50] sm:$0xff]
    %v937 = vld [vmem:[#allocation7 + $0x58] sm:$0xff]
    %v938 = vld [vmem:[#allocation7 + $0x60] sm:$0xff]
    %v939 = vld [vmem:[#allocation7 + $0x68] sm:$0xff]
    %v940 = vld [vmem:[#allocation7 + $0x70] sm:$0xff]
    %v941 = vld [vmem:[#allocation7 + $0x78] sm:$0xff]
    %v942 = vld [vmem:[#allocation7 + $0x80] sm:$0xff]
    %v943 = vld [vmem:[#allocation7 + $0x88] sm:$0xff]
    %v944 = vld [vmem:[#allocation7 + $0x90] sm:$0xff]
    %v945 = vld [vmem:[#allocation7 + $0x98] sm:$0xff]
    %v946 = vld [vmem:[#allocation7 + $0xa0] sm:$0xff]
    %v947 = vld [vmem:[#allocation7 + $0xa8] sm:$0xff]
    %v948 = vld [vmem:[#allocation7 + $0xb0] sm:$0xff]
    %v949 = vld [vmem:[#allocation7 + $0xb8] sm:$0xff]
    %v950 = vld [vmem:[#allocation7 + $0xc0] sm:$0xff]
    %v951 = vld [vmem:[#allocation7 + $0xc8] sm:$0xff]
    %v952 = vld [vmem:[#allocation7 + $0xd0] sm:$0xff]
    %v953 = vld [vmem:[#allocation7 + $0xd8] sm:$0xff]
    %v954 = vld [vmem:[#allocation7 + $0xe0] sm:$0xff]
    %v955 = vld [vmem:[#allocation7 + $0xe8] sm:$0xff]
    %v956 = vld [vmem:[#allocation7 + $0xf0] sm:$0xff]
    %v957 = vld [vmem:[#allocation7 + $0xf8] sm:$0xff]
    %v958 = vld [vmem:[%s9] sm:$0x3]
    %v960 = vlaneseq
    %v961 = vshrl.u32 %v960, 7
    %v962 = vsub.s32 0, %v961
    %v963 = vrot.slane %v958, %v962
    %v964 = vlaneseq
    %v965 = vshrl.u32 %v964, 7
    %v966 = vsub.s32 1, %v965
    %v967 = vrot.slane %v958, %v966
    %v1002 = vunpack.c.l.b16 %v926
    %v1003 = vunpack.c.h.b16 %v926
    %v1004 = vunpack.c.l.b16 %v927
    %v1005 = vunpack.c.h.b16 %v927
    %v1006 = vunpack.c.l.b16 %v928
    %v1007 = vunpack.c.h.b16 %v928
    %v1008 = vunpack.c.l.b16 %v929
    %v1009 = vunpack.c.h.b16 %v929
    %v1010 = vunpack.c.l.b16 %v930
    %v1011 = vunpack.c.h.b16 %v930
    %v1012 = vunpack.c.l.b16 %v931
    %v1013 = vunpack.c.h.b16 %v931
    %v1014 = vunpack.c.l.b16 %v932
    %v1015 = vunpack.c.h.b16 %v932
    %v1016 = vunpack.c.l.b16 %v933
    %v1017 = vunpack.c.h.b16 %v933
    %v1018 = vunpack.c.l.b16 %v934
    %v1019 = vunpack.c.h.b16 %v934
    %v1020 = vunpack.c.l.b16 %v935
    %v1021 = vunpack.c.h.b16 %v935
    %v1022 = vunpack.c.l.b16 %v936
    %v1023 = vunpack.c.h.b16 %v936
    %v1024 = vunpack.c.l.b16 %v937
    %v1025 = vunpack.c.h.b16 %v937
    %v1026 = vunpack.c.l.b16 %v938
    %v1027 = vunpack.c.h.b16 %v938
    %v1028 = vunpack.c.l.b16 %v939
    %v1029 = vunpack.c.h.b16 %v939
    %v1030 = vunpack.c.l.b16 %v940
    %v1031 = vunpack.c.h.b16 %v940
    %v1032 = vunpack.c.l.b16 %v941
    %v1033 = vunpack.c.h.b16 %v941
    %v1034 = vunpack.c.l.b16 %v942
    %v1035 = vunpack.c.h.b16 %v942
    %v1036 = vunpack.c.l.b16 %v943
    %v1037 = vunpack.c.h.b16 %v943
    %v1038 = vunpack.c.l.b16 %v944
    %v1039 = vunpack.c.h.b16 %v944
    %v1040 = vunpack.c.l.b16 %v945
    %v1041 = vunpack.c.h.b16 %v945
    %v1042 = vunpack.c.l.b16 %v946
    %v1043 = vunpack.c.h.b16 %v946
    %v1044 = vunpack.c.l.b16 %v947
    %v1045 = vunpack.c.h.b16 %v947
    %v1046 = vunpack.c.l.b16 %v948
    %v1047 = vunpack.c.h.b16 %v948
    %v1048 = vunpack.c.l.b16 %v949
    %v1049 = vunpack.c.h.b16 %v949
    %v1050 = vunpack.c.l.b16 %v950
    %v1051 = vunpack.c.h.b16 %v950
    %v1052 = vunpack.c.l.b16 %v951
    %v1053 = vunpack.c.h.b16 %v951
    %v1054 = vunpack.c.l.b16 %v952
    %v1055 = vunpack.c.h.b16 %v952
    %v1056 = vunpack.c.l.b16 %v953
    %v1057 = vunpack.c.h.b16 %v953
    %v1058 = vunpack.c.l.b16 %v954
    %v1059 = vunpack.c.h.b16 %v954
    %v1060 = vunpack.c.l.b16 %v955
    %v1061 = vunpack.c.h.b16 %v955
    %v1062 = vunpack.c.l.b16 %v956
    %v1063 = vunpack.c.h.b16 %v956
    %v1064 = vunpack.c.l.b16 %v957
    %v1065 = vunpack.c.h.b16 %v957
    %v1066 = vpack.c.b16 %v1004, %v1002
    %v1067 = vpack.c.b16 %v1005, %v1003
    %v1068 = vpack.c.b16 %v1008, %v1006
    %v1069 = vpack.c.b16 %v1009, %v1007
    %v1070 = vpack.c.b16 %v1012, %v1010
    %v1071 = vpack.c.b16 %v1013, %v1011
    %v1072 = vpack.c.b16 %v1016, %v1014
    %v1073 = vpack.c.b16 %v1017, %v1015
    %v1074 = vpack.c.b16 %v1020, %v1018
    %v1075 = vpack.c.b16 %v1021, %v1019
    %v1076 = vpack.c.b16 %v1024, %v1022
    %v1077 = vpack.c.b16 %v1025, %v1023
    %v1078 = vpack.c.b16 %v1028, %v1026
    %v1079 = vpack.c.b16 %v1029, %v1027
    %v1080 = vpack.c.b16 %v1032, %v1030
    %v1081 = vpack.c.b16 %v1033, %v1031
    %v1082 = vpack.c.b16 %v1036, %v1034
    %v1083 = vpack.c.b16 %v1037, %v1035
    %v1084 = vpack.c.b16 %v1040, %v1038
    %v1085 = vpack.c.b16 %v1041, %v1039
    %v1086 = vpack.c.b16 %v1044, %v1042
    %v1087 = vpack.c.b16 %v1045, %v1043
    %v1088 = vpack.c.b16 %v1048, %v1046
    %v1089 = vpack.c.b16 %v1049, %v1047
    %v1090 = vpack.c.b16 %v1052, %v1050
    %v1091 = vpack.c.b16 %v1053, %v1051
    %v1092 = vpack.c.b16 %v1056, %v1054
    %v1093 = vpack.c.b16 %v1057, %v1055
    %v1094 = vpack.c.b16 %v1060, %v1058
    %v1095 = vpack.c.b16 %v1061, %v1059
    %v1096 = vpack.c.b16 %v1064, %v1062
    %v1097 = vpack.c.b16 %v1065, %v1063
    %1130 = vmatprep.subr.bf16.mxu0 %v1067
    %1131 = vmatpush1.bf16.msra.mxu0 %v1066
    %1132 = vmatprep.subr.bf16.mxu0 %v1069
    %1133 = vmatpush1.bf16.msra.mxu0 %v1068
    %1134 = vmatprep.subr.bf16.mxu0 %v1071
    %1135 = vmatpush1.bf16.msra.mxu0 %v1070
    %1136 = vmatprep.subr.bf16.mxu0 %v1073
    %1137 = vmatpush1.bf16.msra.mxu0 %v1072
    %1138 = vmatprep.subr.bf16.mxu0 %v1075
    %1139 = vmatpush1.bf16.msra.mxu0 %v1074
    %1140 = vmatprep.subr.bf16.mxu0 %v1077
    %1141 = vmatpush1.bf16.msra.mxu0 %v1076
    %1142 = vmatprep.subr.bf16.mxu0 %v1079
    %1143 = vmatpush1.bf16.msra.mxu0 %v1078
    %1144 = vmatprep.subr.bf16.mxu0 %v1081
    %1145 = vmatpush1.bf16.msra.mxu0 %v1080
    %1146 = vmatprep.subr.bf16.mxu0 %v1083
    %1147 = vmatpush1.bf16.msra.mxu0 %v1082
    %1148 = vmatprep.subr.bf16.mxu0 %v1085
    %1149 = vmatpush1.bf16.msra.mxu0 %v1084
    %1150 = vmatprep.subr.bf16.mxu0 %v1087
    %1151 = vmatpush1.bf16.msra.mxu0 %v1086
    %1152 = vmatprep.subr.bf16.mxu0 %v1089
    %1153 = vmatpush1.bf16.msra.mxu0 %v1088
    %1154 = vmatprep.subr.bf16.mxu0 %v1091
    %1155 = vmatpush1.bf16.msra.mxu0 %v1090
    %1156 = vmatprep.subr.bf16.mxu0 %v1093
    %1157 = vmatpush1.bf16.msra.mxu0 %v1092
    %1158 = vmatprep.subr.bf16.mxu0 %v1095
    %1159 = vmatpush1.bf16.msra.mxu0 %v1094
    %1160 = vmatprep.subr.bf16.mxu0 %v1097
    %1161 = vmatpush1.bf16.msra.mxu0 %v1096
    %1162 = vmatprep.mubr.bf16.mxu0 %v925
    %1163 = vmatmul.mubr.bf16.gmra.mrb[0].mxu0 %v924
    %v1164 = vpop.f32.mrb[0].mxu0
    %v1165 = vadd.f32 %v963, %v1164
    %v1166 = vpop.f32.mrb[0].mxu0
    %v1167 = vadd.f32 %v967, %v1166
    %v1168 = vpop.f32.mrb[0].mxu0
    %v1169 = vpop.f32.mrb[0].mxu0
    %1170 = vdwg.mxu0
    %v1171 = vmul.f32 %v1167, 0.5
    %v1172 = vmul.f32 %v1171, 1.442695
    %v1173 = vpow.pop %v1172
    %v1174 = vld [vmem:[%s1] sm:$0xff]
    %v1175 = vmul.f32 %v1173, %v1174
    %v1176 = vadd.f32 %v1165, %v1175
    %v1177 = vpack.c.bf16 %v1176, %v1176
    %v1178 = vld [vmem:[#allocation9] sm:$0xff]
    %v1179 = vld [vmem:[#allocation9 + $0x8] sm:$0xff]
    %v1180 = vld [vmem:[#allocation9 + $0x10] sm:$0xff]
    %v1181 = vld [vmem:[#allocation9 + $0x18] sm:$0xff]
    %v1182 = vld [vmem:[#allocation9 + $0x20] sm:$0xff]
    %v1183 = vld [vmem:[#allocation9 + $0x28] sm:$0xff]
    %v1184 = vld [vmem:[#allocation9 + $0x30] sm:$0xff]
    %v1185 = vld [vmem:[#allocation9 + $0x38] sm:$0xff]
    %v1186 = vld [vmem:[#allocation9 + $0x40] sm:$0xff]
    %v1187 = vld [vmem:[#allocation9 + $0x48] sm:$0xff]
    %v1188 = vld [vmem:[#allocation9 + $0x50] sm:$0xff]
    %v1189 = vld [vmem:[#allocation9 + $0x58] sm:$0xff]
    %v1190 = vld [vmem:[#allocation9 + $0x60] sm:$0xff]
    %v1191 = vld [vmem:[#allocation9 + $0x68] sm:$0xff]
    %v1192 = vld [vmem:[#allocation9 + $0x70] sm:$0xff]
    %v1193 = vld [vmem:[#allocation9 + $0x78] sm:$0xff]
    %v1194 = vld [vmem:[%s11] sm:$0x3]
    %v1196 = vlaneseq
    %v1197 = vshrl.u32 %v1196, 7
    %v1198 = vsub.s32 0, %v1197
    %v1199 = vrot.slane %v1194, %v1198
    %v1200 = vlaneseq
    %v1201 = vshrl.u32 %v1200, 7
    %v1202 = vsub.s32 1, %v1201
    %v1203 = vrot.slane %v1194, %v1202
    %v1222 = vunpack.c.l.b16 %v1178
    %v1223 = vunpack.c.h.b16 %v1178
    %v1224 = vunpack.c.l.b16 %v1179
    %v1225 = vunpack.c.h.b16 %v1179
    %v1226 = vunpack.c.l.b16 %v1180
    %v1227 = vunpack.c.h.b16 %v1180
    %v1228 = vunpack.c.l.b16 %v1181
    %v1229 = vunpack.c.h.b16 %v1181
    %v1230 = vunpack.c.l.b16 %v1182
    %v1231 = vunpack.c.h.b16 %v1182
    %v1232 = vunpack.c.l.b16 %v1183
    %v1233 = vunpack.c.h.b16 %v1183
    %v1234 = vunpack.c.l.b16 %v1184
    %v1235 = vunpack.c.h.b16 %v1184
    %v1236 = vunpack.c.l.b16 %v1185
    %v1237 = vunpack.c.h.b16 %v1185
    %v1238 = vunpack.c.l.b16 %v1186
    %v1239 = vunpack.c.h.b16 %v1186
    %v1240 = vunpack.c.l.b16 %v1187
    %v1241 = vunpack.c.h.b16 %v1187
    %v1242 = vunpack.c.l.b16 %v1188
    %v1243 = vunpack.c.h.b16 %v1188
    %v1244 = vunpack.c.l.b16 %v1189
    %v1245 = vunpack.c.h.b16 %v1189
    %v1246 = vunpack.c.l.b16 %v1190
    %v1247 = vunpack.c.h.b16 %v1190
    %v1248 = vunpack.c.l.b16 %v1191
    %v1249 = vunpack.c.h.b16 %v1191
    %v1250 = vunpack.c.l.b16 %v1192
    %v1251 = vunpack.c.h.b16 %v1192
    %v1252 = vunpack.c.l.b16 %v1193
    %v1253 = vunpack.c.h.b16 %v1193
    %v1254 = vpack.c.b16 %v1224, %v1222
    %v1255 = vpack.c.b16 %v1225, %v1223
    %v1256 = vpack.c.b16 %v1228, %v1226
    %v1257 = vpack.c.b16 %v1229, %v1227
    %v1258 = vpack.c.b16 %v1232, %v1230
    %v1259 = vpack.c.b16 %v1233, %v1231
    %v1260 = vpack.c.b16 %v1236, %v1234
    %v1261 = vpack.c.b16 %v1237, %v1235
    %v1262 = vpack.c.b16 %v1240, %v1238
    %v1263 = vpack.c.b16 %v1241, %v1239
    %v1264 = vpack.c.b16 %v1244, %v1242
    %v1265 = vpack.c.b16 %v1245, %v1243
    %v1266 = vpack.c.b16 %v1248, %v1246
    %v1267 = vpack.c.b16 %v1249, %v1247
    %v1268 = vpack.c.b16 %v1252, %v1250
    %v1269 = vpack.c.b16 %v1253, %v1251
    %1286 = vmatprep.subr.bf16.mxu0 %v1255
    %1287 = vmatpush1.bf16.msra.mxu0 %v1254
    %1288 = vmatprep.subr.bf16.mxu0 %v1257
    %1289 = vmatpush1.bf16.msra.mxu0 %v1256
    %1290 = vmatprep.subr.bf16.mxu0 %v1259
    %1291 = vmatpush1.bf16.msra.mxu0 %v1258
    %1292 = vmatprep.subr.bf16.mxu0 %v1261
    %1293 = vmatpush1.bf16.msra.mxu0 %v1260
    %1294 = vmatprep.subr.bf16.mxu0 %v1263
    %1295 = vmatpush1.bf16.msra.mxu0 %v1262
    %1296 = vmatprep.subr.bf16.mxu0 %v1265
    %1297 = vmatpush1.bf16.msra.mxu0 %v1264
    %1298 = vmatprep.subr.bf16.mxu0 %v1267
    %1299 = vmatpush1.bf16.msra.mxu0 %v1266
    %1300 = vmatprep.subr.bf16.mxu0 %v1269
    %1301 = vmatpush1.bf16.msra.mxu0 %v1268
    %1302 = vmatprep.subr.bf16.mxu0 0
    %1303 = vmatpush1.bf16.msra.mxu0 0
    %1304 = vmatprep.subr.bf16.mxu0 0
    %1305 = vmatpush1.bf16.msra.mxu0 0
    %1306 = vmatprep.subr.bf16.mxu0 0
    %1307 = vmatpush1.bf16.msra.mxu0 0
    %1308 = vmatprep.subr.bf16.mxu0 0
    %1309 = vmatpush1.bf16.msra.mxu0 0
    %1310 = vmatprep.subr.bf16.mxu0 0
    %1311 = vmatpush1.bf16.msra.mxu0 0
    %1312 = vmatprep.subr.bf16.mxu0 0
    %1313 = vmatpush1.bf16.msra.mxu0 0
    %1314 = vmatprep.subr.bf16.mxu0 0
    %1315 = vmatpush1.bf16.msra.mxu0 0
    %1316 = vmatprep.subr.bf16.mxu0 0
    %1317 = vmatpush1.bf16.msra.mxu0 0
    %1318 = vmatprep.mubr.bf16.mxu0 0
    %1319 = vmatmul.mubr.bf16.gmra.mrb[0].mxu0 %v1177
    %v1320 = vpop.f32.mrb[0].mxu0
    %v1321 = vadd.f32 %v1199, %v1320
    %v1322 = vpop.f32.mrb[0].mxu0
    %v1323 = vadd.f32 %v1203, %v1322
    %v1324 = vpop.f32.mrb[0].mxu0
    %v1325 = vpop.f32.mrb[0].mxu0
    %1326 = vdwg.mxu0
    %v1327 = vmax.f32 %v1321, 0.0
    %v1328 = vmax.f32 %v1323, 0.0
    %v1329 = vpack.c.bf16 %v1327, %v1327
    %v1330 = vpack.c.bf16 %v1328, %v1328
    %v1331 = vld [vmem:[#allocation10] sm:$0xff]
    %v1332 = vld [vmem:[#allocation10 + $0x8] sm:$0xff]
    %v1333 = vld [vmem:[#allocation10 + $0x10] sm:$0xff]
    %v1334 = vld [vmem:[#allocation10 + $0x18] sm:$0xff]
    %v1335 = vld [vmem:[#allocation10 + $0x20] sm:$0xff]
    %v1336 = vld [vmem:[#allocation10 + $0x28] sm:$0xff]
    %v1337 = vld [vmem:[#allocation10 + $0x30] sm:$0xff]
    %v1338 = vld [vmem:[#allocation10 + $0x38] sm:$0xff]
    %v1339 = vld [vmem:[#allocation10 + $0x40] sm:$0xff]
    %v1340 = vld [vmem:[#allocation10 + $0x48] sm:$0xff]
    %v1341 = vld [vmem:[#allocation10 + $0x50] sm:$0xff]
    %v1342 = vld [vmem:[#allocation10 + $0x58] sm:$0xff]
    %v1343 = vld [vmem:[#allocation10 + $0x60] sm:$0xff]
    %v1344 = vld [vmem:[#allocation10 + $0x68] sm:$0xff]
    %v1345 = vld [vmem:[#allocation10 + $0x70] sm:$0xff]
    %v1346 = vld [vmem:[#allocation10 + $0x78] sm:$0xff]
    %v1347 = vld [vmem:[#allocation10 + $0x80] sm:$0xff]
    %v1348 = vld [vmem:[#allocation10 + $0x88] sm:$0xff]
    %v1349 = vld [vmem:[#allocation10 + $0x90] sm:$0xff]
    %v1350 = vld [vmem:[#allocation10 + $0x98] sm:$0xff]
    %v1351 = vld [vmem:[#allocation10 + $0xa0] sm:$0xff]
    %v1352 = vld [vmem:[#allocation10 + $0xa8] sm:$0xff]
    %v1353 = vld [vmem:[#allocation10 + $0xb0] sm:$0xff]
    %v1354 = vld [vmem:[#allocation10 + $0xb8] sm:$0xff]
    %v1355 = vld [vmem:[#allocation10 + $0xc0] sm:$0xff]
    %v1356 = vld [vmem:[#allocation10 + $0xc8] sm:$0xff]
    %v1357 = vld [vmem:[#allocation10 + $0xd0] sm:$0xff]
    %v1358 = vld [vmem:[#allocation10 + $0xd8] sm:$0xff]
    %v1359 = vld [vmem:[#allocation10 + $0xe0] sm:$0xff]
    %v1360 = vld [vmem:[#allocation10 + $0xe8] sm:$0xff]
    %v1361 = vld [vmem:[#allocation10 + $0xf0] sm:$0xff]
    %v1362 = vld [vmem:[#allocation10 + $0xf8] sm:$0xff]
    %v1363 = vld [vmem:[%s13] sm:$0x3]
    %v1365 = vlaneseq
    %v1366 = vshrl.u32 %v1365, 7
    %v1367 = vsub.s32 0, %v1366
    %v1368 = vrot.slane %v1363, %v1367
    %v1369 = vlaneseq
    %v1370 = vshrl.u32 %v1369, 7
    %v1371 = vsub.s32 1, %v1370
    %v1372 = vrot.slane %v1363, %v1371
    %v1407 = vunpack.c.l.b16 %v1331
    %v1408 = vunpack.c.h.b16 %v1331
    %v1409 = vunpack.c.l.b16 %v1332
    %v1410 = vunpack.c.h.b16 %v1332
    %v1411 = vunpack.c.l.b16 %v1333
    %v1412 = vunpack.c.h.b16 %v1333
    %v1413 = vunpack.c.l.b16 %v1334
    %v1414 = vunpack.c.h.b16 %v1334
    %v1415 = vunpack.c.l.b16 %v1335
    %v1416 = vunpack.c.h.b16 %v1335
    %v1417 = vunpack.c.l.b16 %v1336
    %v1418 = vunpack.c.h.b16 %v1336
    %v1419 = vunpack.c.l.b16 %v1337
    %v1420 = vunpack.c.h.b16 %v1337
    %v1421 = vunpack.c.l.b16 %v1338
    %v1422 = vunpack.c.h.b16 %v1338
    %v1423 = vunpack.c.l.b16 %v1339
    %v1424 = vunpack.c.h.b16 %v1339
    %v1425 = vunpack.c.l.b16 %v1340
    %v1426 = vunpack.c.h.b16 %v1340
    %v1427 = vunpack.c.l.b16 %v1341
    %v1428 = vunpack.c.h.b16 %v1341
    %v1429 = vunpack.c.l.b16 %v1342
    %v1430 = vunpack.c.h.b16 %v1342
    %v1431 = vunpack.c.l.b16 %v1343
    %v1432 = vunpack.c.h.b16 %v1343
    %v1433 = vunpack.c.l.b16 %v1344
    %v1434 = vunpack.c.h.b16 %v1344
    %v1435 = vunpack.c.l.b16 %v1345
    %v1436 = vunpack.c.h.b16 %v1345
    %v1437 = vunpack.c.l.b16 %v1346
    %v1438 = vunpack.c.h.b16 %v1346
    %v1439 = vunpack.c.l.b16 %v1347
    %v1440 = vunpack.c.h.b16 %v1347
    %v1441 = vunpack.c.l.b16 %v1348
    %v1442 = vunpack.c.h.b16 %v1348
    %v1443 = vunpack.c.l.b16 %v1349
    %v1444 = vunpack.c.h.b16 %v1349
    %v1445 = vunpack.c.l.b16 %v1350
    %v1446 = vunpack.c.h.b16 %v1350
    %v1447 = vunpack.c.l.b16 %v1351
    %v1448 = vunpack.c.h.b16 %v1351
    %v1449 = vunpack.c.l.b16 %v1352
    %v1450 = vunpack.c.h.b16 %v1352
    %v1451 = vunpack.c.l.b16 %v1353
    %v1452 = vunpack.c.h.b16 %v1353
    %v1453 = vunpack.c.l.b16 %v1354
    %v1454 = vunpack.c.h.b16 %v1354
    %v1455 = vunpack.c.l.b16 %v1355
    %v1456 = vunpack.c.h.b16 %v1355
    %v1457 = vunpack.c.l.b16 %v1356
    %v1458 = vunpack.c.h.b16 %v1356
    %v1459 = vunpack.c.l.b16 %v1357
    %v1460 = vunpack.c.h.b16 %v1357
    %v1461 = vunpack.c.l.b16 %v1358
    %v1462 = vunpack.c.h.b16 %v1358
    %v1463 = vunpack.c.l.b16 %v1359
    %v1464 = vunpack.c.h.b16 %v1359
    %v1465 = vunpack.c.l.b16 %v1360
    %v1466 = vunpack.c.h.b16 %v1360
    %v1467 = vunpack.c.l.b16 %v1361
    %v1468 = vunpack.c.h.b16 %v1361
    %v1469 = vunpack.c.l.b16 %v1362
    %v1470 = vunpack.c.h.b16 %v1362
    %v1471 = vpack.c.b16 %v1409, %v1407
    %v1472 = vpack.c.b16 %v1410, %v1408
    %v1473 = vpack.c.b16 %v1413, %v1411
    %v1474 = vpack.c.b16 %v1414, %v1412
    %v1475 = vpack.c.b16 %v1417, %v1415
    %v1476 = vpack.c.b16 %v1418, %v1416
    %v1477 = vpack.c.b16 %v1421, %v1419
    %v1478 = vpack.c.b16 %v1422, %v1420
    %v1479 = vpack.c.b16 %v1425, %v1423
    %v1480 = vpack.c.b16 %v1426, %v1424
    %v1481 = vpack.c.b16 %v1429, %v1427
    %v1482 = vpack.c.b16 %v1430, %v1428
    %v1483 = vpack.c.b16 %v1433, %v1431
    %v1484 = vpack.c.b16 %v1434, %v1432
    %v1485 = vpack.c.b16 %v1437, %v1435
    %v1486 = vpack.c.b16 %v1438, %v1436
    %v1487 = vpack.c.b16 %v1441, %v1439
    %v1488 = vpack.c.b16 %v1442, %v1440
    %v1489 = vpack.c.b16 %v1445, %v1443
    %v1490 = vpack.c.b16 %v1446, %v1444
    %v1491 = vpack.c.b16 %v1449, %v1447
    %v1492 = vpack.c.b16 %v1450, %v1448
    %v1493 = vpack.c.b16 %v1453, %v1451
    %v1494 = vpack.c.b16 %v1454, %v1452
    %v1495 = vpack.c.b16 %v1457, %v1455
    %v1496 = vpack.c.b16 %v1458, %v1456
    %v1497 = vpack.c.b16 %v1461, %v1459
    %v1498 = vpack.c.b16 %v1462, %v1460
    %v1499 = vpack.c.b16 %v1465, %v1463
    %v1500 = vpack.c.b16 %v1466, %v1464
    %v1501 = vpack.c.b16 %v1469, %v1467
    %v1502 = vpack.c.b16 %v1470, %v1468
    %1535 = vmatprep.subr.bf16.mxu0 %v1472
    %1536 = vmatpush1.bf16.msra.mxu0 %v1471
    %1537 = vmatprep.subr.bf16.mxu0 %v1474
    %1538 = vmatpush1.bf16.msra.mxu0 %v1473
    %1539 = vmatprep.subr.bf16.mxu0 %v1476
    %1540 = vmatpush1.bf16.msra.mxu0 %v1475
    %1541 = vmatprep.subr.bf16.mxu0 %v1478
    %1542 = vmatpush1.bf16.msra.mxu0 %v1477
    %1543 = vmatprep.subr.bf16.mxu0 %v1480
    %1544 = vmatpush1.bf16.msra.mxu0 %v1479
    %1545 = vmatprep.subr.bf16.mxu0 %v1482
    %1546 = vmatpush1.bf16.msra.mxu0 %v1481
    %1547 = vmatprep.subr.bf16.mxu0 %v1484
    %1548 = vmatpush1.bf16.msra.mxu0 %v1483
    %1549 = vmatprep.subr.bf16.mxu0 %v1486
    %1550 = vmatpush1.bf16.msra.mxu0 %v1485
    %1551 = vmatprep.subr.bf16.mxu0 %v1488
    %1552 = vmatpush1.bf16.msra.mxu0 %v1487
    %1553 = vmatprep.subr.bf16.mxu0 %v1490
    %1554 = vmatpush1.bf16.msra.mxu0 %v1489
    %1555 = vmatprep.subr.bf16.mxu0 %v1492
    %1556 = vmatpush1.bf16.msra.mxu0 %v1491
    %1557 = vmatprep.subr.bf16.mxu0 %v1494
    %1558 = vmatpush1.bf16.msra.mxu0 %v1493
    %1559 = vmatprep.subr.bf16.mxu0 %v1496
    %1560 = vmatpush1.bf16.msra.mxu0 %v1495
    %1561 = vmatprep.subr.bf16.mxu0 %v1498
    %1562 = vmatpush1.bf16.msra.mxu0 %v1497
    %1563 = vmatprep.subr.bf16.mxu0 %v1500
    %1564 = vmatpush1.bf16.msra.mxu0 %v1499
    %1565 = vmatprep.subr.bf16.mxu0 %v1502
    %1566 = vmatpush1.bf16.msra.mxu0 %v1501
    %1567 = vmatprep.mubr.bf16.mxu0 %v1330
    %1568 = vmatmul.mubr.bf16.gmra.mrb[0].mxu0 %v1329
    %v1569 = vpop.f32.mrb[0].mxu0
    %v1570 = vadd.f32 %v1368, %v1569
    %v1571 = vpop.f32.mrb[0].mxu0
    %v1572 = vadd.f32 %v1372, %v1571
    %v1573 = vpop.f32.mrb[0].mxu0
    %v1574 = vpop.f32.mrb[0].mxu0
    %1575 = vdwg.mxu0
    %v1576 = vmax.f32 %v1570, 0.0
    %v1577 = vmax.f32 %v1572, 0.0
    %v1578 = vpack.c.bf16 %v1576, %v1576
    %v1579 = vpack.c.bf16 %v1577, %v1577
    %v1580 = vld [vmem:[#allocation12] sm:$0xff]
    %v1581 = vld [vmem:[#allocation12 + $0x8] sm:$0xff]
    %v1582 = vld [vmem:[#allocation12 + $0x10] sm:$0xff]
    %v1583 = vld [vmem:[#allocation12 + $0x18] sm:$0xff]
    %v1584 = vld [vmem:[#allocation12 + $0x20] sm:$0xff]
    %v1585 = vld [vmem:[#allocation12 + $0x28] sm:$0xff]
    %v1586 = vld [vmem:[#allocation12 + $0x30] sm:$0xff]
    %v1587 = vld [vmem:[#allocation12 + $0x38] sm:$0xff]
    %v1588 = vld [vmem:[#allocation12 + $0x40] sm:$0xff]
    %v1589 = vld [vmem:[#allocation12 + $0x48] sm:$0xff]
    %v1590 = vld [vmem:[#allocation12 + $0x50] sm:$0xff]
    %v1591 = vld [vmem:[#allocation12 + $0x58] sm:$0xff]
    %v1592 = vld [vmem:[#allocation12 + $0x60] sm:$0xff]
    %v1593 = vld [vmem:[#allocation12 + $0x68] sm:$0xff]
    %v1594 = vld [vmem:[#allocation12 + $0x70] sm:$0xff]
    %v1595 = vld [vmem:[#allocation12 + $0x78] sm:$0xff]
    %v1596 = vld [vmem:[#allocation12 + $0x80] sm:$0xff]
    %v1597 = vld [vmem:[#allocation12 + $0x88] sm:$0xff]
    %v1598 = vld [vmem:[#allocation12 + $0x90] sm:$0xff]
    %v1599 = vld [vmem:[#allocation12 + $0x98] sm:$0xff]
    %v1600 = vld [vmem:[#allocation12 + $0xa0] sm:$0xff]
    %v1601 = vld [vmem:[#allocation12 + $0xa8] sm:$0xff]
    %v1602 = vld [vmem:[#allocation12 + $0xb0] sm:$0xff]
    %v1603 = vld [vmem:[#allocation12 + $0xb8] sm:$0xff]
    %v1604 = vld [vmem:[#allocation12 + $0xc0] sm:$0xff]
    %v1605 = vld [vmem:[#allocation12 + $0xc8] sm:$0xff]
    %v1606 = vld [vmem:[#allocation12 + $0xd0] sm:$0xff]
    %v1607 = vld [vmem:[#allocation12 + $0xd8] sm:$0xff]
    %v1608 = vld [vmem:[#allocation12 + $0xe0] sm:$0xff]
    %v1609 = vld [vmem:[#allocation12 + $0xe8] sm:$0xff]
    %v1610 = vld [vmem:[#allocation12 + $0xf0] sm:$0xff]
    %v1611 = vld [vmem:[#allocation12 + $0xf8] sm:$0xff]
    %v1612 = vld [vmem:[%s15] sm:$0x3]
    %v1614 = vlaneseq
    %v1615 = vshrl.u32 %v1614, 7
    %v1616 = vsub.s32 0, %v1615
    %v1617 = vrot.slane %v1612, %v1616
    %v1618 = vlaneseq
    %v1619 = vshrl.u32 %v1618, 7
    %v1620 = vsub.s32 1, %v1619
    %v1621 = vrot.slane %v1612, %v1620
    %v1656 = vunpack.c.l.b16 %v1580
    %v1657 = vunpack.c.h.b16 %v1580
    %v1658 = vunpack.c.l.b16 %v1581
    %v1659 = vunpack.c.h.b16 %v1581
    %v1660 = vunpack.c.l.b16 %v1582
    %v1661 = vunpack.c.h.b16 %v1582
    %v1662 = vunpack.c.l.b16 %v1583
    %v1663 = vunpack.c.h.b16 %v1583
    %v1664 = vunpack.c.l.b16 %v1584
    %v1665 = vunpack.c.h.b16 %v1584
    %v1666 = vunpack.c.l.b16 %v1585
    %v1667 = vunpack.c.h.b16 %v1585
    %v1668 = vunpack.c.l.b16 %v1586
    %v1669 = vunpack.c.h.b16 %v1586
    %v1670 = vunpack.c.l.b16 %v1587
    %v1671 = vunpack.c.h.b16 %v1587
    %v1672 = vunpack.c.l.b16 %v1588
    %v1673 = vunpack.c.h.b16 %v1588
    %v1674 = vunpack.c.l.b16 %v1589
    %v1675 = vunpack.c.h.b16 %v1589
    %v1676 = vunpack.c.l.b16 %v1590
    %v1677 = vunpack.c.h.b16 %v1590
    %v1678 = vunpack.c.l.b16 %v1591
    %v1679 = vunpack.c.h.b16 %v1591
    %v1680 = vunpack.c.l.b16 %v1592
    %v1681 = vunpack.c.h.b16 %v1592
    %v1682 = vunpack.c.l.b16 %v1593
    %v1683 = vunpack.c.h.b16 %v1593
    %v1684 = vunpack.c.l.b16 %v1594
    %v1685 = vunpack.c.h.b16 %v1594
    %v1686 = vunpack.c.l.b16 %v1595
    %v1687 = vunpack.c.h.b16 %v1595
    %v1688 = vunpack.c.l.b16 %v1596
    %v1689 = vunpack.c.h.b16 %v1596
    %v1690 = vunpack.c.l.b16 %v1597
    %v1691 = vunpack.c.h.b16 %v1597
    %v1692 = vunpack.c.l.b16 %v1598
    %v1693 = vunpack.c.h.b16 %v1598
    %v1694 = vunpack.c.l.b16 %v1599
    %v1695 = vunpack.c.h.b16 %v1599
    %v1696 = vunpack.c.l.b16 %v1600
    %v1697 = vunpack.c.h.b16 %v1600
    %v1698 = vunpack.c.l.b16 %v1601
    %v1699 = vunpack.c.h.b16 %v1601
    %v1700 = vunpack.c.l.b16 %v1602
    %v1701 = vunpack.c.h.b16 %v1602
    %v1702 = vunpack.c.l.b16 %v1603
    %v1703 = vunpack.c.h.b16 %v1603
    %v1704 = vunpack.c.l.b16 %v1604
    %v1705 = vunpack.c.h.b16 %v1604
    %v1706 = vunpack.c.l.b16 %v1605
    %v1707 = vunpack.c.h.b16 %v1605
    %v1708 = vunpack.c.l.b16 %v1606
    %v1709 = vunpack.c.h.b16 %v1606
    %v1710 = vunpack.c.l.b16 %v1607
    %v1711 = vunpack.c.h.b16 %v1607
    %v1712 = vunpack.c.l.b16 %v1608
    %v1713 = vunpack.c.h.b16 %v1608
    %v1714 = vunpack.c.l.b16 %v1609
    %v1715 = vunpack.c.h.b16 %v1609
    %v1716 = vunpack.c.l.b16 %v1610
    %v1717 = vunpack.c.h.b16 %v1610
    %v1718 = vunpack.c.l.b16 %v1611
    %v1719 = vunpack.c.h.b16 %v1611
    %v1720 = vpack.c.b16 %v1658, %v1656
    %v1721 = vpack.c.b16 %v1659, %v1657
    %v1722 = vpack.c.b16 %v1662, %v1660
    %v1723 = vpack.c.b16 %v1663, %v1661
    %v1724 = vpack.c.b16 %v1666, %v1664
    %v1725 = vpack.c.b16 %v1667, %v1665
    %v1726 = vpack.c.b16 %v1670, %v1668
    %v1727 = vpack.c.b16 %v1671, %v1669
    %v1728 = vpack.c.b16 %v1674, %v1672
    %v1729 = vpack.c.b16 %v1675, %v1673
    %v1730 = vpack.c.b16 %v1678, %v1676
    %v1731 = vpack.c.b16 %v1679, %v1677
    %v1732 = vpack.c.b16 %v1682, %v1680
    %v1733 = vpack.c.b16 %v1683, %v1681
    %v1734 = vpack.c.b16 %v1686, %v1684
    %v1735 = vpack.c.b16 %v1687, %v1685
    %v1736 = vpack.c.b16 %v1690, %v1688
    %v1737 = vpack.c.b16 %v1691, %v1689
    %v1738 = vpack.c.b16 %v1694, %v1692
    %v1739 = vpack.c.b16 %v1695, %v1693
    %v1740 = vpack.c.b16 %v1698, %v1696
    %v1741 = vpack.c.b16 %v1699, %v1697
    %v1742 = vpack.c.b16 %v1702, %v1700
    %v1743 = vpack.c.b16 %v1703, %v1701
    %v1744 = vpack.c.b16 %v1706, %v1704
    %v1745 = vpack.c.b16 %v1707, %v1705
    %v1746 = vpack.c.b16 %v1710, %v1708
    %v1747 = vpack.c.b16 %v1711, %v1709
    %v1748 = vpack.c.b16 %v1714, %v1712
    %v1749 = vpack.c.b16 %v1715, %v1713
    %v1750 = vpack.c.b16 %v1718, %v1716
    %v1751 = vpack.c.b16 %v1719, %v1717
    %1784 = vmatprep.subr.bf16.mxu0 %v1721
    %1785 = vmatpush1.bf16.msra.mxu0 %v1720
    %1786 = vmatprep.subr.bf16.mxu0 %v1723
    %1787 = vmatpush1.bf16.msra.mxu0 %v1722
    %1788 = vmatprep.subr.bf16.mxu0 %v1725
    %1789 = vmatpush1.bf16.msra.mxu0 %v1724
    %1790 = vmatprep.subr.bf16.mxu0 %v1727
    %1791 = vmatpush1.bf16.msra.mxu0 %v1726
    %1792 = vmatprep.subr.bf16.mxu0 %v1729
    %1793 = vmatpush1.bf16.msra.mxu0 %v1728
    %1794 = vmatprep.subr.bf16.mxu0 %v1731
    %1795 = vmatpush1.bf16.msra.mxu0 %v1730
    %1796 = vmatprep.subr.bf16.mxu0 %v1733
    %1797 = vmatpush1.bf16.msra.mxu0 %v1732
    %1798 = vmatprep.subr.bf16.mxu0 %v1735
    %1799 = vmatpush1.bf16.msra.mxu0 %v1734
    %1800 = vmatprep.subr.bf16.mxu0 %v1737
    %1801 = vmatpush1.bf16.msra.mxu0 %v1736
    %1802 = vmatprep.subr.bf16.mxu0 %v1739
    %1803 = vmatpush1.bf16.msra.mxu0 %v1738
    %1804 = vmatprep.subr.bf16.mxu0 %v1741
    %1805 = vmatpush1.bf16.msra.mxu0 %v1740
    %1806 = vmatprep.subr.bf16.mxu0 %v1743
    %1807 = vmatpush1.bf16.msra.mxu0 %v1742
    %1808 = vmatprep.subr.bf16.mxu0 %v1745
    %1809 = vmatpush1.bf16.msra.mxu0 %v1744
    %1810 = vmatprep.subr.bf16.mxu0 %v1747
    %1811 = vmatpush1.bf16.msra.mxu0 %v1746
    %1812 = vmatprep.subr.bf16.mxu0 %v1749
    %1813 = vmatpush1.bf16.msra.mxu0 %v1748
    %1814 = vmatprep.subr.bf16.mxu0 %v1751
    %1815 = vmatpush1.bf16.msra.mxu0 %v1750
    %1816 = vmatprep.mubr.bf16.mxu0 %v1579
    %1817 = vmatmul.mubr.bf16.gmra.mrb[0].mxu0 %v1578
    %v1818 = vpop.f32.mrb[0].mxu0
    %v1819 = vadd.f32 %v1617, %v1818
    %v1820 = vpop.f32.mrb[0].mxu0
    %v1821 = vadd.f32 %v1621, %v1820
    %v1822 = vpop.f32.mrb[0].mxu0
    %v1823 = vpop.f32.mrb[0].mxu0
    %1824 = vdwg.mxu0
    %v1825 = vmax.f32 %v1819, 0.0
    %v1826 = vmax.f32 %v1821, 0.0
    %v1827 = vpack.c.bf16 %v1825, %v1825
    %v1828 = vpack.c.bf16 %v1826, %v1826
    %v1829 = vld [vmem:[#allocation13] sm:$0xff]
    %v1830 = vld [vmem:[#allocation13 + $0x8] sm:$0xff]
    %v1831 = vld [vmem:[#allocation13 + $0x10] sm:$0xff]
    %v1832 = vld [vmem:[#allocation13 + $0x18] sm:$0xff]
    %v1833 = vld [vmem:[#allocation13 + $0x20] sm:$0xff]
    %v1834 = vld [vmem:[#allocation13 + $0x28] sm:$0xff]
    %v1835 = vld [vmem:[#allocation13 + $0x30] sm:$0xff]
    %v1836 = vld [vmem:[#allocation13 + $0x38] sm:$0xff]
    %v1837 = vld [vmem:[#allocation13 + $0x40] sm:$0xff]
    %v1838 = vld [vmem:[#allocation13 + $0x48] sm:$0xff]
    %v1839 = vld [vmem:[#allocation13 + $0x50] sm:$0xff]
    %v1840 = vld [vmem:[#allocation13 + $0x58] sm:$0xff]
    %v1841 = vld [vmem:[#allocation13 + $0x60] sm:$0xff]
    %v1842 = vld [vmem:[#allocation13 + $0x68] sm:$0xff]
    %v1843 = vld [vmem:[#allocation13 + $0x70] sm:$0xff]
    %v1844 = vld [vmem:[#allocation13 + $0x78] sm:$0xff]
    %v1845 = vld [vmem:[#allocation13 + $0x80] sm:$0xff]
    %v1846 = vld [vmem:[#allocation13 + $0x88] sm:$0xff]
    %v1847 = vld [vmem:[#allocation13 + $0x90] sm:$0xff]
    %v1848 = vld [vmem:[#allocation13 + $0x98] sm:$0xff]
    %v1849 = vld [vmem:[#allocation13 + $0xa0] sm:$0xff]
    %v1850 = vld [vmem:[#allocation13 + $0xa8] sm:$0xff]
    %v1851 = vld [vmem:[#allocation13 + $0xb0] sm:$0xff]
    %v1852 = vld [vmem:[#allocation13 + $0xb8] sm:$0xff]
    %v1853 = vld [vmem:[#allocation13 + $0xc0] sm:$0xff]
    %v1854 = vld [vmem:[#allocation13 + $0xc8] sm:$0xff]
    %v1855 = vld [vmem:[#allocation13 + $0xd0] sm:$0xff]
    %v1856 = vld [vmem:[#allocation13 + $0xd8] sm:$0xff]
    %v1857 = vld [vmem:[#allocation13 + $0xe0] sm:$0xff]
    %v1858 = vld [vmem:[#allocation13 + $0xe8] sm:$0xff]
    %v1859 = vld [vmem:[#allocation13 + $0xf0] sm:$0xff]
    %v1860 = vld [vmem:[#allocation13 + $0xf8] sm:$0xff]
    %v1861 = vld [vmem:[%s17] sm:$0x3]
    %v1863 = vlaneseq
    %v1864 = vshrl.u32 %v1863, 7
    %v1865 = vsub.s32 0, %v1864
    %v1866 = vrot.slane %v1861, %v1865
    %v1867 = vlaneseq
    %v1868 = vshrl.u32 %v1867, 7
    %v1869 = vsub.s32 1, %v1868
    %v1870 = vrot.slane %v1861, %v1869
    %v1905 = vunpack.c.l.b16 %v1829
    %v1906 = vunpack.c.h.b16 %v1829
    %v1907 = vunpack.c.l.b16 %v1830
    %v1908 = vunpack.c.h.b16 %v1830
    %v1909 = vunpack.c.l.b16 %v1831
    %v1910 = vunpack.c.h.b16 %v1831
    %v1911 = vunpack.c.l.b16 %v1832
    %v1912 = vunpack.c.h.b16 %v1832
    %v1913 = vunpack.c.l.b16 %v1833
    %v1914 = vunpack.c.h.b16 %v1833
    %v1915 = vunpack.c.l.b16 %v1834
    %v1916 = vunpack.c.h.b16 %v1834
    %v1917 = vunpack.c.l.b16 %v1835
    %v1918 = vunpack.c.h.b16 %v1835
    %v1919 = vunpack.c.l.b16 %v1836
    %v1920 = vunpack.c.h.b16 %v1836
    %v1921 = vunpack.c.l.b16 %v1837
    %v1922 = vunpack.c.h.b16 %v1837
    %v1923 = vunpack.c.l.b16 %v1838
    %v1924 = vunpack.c.h.b16 %v1838
    %v1925 = vunpack.c.l.b16 %v1839
    %v1926 = vunpack.c.h.b16 %v1839
    %v1927 = vunpack.c.l.b16 %v1840
    %v1928 = vunpack.c.h.b16 %v1840
    %v1929 = vunpack.c.l.b16 %v1841
    %v1930 = vunpack.c.h.b16 %v1841
    %v1931 = vunpack.c.l.b16 %v1842
    %v1932 = vunpack.c.h.b16 %v1842
    %v1933 = vunpack.c.l.b16 %v1843
    %v1934 = vunpack.c.h.b16 %v1843
    %v1935 = vunpack.c.l.b16 %v1844
    %v1936 = vunpack.c.h.b16 %v1844
    %v1937 = vunpack.c.l.b16 %v1845
    %v1938 = vunpack.c.h.b16 %v1845
    %v1939 = vunpack.c.l.b16 %v1846
    %v1940 = vunpack.c.h.b16 %v1846
    %v1941 = vunpack.c.l.b16 %v1847
    %v1942 = vunpack.c.h.b16 %v1847
    %v1943 = vunpack.c.l.b16 %v1848
    %v1944 = vunpack.c.h.b16 %v1848
    %v1945 = vunpack.c.l.b16 %v1849
    %v1946 = vunpack.c.h.b16 %v1849
    %v1947 = vunpack.c.l.b16 %v1850
    %v1948 = vunpack.c.h.b16 %v1850
    %v1949 = vunpack.c.l.b16 %v1851
    %v1950 = vunpack.c.h.b16 %v1851
    %v1951 = vunpack.c.l.b16 %v1852
    %v1952 = vunpack.c.h.b16 %v1852
    %v1953 = vunpack.c.l.b16 %v1853
    %v1954 = vunpack.c.h.b16 %v1853
    %v1955 = vunpack.c.l.b16 %v1854
    %v1956 = vunpack.c.h.b16 %v1854
    %v1957 = vunpack.c.l.b16 %v1855
    %v1958 = vunpack.c.h.b16 %v1855
    %v1959 = vunpack.c.l.b16 %v1856
    %v1960 = vunpack.c.h.b16 %v1856
    %v1961 = vunpack.c.l.b16 %v1857
    %v1962 = vunpack.c.h.b16 %v1857
    %v1963 = vunpack.c.l.b16 %v1858
    %v1964 = vunpack.c.h.b16 %v1858
    %v1965 = vunpack.c.l.b16 %v1859
    %v1966 = vunpack.c.h.b16 %v1859
    %v1967 = vunpack.c.l.b16 %v1860
    %v1968 = vunpack.c.h.b16 %v1860
    %v1969 = vpack.c.b16 %v1907, %v1905
    %v1970 = vpack.c.b16 %v1908, %v1906
    %v1971 = vpack.c.b16 %v1911, %v1909
    %v1972 = vpack.c.b16 %v1912, %v1910
    %v1973 = vpack.c.b16 %v1915, %v1913
    %v1974 = vpack.c.b16 %v1916, %v1914
    %v1975 = vpack.c.b16 %v1919, %v1917
    %v1976 = vpack.c.b16 %v1920, %v1918
    %v1977 = vpack.c.b16 %v1923, %v1921
    %v1978 = vpack.c.b16 %v1924, %v1922
    %v1979 = vpack.c.b16 %v1927, %v1925
    %v1980 = vpack.c.b16 %v1928, %v1926
    %v1981 = vpack.c.b16 %v1931, %v1929
    %v1982 = vpack.c.b16 %v1932, %v1930
    %v1983 = vpack.c.b16 %v1935, %v1933
    %v1984 = vpack.c.b16 %v1936, %v1934
    %v1985 = vpack.c.b16 %v1939, %v1937
    %v1986 = vpack.c.b16 %v1940, %v1938
    %v1987 = vpack.c.b16 %v1943, %v1941
    %v1988 = vpack.c.b16 %v1944, %v1942
    %v1989 = vpack.c.b16 %v1947, %v1945
    %v1990 = vpack.c.b16 %v1948, %v1946
    %v1991 = vpack.c.b16 %v1951, %v1949
    %v1992 = vpack.c.b16 %v1952, %v1950
    %v1993 = vpack.c.b16 %v1955, %v1953
    %v1994 = vpack.c.b16 %v1956, %v1954
    %v1995 = vpack.c.b16 %v1959, %v1957
    %v1996 = vpack.c.b16 %v1960, %v1958
    %v1997 = vpack.c.b16 %v1963, %v1961
    %v1998 = vpack.c.b16 %v1964, %v1962
    %v1999 = vpack.c.b16 %v1967, %v1965
    %v2000 = vpack.c.b16 %v1968, %v1966
    %2033 = vmatprep.subr.bf16.mxu0 %v1970
    %2034 = vmatpush1.bf16.msra.mxu0 %v1969
    %2035 = vmatprep.subr.bf16.mxu0 %v1972
    %2036 = vmatpush1.bf16.msra.mxu0 %v1971
    %2037 = vmatprep.subr.bf16.mxu0 %v1974
    %2038 = vmatpush1.bf16.msra.mxu0 %v1973
    %2039 = vmatprep.subr.bf16.mxu0 %v1976
    %2040 = vmatpush1.bf16.msra.mxu0 %v1975
    %2041 = vmatprep.subr.bf16.mxu0 %v1978
    %2042 = vmatpush1.bf16.msra.mxu0 %v1977
    %2043 = vmatprep.subr.bf16.mxu0 %v1980
    %2044 = vmatpush1.bf16.msra.mxu0 %v1979
    %2045 = vmatprep.subr.bf16.mxu0 %v1982
    %2046 = vmatpush1.bf16.msra.mxu0 %v1981
    %2047 = vmatprep.subr.bf16.mxu0 %v1984
    %2048 = vmatpush1.bf16.msra.mxu0 %v1983
    %2049 = vmatprep.subr.bf16.mxu0 %v1986
    %2050 = vmatpush1.bf16.msra.mxu0 %v1985
    %2051 = vmatprep.subr.bf16.mxu0 %v1988
    %2052 = vmatpush1.bf16.msra.mxu0 %v1987
    %2053 = vmatprep.subr.bf16.mxu0 %v1990
    %2054 = vmatpush1.bf16.msra.mxu0 %v1989
    %2055 = vmatprep.subr.bf16.mxu0 %v1992
    %2056 = vmatpush1.bf16.msra.mxu0 %v1991
    %2057 = vmatprep.subr.bf16.mxu0 %v1994
    %2058 = vmatpush1.bf16.msra.mxu0 %v1993
    %2059 = vmatprep.subr.bf16.mxu0 %v1996
    %2060 = vmatpush1.bf16.msra.mxu0 %v1995
    %2061 = vmatprep.subr.bf16.mxu0 %v1998
    %2062 = vmatpush1.bf16.msra.mxu0 %v1997
    %2063 = vmatprep.subr.bf16.mxu0 %v2000
    %2064 = vmatpush1.bf16.msra.mxu0 %v1999
    %2065 = vmatprep.mubr.bf16.mxu0 %v1828
    %2066 = vmatmul.mubr.bf16.gmra.mrb[0].mxu0 %v1827
    %v2067 = vpop.f32.mrb[0].mxu0
    %v2068 = vadd.f32 %v1866, %v2067
    %v2069 = vpop.f32.mrb[0].mxu0
    %v2070 = vadd.f32 %v1870, %v2069
    %v2071 = vpop.f32.mrb[0].mxu0
    %v2072 = vpop.f32.mrb[0].mxu0
    %2073 = vdwg.mxu0
    %v2074 = vxor.u32 %v2068, 2147483648
    %v2075 = vxor.u32 %v2070, 2147483648
    %v2076 = vmul.f32 %v2074, 1.442695
    %v2077 = vpow.pop %v2076
    %v2078 = vmul.f32 %v2075, 1.442695
    %v2079 = vpow.pop %v2078
    %v2080 = vadd.f32 %v2077, 1.0
    %v2081 = vadd.f32 %v2079, 1.0
    %v2082 = vrcp.pop %v2080
    %v2083 = vmul.f32 1.0, %v2082
    %v2084 = vrcp.pop %v2081
    %v2085 = vmul.f32 1.0, %v2084
    %v2086 = vpack.c.bf16 %v2083, %v2083
    %v2087 = vpack.c.bf16 %v2085, %v2085
    %v2090 = vunpack.c.l.b16 %v2086
    %v2091 = vunpack.c.l.b16 %v2087
    %v2092 = vpack.c.b16 %v2091, %v2090
    %2094 = vst [vmem:[%s18] sm:$0xff] %v2092
    %2095 = vst [vmem:[%s19] sm:$0xff] %v1165
    %2096 = vst [vmem:[%s19 + $0x8] sm:$0xff] %v1167
    // Predicated region
    $region106: #{vae_forward.1} parent=1 // pred_check
      _
    $region107: #{vae_forward.1} parent=1 // pred_check_branch
      %2098 = sbr.rel (0) target = $region109
    $region108: #{vae_forward.1} parent=1 // pred_region
      _
    $region109: #{vae_forward.1} parent=1 // pred_fallthru
      _
    // Predicated region
    $region110: #{vae_forward.1} parent=1 // pred_check
      _
    $region111: #{vae_forward.1} parent=1 // pred_check_branch
      %2100 = sbr.rel (0) target = $region113
    $region112: #{vae_forward.1} parent=1 // pred_region
      _
    $region113: #{vae_forward.1} parent=1 // pred_fallthru
      _
    // Predicated region
    $region114: #{vae_forward.1} parent=1 // pred_check
      _
    $region115: #{vae_forward.1} parent=1 // pred_check_branch
      %2102 = sbr.rel (0) target = $region117
    $region116: #{vae_forward.1} parent=1 // pred_region
      _
    $region117: #{vae_forward.1} parent=1 // pred_fallthru
      _
    // Predicated region
    $region118: #{vae_forward.1} parent=1 // pred_check
      _
    $region119: #{vae_forward.1} parent=1 // pred_check_branch
      %2104 = sbr.rel (0) target = $region121
    $region120: #{vae_forward.1} parent=1 // pred_region
      _
    $region121: #{vae_forward.1} parent=1 // pred_fallthru
      _
    %2105 = vsyncpa [#allocation3], 1
    %2106 = vsyncpa [#allocation5], 1
    %2107 = vsyncpa [#allocation8], 1
    %2108 = vsyncpa [#allocation11], 1
    %2109 = vsyncpa [#allocation14], 1

// kernel: vae_forward.1
$region0: #{vae_forward.1}
  #allocation0 [shape = 'u32[]', space=smem, size = 0x4, offset = 0x4, fixed_abs, tag = 'smem constant byte address 0x4 - core index']
  #allocation1 [shape = 'u32[144,128]{1,0:T(1,128)}', space=vmem, size = 0x12000, scoped, tag = 'internal scratch']
  %s0 = inlined_call_operand.vmem [shape: bf16[8,256], index: 0, kind: input, shape index: {}]
  %s1 = inlined_call_operand.vmem [shape: f32[8,128], index: 1, kind: input, shape index: {}]
  %s2 = inlined_call_operand.hbm [shape: bf16[256,256], index: 2, kind: input, shape index: {}]
  %s3 = inlined_call_operand.vmem [shape: f32[1,256], index: 3, kind: input, shape index: {}]
  %s4 = inlined_call_operand.hbm [shape: bf16[256,256], index: 4, kind: input, shape index: {}]
  %s5 = inlined_call_operand.vmem [shape: f32[1,256], index: 5, kind: input, shape index: {}]
  %s6 = inlined_call_operand.hbm [shape: bf16[256,256], index: 6, kind: input, shape index: {}]
  %s7 = inlined_call_operand.vmem [shape: f32[1,256], index: 7, kind: input, shape index: {}]
  %s8 = inlined_call_operand.hbm [shape: bf16[256,256], index: 8, kind: input, shape index: {}]
  %s9 = inlined_call_operand.vmem [shape: f32[1,256], index: 9, kind: input, shape index: {}]
  %s10 = inlined_call_operand.hbm [shape: bf16[128,256], index: 10, kind: input, shape index: {}]
  %s11 = inlined_call_operand.vmem [shape: f32[1,256], index: 11, kind: input, shape index: {}]
  %s12 = inlined_call_operand.hbm [shape: bf16[256,256], index: 12, kind: input, shape index: {}]
  %s13 = inlined_call_operand.vmem [shape: f32[1,256], index: 13, kind: input, shape index: {}]
  %s14 = inlined_call_operand.hbm [shape: bf16[256,256], index: 14, kind: input, shape index: {}]
  %s15 = inlined_call_operand.vmem [shape: f32[1,256], index: 15, kind: input, shape index: {}]
  %s16 = inlined_call_operand.hbm [shape: bf16[256,256], index: 16, kind: input, shape index: {}]
  %s17 = inlined_call_operand.vmem [shape: f32[1,256], index: 17, kind: input, shape index: {}]
  %s18 = inlined_call_operand.vmem [shape: bf16[8,256], index: 18, kind: output, shape index: {0}]
  %s19 = inlined_call_operand.vmem [shape: f32[8,256], index: 19, kind: output, shape index: {1}]
  %20 = xla_tuple %s18, %s19
  %s21 = sld [smem:[#allocation0]]
  $region122: #{vae_forward.1} parent=0
    _
  %s23 = ssub.s32 1, %s21
  %s24 = scalar_select 0, %s23, %s21
  $region1: #{vae_forward.1} parent=0
    #allocation2 [shape = 'u8[131072]{0}', space=vmem, size = 0x20000, scoped, tag = 'input window, operand 2, single buffered']
    #allocation3 [shape = 's32[1]{0}', space=sflag, size = 0x4, scoped, tag = 'scoped memory for vae_forward.1']
    #allocation4 [shape = 'u8[131072]{0}', space=vmem, size = 0x20000, scoped, tag = 'input window, operand 4, single buffered']
    #allocation5 [shape = 's32[1]{0}', space=sflag, size = 0x4, scoped, tag = 'scoped memory for vae_forward.1']
    #allocation6 [shape = 'u8[131072]{0}', space=vmem, size = 0x20000, scoped, tag = 'input window, operand 6, single buffered']
    #allocation7 [shape = 'u8[131072]{0}', space=vmem, size = 0x20000, scoped, tag = 'input window, operand 8, single buffered']
    #allocation8 [shape = 's32[1]{0}', space=sflag, size = 0x4, scoped, tag = 'scoped memory for vae_forward.1']
    #allocation9 [shape = 'u8[65536]{0}', space=vmem, size = 0x10000, scoped, tag = 'input window, operand 10, single buffered']
    #allocation10 [shape = 'u8[131072]{0}', space=vmem, size = 0x20000, scoped, tag = 'input window, operand 12, single buffered']
    #allocation11 [shape = 's32[1]{0}', space=sflag, size = 0x4, scoped, tag = 'scoped memory for vae_forward.1']
    #allocation12 [shape = 'u8[131072]{0}', space=vmem, size = 0x20000, scoped, tag = 'input window, operand 14, single buffered']
    #allocation13 [shape = 'u8[131072]{0}', space=vmem, size = 0x20000, scoped, tag = 'input window, operand 16, single buffered']
    #allocation14 [shape = 's32[1]{0}', space=sflag, size = 0x4, scoped, tag = 'scoped memory for vae_forward.1']
    %25 = vsyncpa [#allocation3], 0
    %26 = vsyncpa [#allocation5], 0
    %27 = vsyncpa [#allocation8], 0
    %28 = vsyncpa [#allocation11], 0
    %29 = vsyncpa [#allocation14], 0
    // Predicated region
    $region2: #{vae_forward.1} parent=1 // pred_check
      _
    $region3: #{vae_forward.1} parent=1 // pred_check_branch
      %31 = sbr.rel (0) target = $region5
    $region4: #{vae_forward.1} parent=1 // pred_region
      _
    $region5: #{vae_forward.1} parent=1 // pred_fallthru
      _
    // Predicated region
    $region6: #{vae_forward.1} parent=1 // pred_check
      _
    $region7: #{vae_forward.1} parent=1 // pred_check_branch
      %33 = sbr.rel (0) target = $region9
    $region8: #{vae_forward.1} parent=1 // pred_region
      _
    $region9: #{vae_forward.1} parent=1 // pred_fallthru
      _
    // Predicated region
    $region10: #{vae_forward.1} parent=1 // pred_check
      _
    $region11: #{vae_forward.1} parent=1 // pred_check_branch
      %35 = sbr.rel (0) target = $region13
    $region12: #{vae_forward.1} parent=1 // pred_region
      %s37 = ssub.s32 4096, 4096
      %38 = vsyncadd [#allocation3], %s37
      %s39 = sshll.u32 [#allocation2], 4
      %s40 = int_to_ptr.vmem [resolvable:$true] %s39
      %45 = dma.hbm_to_vmem [thread:$0]  %s2, 4096, %s40, [#allocation3], 128, 128, 8
    $region13: #{vae_forward.1} parent=1 // pred_fallthru
      _
    // Predicated region
    $region14: #{vae_forward.1} parent=1 // pred_check
      _
    $region15: #{vae_forward.1} parent=1 // pred_check_branch
      %47 = sbr.rel (0) target = $region17
    $region16: #{vae_forward.1} parent=1 // pred_region
      _
    $region17: #{vae_forward.1} parent=1 // pred_fallthru
      _
    // Predicated region
    $region18: #{vae_forward.1} parent=1 // pred_check
      _
    $region19: #{vae_forward.1} parent=1 // pred_check_branch
      %49 = sbr.rel (0) target = $region21
    $region20: #{vae_forward.1} parent=1 // pred_region
      %s51 = ssub.s32 4096, 4096
      %52 = vsyncadd [#allocation5], %s51
      %s53 = sshll.u32 [#allocation4], 4
      %s54 = int_to_ptr.vmem [resolvable:$true] %s53
      %59 = dma.hbm_to_vmem [thread:$0]  %s4, 4096, %s54, [#allocation5], 128, 128, 8
    $region21: #{vae_forward.1} parent=1 // pred_fallthru
      _
    // Predicated region
    $region22: #{vae_forward.1} parent=1 // pred_check
      _
    $region23: #{vae_forward.1} parent=1 // pred_check_branch
      %61 = sbr.rel (0) target = $region25
    $region24: #{vae_forward.1} parent=1 // pred_region
      _
    $region25: #{vae_forward.1} parent=1 // pred_fallthru
      _
    // Predicated region
    $region26: #{vae_forward.1} parent=1 // pred_check
      _
    $region27: #{vae_forward.1} parent=1 // pred_check_branch
      %63 = sbr.rel (0) target = $region29
    $region28: #{vae_forward.1} parent=1 // pred_region
      %s65 = ssub.s32 4096, 4096
      %66 = vsyncadd [#allocation5], %s65
      %s67 = sshll.u32 [#allocation6], 4
      %s68 = int_to_ptr.vmem [resolvable:$true] %s67
      %73 = dma.hbm_to_vmem [thread:$0]  %s6, 4096, %s68, [#allocation5], 128, 128, 8
    $region29: #{vae_forward.1} parent=1 // pred_fallthru
      _
    // Predicated region
    $region30: #{vae_forward.1} parent=1 // pred_check
      _
    $region31: #{vae_forward.1} parent=1 // pred_check_branch
      %75 = sbr.rel (0) target = $region33
    $region32: #{vae_forward.1} parent=1 // pred_region
      _
    $region33: #{vae_forward.1} parent=1 // pred_fallthru
      _
    // Predicated region
    $region34: #{vae_forward.1} parent=1 // pred_check
      _
    $region35: #{vae_forward.1} parent=1 // pred_check_branch
      %77 = sbr.rel (0) target = $region37
    $region36: #{vae_forward.1} parent=1 // pred_region
      %s79 = ssub.s32 4096, 4096
      %80 = vsyncadd [#allocation8], %s79
      %s81 = sshll.u32 [#allocation7], 4
      %s82 = int_to_ptr.vmem [resolvable:$true] %s81
      %87 = dma.hbm_to_vmem [thread:$0]  %s8, 4096, %s82, [#allocation8], 128, 128, 8
    $region37: #{vae_forward.1} parent=1 // pred_fallthru
      _
    // Predicated region
    $region38: #{vae_forward.1} parent=1 // pred_check
      _
    $region39: #{vae_forward.1} parent=1 // pred_check_branch
      %89 = sbr.rel (0) target = $region41
    $region40: #{vae_forward.1} parent=1 // pred_region
      _
    $region41: #{vae_forward.1} parent=1 // pred_fallthru
      _
    // Predicated region
    $region42: #{vae_forward.1} parent=1 // pred_check
      _
    $region43: #{vae_forward.1} parent=1 // pred_check_branch
      %91 = sbr.rel (0) target = $region45
    $region44: #{vae_forward.1} parent=1 // pred_region
      %s93 = ssub.s32 2048, 2048
      %94 = vsyncadd [#allocation8], %s93
      %s95 = sshll.u32 [#allocation9], 4
      %s96 = int_to_ptr.vmem [resolvable:$true] %s95
      %101 = dma.hbm_to_vmem [thread:$0]  %s10, 2048, %s96, [#allocation8], 128, 128, 8
    $region45: #{vae_forward.1} parent=1 // pred_fallthru
      _
    // Predicated region
    $region46: #{vae_forward.1} parent=1 // pred_check
      _
    $region47: #{vae_forward.1} parent=1 // pred_check_branch
      %103 = sbr.rel (0) target = $region49
    $region48: #{vae_forward.1} parent=1 // pred_region
      _
    $region49: #{vae_forward.1} parent=1 // pred_fallthru
      _
    // Predicated region
    $region50: #{vae_forward.1} parent=1 // pred_check
      _
    $region51: #{vae_forward.1} parent=1 // pred_check_branch
      %105 = sbr.rel (0) target = $region53
    $region52: #{vae_forward.1} parent=1 // pred_region
      %s107 = ssub.s32 4096, 4096
      %108 = vsyncadd [#allocation11], %s107
      %s109 = sshll.u32 [#allocation10], 4
      %s110 = int_to_ptr.vmem [resolvable:$true] %s109
      %115 = dma.hbm_to_vmem [thread:$0]  %s12, 4096, %s110, [#allocation11], 128, 128, 8
    $region53: #{vae_forward.1} parent=1 // pred_fallthru
      _
    // Predicated region
    $region54: #{vae_forward.1} parent=1 // pred_check
      _
    $region55: #{vae_forward.1} parent=1 // pred_check_branch
      %117 = sbr.rel (0) target = $region57
    $region56: #{vae_forward.1} parent=1 // pred_region
      _
    $region57: #{vae_forward.1} parent=1 // pred_fallthru
      _
    // Predicated region
    $region58: #{vae_forward.1} parent=1 // pred_check
      _
    $region59: #{vae_forward.1} parent=1 // pred_check_branch
      %119 = sbr.rel (0) target = $region61
    $region60: #{vae_forward.1} parent=1 // pred_region
      %s121 = ssub.s32 4096, 4096
      %122 = vsyncadd [#allocation11], %s121
      %s123 = sshll.u32 [#allocation12], 4
      %s124 = int_to_ptr.vmem [resolvable:$true] %s123
      %129 = dma.hbm_to_vmem [thread:$0]  %s14, 4096, %s124, [#allocation11], 128, 128, 8
    $region61: #{vae_forward.1} parent=1 // pred_fallthru
      _
    // Predicated region
    $region62: #{vae_forward.1} parent=1 // pred_check
      _
    $region63: #{vae_forward.1} parent=1 // pred_check_branch
      %131 = sbr.rel (0) target = $region65
    $region64: #{vae_forward.1} parent=1 // pred_region
      _
    $region65: #{vae_forward.1} parent=1 // pred_fallthru
      _
    // Predicated region
    $region66: #{vae_forward.1} parent=1 // pred_check
      _
    $region67: #{vae_forward.1} parent=1 // pred_check_branch
      %133 = sbr.rel (0) target = $region69
    $region68: #{vae_forward.1} parent=1 // pred_region
      %s135 = ssub.s32 4096, 4096
      %136 = vsyncadd [#allocation14], %s135
      %s137 = sshll.u32 [#allocation13], 4
      %s138 = int_to_ptr.vmem [resolvable:$true] %s137
      %143 = dma.hbm_to_vmem [thread:$0]  %s16, 4096, %s138, [#allocation14], 128, 128, 8
    $region69: #{vae_forward.1} parent=1 // pred_fallthru
      _
    // Predicated region
    $region70: #{vae_forward.1} parent=1 // pred_check
      _
    $region71: #{vae_forward.1} parent=1 // pred_check_branch
      %145 = sbr.rel (0) target = $region73
    $region72: #{vae_forward.1} parent=1 // pred_region
      _
    $region73: #{vae_forward.1} parent=1 // pred_fallthru
      _
    // Predicated region
    $region74: #{vae_forward.1} parent=1 // pred_check
      _
    $region75: #{vae_forward.1} parent=1 // pred_check_branch
      %147 = sbr.rel (0) target = $region77
    $region76: #{vae_forward.1} parent=1 // pred_region
      %148 = dma.done [#allocation3], 4096
    $region77: #{vae_forward.1} parent=1 // pred_fallthru
      _
    // Predicated region
    $region78: #{vae_forward.1} parent=1 // pred_check
      _
    $region79: #{vae_forward.1} parent=1 // pred_check_branch
      %150 = sbr.rel (0) target = $region81
    $region80: #{vae_forward.1} parent=1 // pred_region
      %151 = dma.done [#allocation5], 4096
    $region81: #{vae_forward.1} parent=1 // pred_fallthru
      _
    // Predicated region
    $region82: #{vae_forward.1} parent=1 // pred_check
      _
    $region83: #{vae_forward.1} parent=1 // pred_check_branch
      %153 = sbr.rel (0) target = $region85
    $region84: #{vae_forward.1} parent=1 // pred_region
      %154 = dma.done [#allocation5], 4096
    $region85: #{vae_forward.1} parent=1 // pred_fallthru
      _
    // Predicated region
    $region86: #{vae_forward.1} parent=1 // pred_check
      _
    $region87: #{vae_forward.1} parent=1 // pred_check_branch
      %156 = sbr.rel (0) target = $region89
    $region88: #{vae_forward.1} parent=1 // pred_region
      %157 = dma.done [#allocation8], 4096
    $region89: #{vae_forward.1} parent=1 // pred_fallthru
      _
    // Predicated region
    $region90: #{vae_forward.1} parent=1 // pred_check
      _
    $region91: #{vae_forward.1} parent=1 // pred_check_branch
      %159 = sbr.rel (0) target = $region93
    $region92: #{vae_forward.1} parent=1 // pred_region
      %160 = dma.done [#allocation8], 2048
    $region93: #{vae_forward.1} parent=1 // pred_fallthru
      _
    // Predicated region
    $region94: #{vae_forward.1} parent=1 // pred_check
      _
    $region95: #{vae_forward.1} parent=1 // pred_check_branch
      %162 = sbr.rel (0) target = $region97
    $region96: #{vae_forward.1} parent=1 // pred_region
      %163 = dma.done [#allocation11], 4096
    $region97: #{vae_forward.1} parent=1 // pred_fallthru
      _
    // Predicated region
    $region98: #{vae_forward.1} parent=1 // pred_check
      _
    $region99: #{vae_forward.1} parent=1 // pred_check_branch
      %165 = sbr.rel (0) target = $region101
    $region100: #{vae_forward.1} parent=1 // pred_region
      %166 = dma.done [#allocation11], 4096
    $region101: #{vae_forward.1} parent=1 // pred_fallthru
      _
    // Predicated region
    $region102: #{vae_forward.1} parent=1 // pred_check
      _
    $region103: #{vae_forward.1} parent=1 // pred_check_branch
      %168 = sbr.rel (0) target = $region105
    $region104: #{vae_forward.1} parent=1 // pred_region
      %169 = dma.done [#allocation14], 4096
    $region105: #{vae_forward.1} parent=1 // pred_fallthru
      _
    %v171 = vld [vmem:[%s0] sm:$0xff]
    %v172 = vld [vmem:[#allocation2] sm:$0xff]
    %v173 = vld [vmem:[#allocation2 + $0x8] sm:$0xff]
    %v174 = vld [vmem:[#allocation2 + $0x10] sm:$0xff]
    %v175 = vld [vmem:[#allocation2 + $0x18] sm:$0xff]
    %v176 = vld [vmem:[#allocation2 + $0x20] sm:$0xff]
    %v177 = vld [vmem:[#allocation2 + $0x28] sm:$0xff]
    %v178 = vld [vmem:[#allocation2 + $0x30] sm:$0xff]
    %v179 = vld [vmem:[#allocation2 + $0x38] sm:$0xff]
    %v180 = vld [vmem:[#allocation2 + $0x40] sm:$0xff]
    %v181 = vld [vmem:[#allocation2 + $0x48] sm:$0xff]
    %v182 = vld [vmem:[#allocation2 + $0x50] sm:$0xff]
    %v183 = vld [vmem:[#allocation2 + $0x58] sm:$0xff]
    %v184 = vld [vmem:[#allocation2 + $0x60] sm:$0xff]
    %v185 = vld [vmem:[#allocation2 + $0x68] sm:$0xff]
    %v186 = vld [vmem:[#allocation2 + $0x70] sm:$0xff]
    %v187 = vld [vmem:[#allocation2 + $0x78] sm:$0xff]
    %v188 = vld [vmem:[#allocation2 + $0x80] sm:$0xff]
    %v189 = vld [vmem:[#allocation2 + $0x88] sm:$0xff]
    %v190 = vld [vmem:[#allocation2 + $0x90] sm:$0xff]
    %v191 = vld [vmem:[#allocation2 + $0x98] sm:$0xff]
    %v192 = vld [vmem:[#allocation2 + $0xa0] sm:$0xff]
    %v193 = vld [vmem:[#allocation2 + $0xa8] sm:$0xff]
    %v194 = vld [vmem:[#allocation2 + $0xb0] sm:$0xff]
    %v195 = vld [vmem:[#allocation2 + $0xb8] sm:$0xff]
    %v196 = vld [vmem:[#allocation2 + $0xc0] sm:$0xff]
    %v197 = vld [vmem:[#allocation2 + $0xc8] sm:$0xff]
    %v198 = vld [vmem:[#allocation2 + $0xd0] sm:$0xff]
    %v199 = vld [vmem:[#allocation2 + $0xd8] sm:$0xff]
    %v200 = vld [vmem:[#allocation2 + $0xe0] sm:$0xff]
    %v201 = vld [vmem:[#allocation2 + $0xe8] sm:$0xff]
    %v202 = vld [vmem:[#allocation2 + $0xf0] sm:$0xff]
    %v203 = vld [vmem:[#allocation2 + $0xf8] sm:$0xff]
    %v204 = vld [vmem:[%s3] sm:$0x3]
    %v206 = vlaneseq
    %v207 = vshrl.u32 %v206, 7
    %v208 = vsub.s32 0, %v207
    %v209 = vrot.slane %v204, %v208
    %v210 = vlaneseq
    %v211 = vshrl.u32 %v210, 7
    %v212 = vsub.s32 1, %v211
    %v213 = vrot.slane %v204, %v212
    %v217 = vunpack.c.l.b16 %v171
    %v218 = vunpack.c.h.b16 %v171
    %v219 = vpack.c.b16 %v217, %v217
    %v220 = vpack.c.b16 %v218, %v218
    %v255 = vunpack.c.l.b16 %v172
    %v256 = vunpack.c.h.b16 %v172
    %v257 = vunpack.c.l.b16 %v173
    %v258 = vunpack.c.h.b16 %v173
    %v259 = vunpack.c.l.b16 %v174
    %v260 = vunpack.c.h.b16 %v174
    %v261 = vunpack.c.l.b16 %v175
    %v262 = vunpack.c.h.b16 %v175
    %v263 = vunpack.c.l.b16 %v176
    %v264 = vunpack.c.h.b16 %v176
    %v265 = vunpack.c.l.b16 %v177
    %v266 = vunpack.c.h.b16 %v177
    %v267 = vunpack.c.l.b16 %v178
    %v268 = vunpack.c.h.b16 %v178
    %v269 = vunpack.c.l.b16 %v179
    %v270 = vunpack.c.h.b16 %v179
    %v271 = vunpack.c.l.b16 %v180
    %v272 = vunpack.c.h.b16 %v180
    %v273 = vunpack.c.l.b16 %v181
    %v274 = vunpack.c.h.b16 %v181
    %v275 = vunpack.c.l.b16 %v182
    %v276 = vunpack.c.h.b16 %v182
    %v277 = vunpack.c.l.b16 %v183
    %v278 = vunpack.c.h.b16 %v183
    %v279 = vunpack.c.l.b16 %v184
    %v280 = vunpack.c.h.b16 %v184
    %v281 = vunpack.c.l.b16 %v185
    %v282 = vunpack.c.h.b16 %v185
    %v283 = vunpack.c.l.b16 %v186
    %v284 = vunpack.c.h.b16 %v186
    %v285 = vunpack.c.l.b16 %v187
    %v286 = vunpack.c.h.b16 %v187
    %v287 = vunpack.c.l.b16 %v188
    %v288 = vunpack.c.h.b16 %v188
    %v289 = vunpack.c.l.b16 %v189
    %v290 = vunpack.c.h.b16 %v189
    %v291 = vunpack.c.l.b16 %v190
    %v292 = vunpack.c.h.b16 %v190
    %v293 = vunpack.c.l.b16 %v191
    %v294 = vunpack.c.h.b16 %v191
    %v295 = vunpack.c.l.b16 %v192
    %v296 = vunpack.c.h.b16 %v192
    %v297 = vunpack.c.l.b16 %v193
    %v298 = vunpack.c.h.b16 %v193
    %v299 = vunpack.c.l.b16 %v194
    %v300 = vunpack.c.h.b16 %v194
    %v301 = vunpack.c.l.b16 %v195
    %v302 = vunpack.c.h.b16 %v195
    %v303 = vunpack.c.l.b16 %v196
    %v304 = vunpack.c.h.b16 %v196
    %v305 = vunpack.c.l.b16 %v197
    %v306 = vunpack.c.h.b16 %v197
    %v307 = vunpack.c.l.b16 %v198
    %v308 = vunpack.c.h.b16 %v198
    %v309 = vunpack.c.l.b16 %v199
    %v310 = vunpack.c.h.b16 %v199
    %v311 = vunpack.c.l.b16 %v200
    %v312 = vunpack.c.h.b16 %v200
    %v313 = vunpack.c.l.b16 %v201
    %v314 = vunpack.c.h.b16 %v201
    %v315 = vunpack.c.l.b16 %v202
    %v316 = vunpack.c.h.b16 %v202
    %v317 = vunpack.c.l.b16 %v203
    %v318 = vunpack.c.h.b16 %v203
    %v319 = vpack.c.b16 %v257, %v255
    %v320 = vpack.c.b16 %v258, %v256
    %v321 = vpack.c.b16 %v261, %v259
    %v322 = vpack.c.b16 %v262, %v260
    %v323 = vpack.c.b16 %v265, %v263
    %v324 = vpack.c.b16 %v266, %v264
    %v325 = vpack.c.b16 %v269, %v267
    %v326 = vpack.c.b16 %v270, %v268
    %v327 = vpack.c.b16 %v273, %v271
    %v328 = vpack.c.b16 %v274, %v272
    %v329 = vpack.c.b16 %v277, %v275
    %v330 = vpack.c.b16 %v278, %v276
    %v331 = vpack.c.b16 %v281, %v279
    %v332 = vpack.c.b16 %v282, %v280
    %v333 = vpack.c.b16 %v285, %v283
    %v334 = vpack.c.b16 %v286, %v284
    %v335 = vpack.c.b16 %v289, %v287
    %v336 = vpack.c.b16 %v290, %v288
    %v337 = vpack.c.b16 %v293, %v291
    %v338 = vpack.c.b16 %v294, %v292
    %v339 = vpack.c.b16 %v297, %v295
    %v340 = vpack.c.b16 %v298, %v296
    %v341 = vpack.c.b16 %v301, %v299
    %v342 = vpack.c.b16 %v302, %v300
    %v343 = vpack.c.b16 %v305, %v303
    %v344 = vpack.c.b16 %v306, %v304
    %v345 = vpack.c.b16 %v309, %v307
    %v346 = vpack.c.b16 %v310, %v308
    %v347 = vpack.c.b16 %v313, %v311
    %v348 = vpack.c.b16 %v314, %v312
    %v349 = vpack.c.b16 %v317, %v315
    %v350 = vpack.c.b16 %v318, %v316
    %383 = vmatprep.subr.bf16.mxu0 %v320
    %384 = vmatpush1.bf16.msra.mxu0 %v319
    %385 = vmatprep.subr.bf16.mxu0 %v322
    %386 = vmatpush1.bf16.msra.mxu0 %v321
    %387 = vmatprep.subr.bf16.mxu0 %v324
    %388 = vmatpush1.bf16.msra.mxu0 %v323
    %389 = vmatprep.subr.bf16.mxu0 %v326
    %390 = vmatpush1.bf16.msra.mxu0 %v325
    %391 = vmatprep.subr.bf16.mxu0 %v328
    %392 = vmatpush1.bf16.msra.mxu0 %v327
    %393 = vmatprep.subr.bf16.mxu0 %v330
    %394 = vmatpush1.bf16.msra.mxu0 %v329
    %395 = vmatprep.subr.bf16.mxu0 %v332
    %396 = vmatpush1.bf16.msra.mxu0 %v331
    %397 = vmatprep.subr.bf16.mxu0 %v334
    %398 = vmatpush1.bf16.msra.mxu0 %v333
    %399 = vmatprep.subr.bf16.mxu0 %v336
    %400 = vmatpush1.bf16.msra.mxu0 %v335
    %401 = vmatprep.subr.bf16.mxu0 %v338
    %402 = vmatpush1.bf16.msra.mxu0 %v337
    %403 = vmatprep.subr.bf16.mxu0 %v340
    %404 = vmatpush1.bf16.msra.mxu0 %v339
    %405 = vmatprep.subr.bf16.mxu0 %v342
    %406 = vmatpush1.bf16.msra.mxu0 %v341
    %407 = vmatprep.subr.bf16.mxu0 %v344
    %408 = vmatpush1.bf16.msra.mxu0 %v343
    %409 = vmatprep.subr.bf16.mxu0 %v346
    %410 = vmatpush1.bf16.msra.mxu0 %v345
    %411 = vmatprep.subr.bf16.mxu0 %v348
    %412 = vmatpush1.bf16.msra.mxu0 %v347
    %413 = vmatprep.subr.bf16.mxu0 %v350
    %414 = vmatpush1.bf16.msra.mxu0 %v349
    %415 = vmatprep.mubr.bf16.mxu0 %v220
    %416 = vmatmul.mubr.bf16.gmra.mrb[0].mxu0 %v219
    %v417 = vpop.f32.mrb[0].mxu0
    %v418 = vadd.f32 %v209, %v417
    %v419 = vpop.f32.mrb[0].mxu0
    %v420 = vadd.f32 %v213, %v419
    %v421 = vpop.f32.mrb[0].mxu0
    %v422 = vpop.f32.mrb[0].mxu0
    %423 = vdwg.mxu0
    %v424 = vmax.f32 %v418, 0.0
    %v425 = vmax.f32 %v420, 0.0
    %v426 = vpack.c.bf16 %v424, %v424
    %v427 = vpack.c.bf16 %v425, %v425
    %v428 = vld [vmem:[#allocation4] sm:$0xff]
    %v429 = vld [vmem:[#allocation4 + $0x8] sm:$0xff]
    %v430 = vld [vmem:[#allocation4 + $0x10] sm:$0xff]
    %v431 = vld [vmem:[#allocation4 + $0x18] sm:$0xff]
    %v432 = vld [vmem:[#allocation4 + $0x20] sm:$0xff]
    %v433 = vld [vmem:[#allocation4 + $0x28] sm:$0xff]
    %v434 = vld [vmem:[#allocation4 + $0x30] sm:$0xff]
    %v435 = vld [vmem:[#allocation4 + $0x38] sm:$0xff]
    %v436 = vld [vmem:[#allocation4 + $0x40] sm:$0xff]
    %v437 = vld [vmem:[#allocation4 + $0x48] sm:$0xff]
    %v438 = vld [vmem:[#allocation4 + $0x50] sm:$0xff]
    %v439 = vld [vmem:[#allocation4 + $0x58] sm:$0xff]
    %v440 = vld [vmem:[#allocation4 + $0x60] sm:$0xff]
    %v441 = vld [vmem:[#allocation4 + $0x68] sm:$0xff]
    %v442 = vld [vmem:[#allocation4 + $0x70] sm:$0xff]
    %v443 = vld [vmem:[#allocation4 + $0x78] sm:$0xff]
    %v444 = vld [vmem:[#allocation4 + $0x80] sm:$0xff]
    %v445 = vld [vmem:[#allocation4 + $0x88] sm:$0xff]
    %v446 = vld [vmem:[#allocation4 + $0x90] sm:$0xff]
    %v447 = vld [vmem:[#allocation4 + $0x98] sm:$0xff]
    %v448 = vld [vmem:[#allocation4 + $0xa0] sm:$0xff]
    %v449 = vld [vmem:[#allocation4 + $0xa8] sm:$0xff]
    %v450 = vld [vmem:[#allocation4 + $0xb0] sm:$0xff]
    %v451 = vld [vmem:[#allocation4 + $0xb8] sm:$0xff]
    %v452 = vld [vmem:[#allocation4 + $0xc0] sm:$0xff]
    %v453 = vld [vmem:[#allocation4 + $0xc8] sm:$0xff]
    %v454 = vld [vmem:[#allocation4 + $0xd0] sm:$0xff]
    %v455 = vld [vmem:[#allocation4 + $0xd8] sm:$0xff]
    %v456 = vld [vmem:[#allocation4 + $0xe0] sm:$0xff]
    %v457 = vld [vmem:[#allocation4 + $0xe8] sm:$0xff]
    %v458 = vld [vmem:[#allocation4 + $0xf0] sm:$0xff]
    %v459 = vld [vmem:[#allocation4 + $0xf8] sm:$0xff]
    %v460 = vld [vmem:[%s5] sm:$0x3]
    %v462 = vlaneseq
    %v463 = vshrl.u32 %v462, 7
    %v464 = vsub.s32 0, %v463
    %v465 = vrot.slane %v460, %v464
    %v466 = vlaneseq
    %v467 = vshrl.u32 %v466, 7
    %v468 = vsub.s32 1, %v467
    %v469 = vrot.slane %v460, %v468
    %v504 = vunpack.c.l.b16 %v428
    %v505 = vunpack.c.h.b16 %v428
    %v506 = vunpack.c.l.b16 %v429
    %v507 = vunpack.c.h.b16 %v429
    %v508 = vunpack.c.l.b16 %v430
    %v509 = vunpack.c.h.b16 %v430
    %v510 = vunpack.c.l.b16 %v431
    %v511 = vunpack.c.h.b16 %v431
    %v512 = vunpack.c.l.b16 %v432
    %v513 = vunpack.c.h.b16 %v432
    %v514 = vunpack.c.l.b16 %v433
    %v515 = vunpack.c.h.b16 %v433
    %v516 = vunpack.c.l.b16 %v434
    %v517 = vunpack.c.h.b16 %v434
    %v518 = vunpack.c.l.b16 %v435
    %v519 = vunpack.c.h.b16 %v435
    %v520 = vunpack.c.l.b16 %v436
    %v521 = vunpack.c.h.b16 %v436
    %v522 = vunpack.c.l.b16 %v437
    %v523 = vunpack.c.h.b16 %v437
    %v524 = vunpack.c.l.b16 %v438
    %v525 = vunpack.c.h.b16 %v438
    %v526 = vunpack.c.l.b16 %v439
    %v527 = vunpack.c.h.b16 %v439
    %v528 = vunpack.c.l.b16 %v440
    %v529 = vunpack.c.h.b16 %v440
    %v530 = vunpack.c.l.b16 %v441
    %v531 = vunpack.c.h.b16 %v441
    %v532 = vunpack.c.l.b16 %v442
    %v533 = vunpack.c.h.b16 %v442
    %v534 = vunpack.c.l.b16 %v443
    %v535 = vunpack.c.h.b16 %v443
    %v536 = vunpack.c.l.b16 %v444
    %v537 = vunpack.c.h.b16 %v444
    %v538 = vunpack.c.l.b16 %v445
    %v539 = vunpack.c.h.b16 %v445
    %v540 = vunpack.c.l.b16 %v446
    %v541 = vunpack.c.h.b16 %v446
    %v542 = vunpack.c.l.b16 %v447
    %v543 = vunpack.c.h.b16 %v447
    %v544 = vunpack.c.l.b16 %v448
    %v545 = vunpack.c.h.b16 %v448
    %v546 = vunpack.c.l.b16 %v449
    %v547 = vunpack.c.h.b16 %v449
    %v548 = vunpack.c.l.b16 %v450
    %v549 = vunpack.c.h.b16 %v450
    %v550 = vunpack.c.l.b16 %v451
    %v551 = vunpack.c.h.b16 %v451
    %v552 = vunpack.c.l.b16 %v452
    %v553 = vunpack.c.h.b16 %v452
    %v554 = vunpack.c.l.b16 %v453
    %v555 = vunpack.c.h.b16 %v453
    %v556 = vunpack.c.l.b16 %v454
    %v557 = vunpack.c.h.b16 %v454
    %v558 = vunpack.c.l.b16 %v455
    %v559 = vunpack.c.h.b16 %v455
    %v560 = vunpack.c.l.b16 %v456
    %v561 = vunpack.c.h.b16 %v456
    %v562 = vunpack.c.l.b16 %v457
    %v563 = vunpack.c.h.b16 %v457
    %v564 = vunpack.c.l.b16 %v458
    %v565 = vunpack.c.h.b16 %v458
    %v566 = vunpack.c.l.b16 %v459
    %v567 = vunpack.c.h.b16 %v459
    %v568 = vpack.c.b16 %v506, %v504
    %v569 = vpack.c.b16 %v507, %v505
    %v570 = vpack.c.b16 %v510, %v508
    %v571 = vpack.c.b16 %v511, %v509
    %v572 = vpack.c.b16 %v514, %v512
    %v573 = vpack.c.b16 %v515, %v513
    %v574 = vpack.c.b16 %v518, %v516
    %v575 = vpack.c.b16 %v519, %v517
    %v576 = vpack.c.b16 %v522, %v520
    %v577 = vpack.c.b16 %v523, %v521
    %v578 = vpack.c.b16 %v526, %v524
    %v579 = vpack.c.b16 %v527, %v525
    %v580 = vpack.c.b16 %v530, %v528
    %v581 = vpack.c.b16 %v531, %v529
    %v582 = vpack.c.b16 %v534, %v532
    %v583 = vpack.c.b16 %v535, %v533
    %v584 = vpack.c.b16 %v538, %v536
    %v585 = vpack.c.b16 %v539, %v537
    %v586 = vpack.c.b16 %v542, %v540
    %v587 = vpack.c.b16 %v543, %v541
    %v588 = vpack.c.b16 %v546, %v544
    %v589 = vpack.c.b16 %v547, %v545
    %v590 = vpack.c.b16 %v550, %v548
    %v591 = vpack.c.b16 %v551, %v549
    %v592 = vpack.c.b16 %v554, %v552
    %v593 = vpack.c.b16 %v555, %v553
    %v594 = vpack.c.b16 %v558, %v556
    %v595 = vpack.c.b16 %v559, %v557
    %v596 = vpack.c.b16 %v562, %v560
    %v597 = vpack.c.b16 %v563, %v561
    %v598 = vpack.c.b16 %v566, %v564
    %v599 = vpack.c.b16 %v567, %v565
    %632 = vmatprep.subr.bf16.mxu0 %v569
    %633 = vmatpush1.bf16.msra.mxu0 %v568
    %634 = vmatprep.subr.bf16.mxu0 %v571
    %635 = vmatpush1.bf16.msra.mxu0 %v570
    %636 = vmatprep.subr.bf16.mxu0 %v573
    %637 = vmatpush1.bf16.msra.mxu0 %v572
    %638 = vmatprep.subr.bf16.mxu0 %v575
    %639 = vmatpush1.bf16.msra.mxu0 %v574
    %640 = vmatprep.subr.bf16.mxu0 %v577
    %641 = vmatpush1.bf16.msra.mxu0 %v576
    %642 = vmatprep.subr.bf16.mxu0 %v579
    %643 = vmatpush1.bf16.msra.mxu0 %v578
    %644 = vmatprep.subr.bf16.mxu0 %v581
    %645 = vmatpush1.bf16.msra.mxu0 %v580
    %646 = vmatprep.subr.bf16.mxu0 %v583
    %647 = vmatpush1.bf16.msra.mxu0 %v582
    %648 = vmatprep.subr.bf16.mxu0 %v585
    %649 = vmatpush1.bf16.msra.mxu0 %v584
    %650 = vmatprep.subr.bf16.mxu0 %v587
    %651 = vmatpush1.bf16.msra.mxu0 %v586
    %652 = vmatprep.subr.bf16.mxu0 %v589
    %653 = vmatpush1.bf16.msra.mxu0 %v588
    %654 = vmatprep.subr.bf16.mxu0 %v591
    %655 = vmatpush1.bf16.msra.mxu0 %v590
    %656 = vmatprep.subr.bf16.mxu0 %v593
    %657 = vmatpush1.bf16.msra.mxu0 %v592
    %658 = vmatprep.subr.bf16.mxu0 %v595
    %659 = vmatpush1.bf16.msra.mxu0 %v594
    %660 = vmatprep.subr.bf16.mxu0 %v597
    %661 = vmatpush1.bf16.msra.mxu0 %v596
    %662 = vmatprep.subr.bf16.mxu0 %v599
    %663 = vmatpush1.bf16.msra.mxu0 %v598
    %664 = vmatprep.mubr.bf16.mxu0 %v427
    %665 = vmatmul.mubr.bf16.gmra.mrb[0].mxu0 %v426
    %v666 = vpop.f32.mrb[0].mxu0
    %v667 = vadd.f32 %v465, %v666
    %v668 = vpop.f32.mrb[0].mxu0
    %v669 = vadd.f32 %v469, %v668
    %v670 = vpop.f32.mrb[0].mxu0
    %v671 = vpop.f32.mrb[0].mxu0
    %672 = vdwg.mxu0
    %v673 = vmax.f32 %v667, 0.0
    %v674 = vmax.f32 %v669, 0.0
    %v675 = vpack.c.bf16 %v673, %v673
    %v676 = vpack.c.bf16 %v674, %v674
    %v677 = vld [vmem:[#allocation6] sm:$0xff]
    %v678 = vld [vmem:[#allocation6 + $0x8] sm:$0xff]
    %v679 = vld [vmem:[#allocation6 + $0x10] sm:$0xff]
    %v680 = vld [vmem:[#allocation6 + $0x18] sm:$0xff]
    %v681 = vld [vmem:[#allocation6 + $0x20] sm:$0xff]
    %v682 = vld [vmem:[#allocation6 + $0x28] sm:$0xff]
    %v683 = vld [vmem:[#allocation6 + $0x30] sm:$0xff]
    %v684 = vld [vmem:[#allocation6 + $0x38] sm:$0xff]
    %v685 = vld [vmem:[#allocation6 + $0x40] sm:$0xff]
    %v686 = vld [vmem:[#allocation6 + $0x48] sm:$0xff]
    %v687 = vld [vmem:[#allocation6 + $0x50] sm:$0xff]
    %v688 = vld [vmem:[#allocation6 + $0x58] sm:$0xff]
    %v689 = vld [vmem:[#allocation6 + $0x60] sm:$0xff]
    %v690 = vld [vmem:[#allocation6 + $0x68] sm:$0xff]
    %v691 = vld [vmem:[#allocation6 + $0x70] sm:$0xff]
    %v692 = vld [vmem:[#allocation6 + $0x78] sm:$0xff]
    %v693 = vld [vmem:[#allocation6 + $0x80] sm:$0xff]
    %v694 = vld [vmem:[#allocation6 + $0x88] sm:$0xff]
    %v695 = vld [vmem:[#allocation6 + $0x90] sm:$0xff]
    %v696 = vld [vmem:[#allocation6 + $0x98] sm:$0xff]
    %v697 = vld [vmem:[#allocation6 + $0xa0] sm:$0xff]
    %v698 = vld [vmem:[#allocation6 + $0xa8] sm:$0xff]
    %v699 = vld [vmem:[#allocation6 + $0xb0] sm:$0xff]
    %v700 = vld [vmem:[#allocation6 + $0xb8] sm:$0xff]
    %v701 = vld [vmem:[#allocation6 + $0xc0] sm:$0xff]
    %v702 = vld [vmem:[#allocation6 + $0xc8] sm:$0xff]
    %v703 = vld [vmem:[#allocation6 + $0xd0] sm:$0xff]
    %v704 = vld [vmem:[#allocation6 + $0xd8] sm:$0xff]
    %v705 = vld [vmem:[#allocation6 + $0xe0] sm:$0xff]
    %v706 = vld [vmem:[#allocation6 + $0xe8] sm:$0xff]
    %v707 = vld [vmem:[#allocation6 + $0xf0] sm:$0xff]
    %v708 = vld [vmem:[#allocation6 + $0xf8] sm:$0xff]
    %v709 = vld [vmem:[%s7] sm:$0x3]
    %v711 = vlaneseq
    %v712 = vshrl.u32 %v711, 7
    %v713 = vsub.s32 0, %v712
    %v714 = vrot.slane %v709, %v713
    %v715 = vlaneseq
    %v716 = vshrl.u32 %v715, 7
    %v717 = vsub.s32 1, %v716
    %v718 = vrot.slane %v709, %v717
    %v753 = vunpack.c.l.b16 %v677
    %v754 = vunpack.c.h.b16 %v677
    %v755 = vunpack.c.l.b16 %v678
    %v756 = vunpack.c.h.b16 %v678
    %v757 = vunpack.c.l.b16 %v679
    %v758 = vunpack.c.h.b16 %v679
    %v759 = vunpack.c.l.b16 %v680
    %v760 = vunpack.c.h.b16 %v680
    %v761 = vunpack.c.l.b16 %v681
    %v762 = vunpack.c.h.b16 %v681
    %v763 = vunpack.c.l.b16 %v682
    %v764 = vunpack.c.h.b16 %v682
    %v765 = vunpack.c.l.b16 %v683
    %v766 = vunpack.c.h.b16 %v683
    %v767 = vunpack.c.l.b16 %v684
    %v768 = vunpack.c.h.b16 %v684
    %v769 = vunpack.c.l.b16 %v685
    %v770 = vunpack.c.h.b16 %v685
    %v771 = vunpack.c.l.b16 %v686
    %v772 = vunpack.c.h.b16 %v686
    %v773 = vunpack.c.l.b16 %v687
    %v774 = vunpack.c.h.b16 %v687
    %v775 = vunpack.c.l.b16 %v688
    %v776 = vunpack.c.h.b16 %v688
    %v777 = vunpack.c.l.b16 %v689
    %v778 = vunpack.c.h.b16 %v689
    %v779 = vunpack.c.l.b16 %v690
    %v780 = vunpack.c.h.b16 %v690
    %v781 = vunpack.c.l.b16 %v691
    %v782 = vunpack.c.h.b16 %v691
    %v783 = vunpack.c.l.b16 %v692
    %v784 = vunpack.c.h.b16 %v692
    %v785 = vunpack.c.l.b16 %v693
    %v786 = vunpack.c.h.b16 %v693
    %v787 = vunpack.c.l.b16 %v694
    %v788 = vunpack.c.h.b16 %v694
    %v789 = vunpack.c.l.b16 %v695
    %v790 = vunpack.c.h.b16 %v695
    %v791 = vunpack.c.l.b16 %v696
    %v792 = vunpack.c.h.b16 %v696
    %v793 = vunpack.c.l.b16 %v697
    %v794 = vunpack.c.h.b16 %v697
    %v795 = vunpack.c.l.b16 %v698
    %v796 = vunpack.c.h.b16 %v698
    %v797 = vunpack.c.l.b16 %v699
    %v798 = vunpack.c.h.b16 %v699
    %v799 = vunpack.c.l.b16 %v700
    %v800 = vunpack.c.h.b16 %v700
    %v801 = vunpack.c.l.b16 %v701
    %v802 = vunpack.c.h.b16 %v701
    %v803 = vunpack.c.l.b16 %v702
    %v804 = vunpack.c.h.b16 %v702
    %v805 = vunpack.c.l.b16 %v703
    %v806 = vunpack.c.h.b16 %v703
    %v807 = vunpack.c.l.b16 %v704
    %v808 = vunpack.c.h.b16 %v704
    %v809 = vunpack.c.l.b16 %v705
    %v810 = vunpack.c.h.b16 %v705
    %v811 = vunpack.c.l.b16 %v706
    %v812 = vunpack.c.h.b16 %v706
    %v813 = vunpack.c.l.b16 %v707
    %v814 = vunpack.c.h.b16 %v707
    %v815 = vunpack.c.l.b16 %v708
    %v816 = vunpack.c.h.b16 %v708
    %v817 = vpack.c.b16 %v755, %v753
    %v818 = vpack.c.b16 %v756, %v754
    %v819 = vpack.c.b16 %v759, %v757
    %v820 = vpack.c.b16 %v760, %v758
    %v821 = vpack.c.b16 %v763, %v761
    %v822 = vpack.c.b16 %v764, %v762
    %v823 = vpack.c.b16 %v767, %v765
    %v824 = vpack.c.b16 %v768, %v766
    %v825 = vpack.c.b16 %v771, %v769
    %v826 = vpack.c.b16 %v772, %v770
    %v827 = vpack.c.b16 %v775, %v773
    %v828 = vpack.c.b16 %v776, %v774
    %v829 = vpack.c.b16 %v779, %v777
    %v830 = vpack.c.b16 %v780, %v778
    %v831 = vpack.c.b16 %v783, %v781
    %v832 = vpack.c.b16 %v784, %v782
    %v833 = vpack.c.b16 %v787, %v785
    %v834 = vpack.c.b16 %v788, %v786
    %v835 = vpack.c.b16 %v791, %v789
    %v836 = vpack.c.b16 %v792, %v790
    %v837 = vpack.c.b16 %v795, %v793
    %v838 = vpack.c.b16 %v796, %v794
    %v839 = vpack.c.b16 %v799, %v797
    %v840 = vpack.c.b16 %v800, %v798
    %v841 = vpack.c.b16 %v803, %v801
    %v842 = vpack.c.b16 %v804, %v802
    %v843 = vpack.c.b16 %v807, %v805
    %v844 = vpack.c.b16 %v808, %v806
    %v845 = vpack.c.b16 %v811, %v809
    %v846 = vpack.c.b16 %v812, %v810
    %v847 = vpack.c.b16 %v815, %v813
    %v848 = vpack.c.b16 %v816, %v814
    %881 = vmatprep.subr.bf16.mxu0 %v818
    %882 = vmatpush1.bf16.msra.mxu0 %v817
    %883 = vmatprep.subr.bf16.mxu0 %v820
    %884 = vmatpush1.bf16.msra.mxu0 %v819
    %885 = vmatprep.subr.bf16.mxu0 %v822
    %886 = vmatpush1.bf16.msra.mxu0 %v821
    %887 = vmatprep.subr.bf16.mxu0 %v824
    %888 = vmatpush1.bf16.msra.mxu0 %v823
    %889 = vmatprep.subr.bf16.mxu0 %v826
    %890 = vmatpush1.bf16.msra.mxu0 %v825
    %891 = vmatprep.subr.bf16.mxu0 %v828
    %892 = vmatpush1.bf16.msra.mxu0 %v827
    %893 = vmatprep.subr.bf16.mxu0 %v830
    %894 = vmatpush1.bf16.msra.mxu0 %v829
    %895 = vmatprep.subr.bf16.mxu0 %v832
    %896 = vmatpush1.bf16.msra.mxu0 %v831
    %897 = vmatprep.subr.bf16.mxu0 %v834
    %898 = vmatpush1.bf16.msra.mxu0 %v833
    %899 = vmatprep.subr.bf16.mxu0 %v836
    %900 = vmatpush1.bf16.msra.mxu0 %v835
    %901 = vmatprep.subr.bf16.mxu0 %v838
    %902 = vmatpush1.bf16.msra.mxu0 %v837
    %903 = vmatprep.subr.bf16.mxu0 %v840
    %904 = vmatpush1.bf16.msra.mxu0 %v839
    %905 = vmatprep.subr.bf16.mxu0 %v842
    %906 = vmatpush1.bf16.msra.mxu0 %v841
    %907 = vmatprep.subr.bf16.mxu0 %v844
    %908 = vmatpush1.bf16.msra.mxu0 %v843
    %909 = vmatprep.subr.bf16.mxu0 %v846
    %910 = vmatpush1.bf16.msra.mxu0 %v845
    %911 = vmatprep.subr.bf16.mxu0 %v848
    %912 = vmatpush1.bf16.msra.mxu0 %v847
    %913 = vmatprep.mubr.bf16.mxu0 %v676
    %914 = vmatmul.mubr.bf16.gmra.mrb[0].mxu0 %v675
    %v915 = vpop.f32.mrb[0].mxu0
    %v916 = vadd.f32 %v714, %v915
    %v917 = vpop.f32.mrb[0].mxu0
    %v918 = vadd.f32 %v718, %v917
    %v919 = vpop.f32.mrb[0].mxu0
    %v920 = vpop.f32.mrb[0].mxu0
    %921 = vdwg.mxu0
    %v922 = vmax.f32 %v916, 0.0
    %v923 = vmax.f32 %v918, 0.0
    %v924 = vpack.c.bf16 %v922, %v922
    %v925 = vpack.c.bf16 %v923, %v923
    %v926 = vld [vmem:[#allocation7] sm:$0xff]
    %v927 = vld [vmem:[#allocation7 + $0x8] sm:$0xff]
    %v928 = vld [vmem:[#allocation7 + $0x10] sm:$0xff]
    %v929 = vld [vmem:[#allocation7 + $0x18] sm:$0xff]
    %v930 = vld [vmem:[#allocation7 + $0x20] sm:$0xff]
    %v931 = vld [vmem:[#allocation7 + $0x28] sm:$0xff]
    %v932 = vld [vmem:[#allocation7 + $0x30] sm:$0xff]
    %v933 = vld [vmem:[#allocation7 + $0x38] sm:$0xff]
    %v934 = vld [vmem:[#allocation7 + $0x40] sm:$0xff]
    %v935 = vld [vmem:[#allocation7 + $0x48] sm:$0xff]
    %v936 = vld [vmem:[#allocation7 + $0x50] sm:$0xff]
    %v937 = vld [vmem:[#allocation7 + $0x58] sm:$0xff]
    %v938 = vld [vmem:[#allocation7 + $0x60] sm:$0xff]
    %v939 = vld [vmem:[#allocation7 + $0x68] sm:$0xff]
    %v940 = vld [vmem:[#allocation7 + $0x70] sm:$0xff]
    %v941 = vld [vmem:[#allocation7 + $0x78] sm:$0xff]
    %v942 = vld [vmem:[#allocation7 + $0x80] sm:$0xff]
    %v943 = vld [vmem:[#allocation7 + $0x88] sm:$0xff]
    %v944 = vld [vmem:[#allocation7 + $0x90] sm:$0xff]
    %v945 = vld [vmem:[#allocation7 + $0x98] sm:$0xff]
    %v946 = vld [vmem:[#allocation7 + $0xa0] sm:$0xff]
    %v947 = vld [vmem:[#allocation7 + $0xa8] sm:$0xff]
    %v948 = vld [vmem:[#allocation7 + $0xb0] sm:$0xff]
    %v949 = vld [vmem:[#allocation7 + $0xb8] sm:$0xff]
    %v950 = vld [vmem:[#allocation7 + $0xc0] sm:$0xff]
    %v951 = vld [vmem:[#allocation7 + $0xc8] sm:$0xff]
    %v952 = vld [vmem:[#allocation7 + $0xd0] sm:$0xff]
    %v953 = vld [vmem:[#allocation7 + $0xd8] sm:$0xff]
    %v954 = vld [vmem:[#allocation7 + $0xe0] sm:$0xff]
    %v955 = vld [vmem:[#allocation7 + $0xe8] sm:$0xff]
    %v956 = vld [vmem:[#allocation7 + $0xf0] sm:$0xff]
    %v957 = vld [vmem:[#allocation7 + $0xf8] sm:$0xff]
    %v958 = vld [vmem:[%s9] sm:$0x3]
    %v960 = vlaneseq
    %v961 = vshrl.u32 %v960, 7
    %v962 = vsub.s32 0, %v961
    %v963 = vrot.slane %v958, %v962
    %v964 = vlaneseq
    %v965 = vshrl.u32 %v964, 7
    %v966 = vsub.s32 1, %v965
    %v967 = vrot.slane %v958, %v966
    %v1002 = vunpack.c.l.b16 %v926
    %v1003 = vunpack.c.h.b16 %v926
    %v1004 = vunpack.c.l.b16 %v927
    %v1005 = vunpack.c.h.b16 %v927
    %v1006 = vunpack.c.l.b16 %v928
    %v1007 = vunpack.c.h.b16 %v928
    %v1008 = vunpack.c.l.b16 %v929
    %v1009 = vunpack.c.h.b16 %v929
    %v1010 = vunpack.c.l.b16 %v930
    %v1011 = vunpack.c.h.b16 %v930
    %v1012 = vunpack.c.l.b16 %v931
    %v1013 = vunpack.c.h.b16 %v931
    %v1014 = vunpack.c.l.b16 %v932
    %v1015 = vunpack.c.h.b16 %v932
    %v1016 = vunpack.c.l.b16 %v933
    %v1017 = vunpack.c.h.b16 %v933
    %v1018 = vunpack.c.l.b16 %v934
    %v1019 = vunpack.c.h.b16 %v934
    %v1020 = vunpack.c.l.b16 %v935
    %v1021 = vunpack.c.h.b16 %v935
    %v1022 = vunpack.c.l.b16 %v936
    %v1023 = vunpack.c.h.b16 %v936
    %v1024 = vunpack.c.l.b16 %v937
    %v1025 = vunpack.c.h.b16 %v937
    %v1026 = vunpack.c.l.b16 %v938
    %v1027 = vunpack.c.h.b16 %v938
    %v1028 = vunpack.c.l.b16 %v939
    %v1029 = vunpack.c.h.b16 %v939
    %v1030 = vunpack.c.l.b16 %v940
    %v1031 = vunpack.c.h.b16 %v940
    %v1032 = vunpack.c.l.b16 %v941
    %v1033 = vunpack.c.h.b16 %v941
    %v1034 = vunpack.c.l.b16 %v942
    %v1035 = vunpack.c.h.b16 %v942
    %v1036 = vunpack.c.l.b16 %v943
    %v1037 = vunpack.c.h.b16 %v943
    %v1038 = vunpack.c.l.b16 %v944
    %v1039 = vunpack.c.h.b16 %v944
    %v1040 = vunpack.c.l.b16 %v945
    %v1041 = vunpack.c.h.b16 %v945
    %v1042 = vunpack.c.l.b16 %v946
    %v1043 = vunpack.c.h.b16 %v946
    %v1044 = vunpack.c.l.b16 %v947
    %v1045 = vunpack.c.h.b16 %v947
    %v1046 = vunpack.c.l.b16 %v948
    %v1047 = vunpack.c.h.b16 %v948
    %v1048 = vunpack.c.l.b16 %v949
    %v1049 = vunpack.c.h.b16 %v949
    %v1050 = vunpack.c.l.b16 %v950
    %v1051 = vunpack.c.h.b16 %v950
    %v1052 = vunpack.c.l.b16 %v951
    %v1053 = vunpack.c.h.b16 %v951
    %v1054 = vunpack.c.l.b16 %v952
    %v1055 = vunpack.c.h.b16 %v952
    %v1056 = vunpack.c.l.b16 %v953
    %v1057 = vunpack.c.h.b16 %v953
    %v1058 = vunpack.c.l.b16 %v954
    %v1059 = vunpack.c.h.b16 %v954
    %v1060 = vunpack.c.l.b16 %v955
    %v1061 = vunpack.c.h.b16 %v955
    %v1062 = vunpack.c.l.b16 %v956
    %v1063 = vunpack.c.h.b16 %v956
    %v1064 = vunpack.c.l.b16 %v957
    %v1065 = vunpack.c.h.b16 %v957
    %v1066 = vpack.c.b16 %v1004, %v1002
    %v1067 = vpack.c.b16 %v1005, %v1003
    %v1068 = vpack.c.b16 %v1008, %v1006
    %v1069 = vpack.c.b16 %v1009, %v1007
    %v1070 = vpack.c.b16 %v1012, %v1010
    %v1071 = vpack.c.b16 %v1013, %v1011
    %v1072 = vpack.c.b16 %v1016, %v1014
    %v1073 = vpack.c.b16 %v1017, %v1015
    %v1074 = vpack.c.b16 %v1020, %v1018
    %v1075 = vpack.c.b16 %v1021, %v1019
    %v1076 = vpack.c.b16 %v1024, %v1022
    %v1077 = vpack.c.b16 %v1025, %v1023
    %v1078 = vpack.c.b16 %v1028, %v1026
    %v1079 = vpack.c.b16 %v1029, %v1027
    %v1080 = vpack.c.b16 %v1032, %v1030
    %v1081 = vpack.c.b16 %v1033, %v1031
    %v1082 = vpack.c.b16 %v1036, %v1034
    %v1083 = vpack.c.b16 %v1037, %v1035
    %v1084 = vpack.c.b16 %v1040, %v1038
    %v1085 = vpack.c.b16 %v1041, %v1039
    %v1086 = vpack.c.b16 %v1044, %v1042
    %v1087 = vpack.c.b16 %v1045, %v1043
    %v1088 = vpack.c.b16 %v1048, %v1046
    %v1089 = vpack.c.b16 %v1049, %v1047
    %v1090 = vpack.c.b16 %v1052, %v1050
    %v1091 = vpack.c.b16 %v1053, %v1051
    %v1092 = vpack.c.b16 %v1056, %v1054
    %v1093 = vpack.c.b16 %v1057, %v1055
    %v1094 = vpack.c.b16 %v1060, %v1058
    %v1095 = vpack.c.b16 %v1061, %v1059
    %v1096 = vpack.c.b16 %v1064, %v1062
    %v1097 = vpack.c.b16 %v1065, %v1063
    %1130 = vmatprep.subr.bf16.mxu0 %v1067
    %1131 = vmatpush1.bf16.msra.mxu0 %v1066
    %1132 = vmatprep.subr.bf16.mxu0 %v1069
    %1133 = vmatpush1.bf16.msra.mxu0 %v1068
    %1134 = vmatprep.subr.bf16.mxu0 %v1071
    %1135 = vmatpush1.bf16.msra.mxu0 %v1070
    %1136 = vmatprep.subr.bf16.mxu0 %v1073
    %1137 = vmatpush1.bf16.msra.mxu0 %v1072
    %1138 = vmatprep.subr.bf16.mxu0 %v1075
    %1139 = vmatpush1.bf16.msra.mxu0 %v1074
    %1140 = vmatprep.subr.bf16.mxu0 %v1077
    %1141 = vmatpush1.bf16.msra.mxu0 %v1076
    %1142 = vmatprep.subr.bf16.mxu0 %v1079
    %1143 = vmatpush1.bf16.msra.mxu0 %v1078
    %1144 = vmatprep.subr.bf16.mxu0 %v1081
    %1145 = vmatpush1.bf16.msra.mxu0 %v1080
    %1146 = vmatprep.subr.bf16.mxu0 %v1083
    %1147 = vmatpush1.bf16.msra.mxu0 %v1082
    %1148 = vmatprep.subr.bf16.mxu0 %v1085
    %1149 = vmatpush1.bf16.msra.mxu0 %v1084
    %1150 = vmatprep.subr.bf16.mxu0 %v1087
    %1151 = vmatpush1.bf16.msra.mxu0 %v1086
    %1152 = vmatprep.subr.bf16.mxu0 %v1089
    %1153 = vmatpush1.bf16.msra.mxu0 %v1088
    %1154 = vmatprep.subr.bf16.mxu0 %v1091
    %1155 = vmatpush1.bf16.msra.mxu0 %v1090
    %1156 = vmatprep.subr.bf16.mxu0 %v1093
    %1157 = vmatpush1.bf16.msra.mxu0 %v1092
    %1158 = vmatprep.subr.bf16.mxu0 %v1095
    %1159 = vmatpush1.bf16.msra.mxu0 %v1094
    %1160 = vmatprep.subr.bf16.mxu0 %v1097
    %1161 = vmatpush1.bf16.msra.mxu0 %v1096
    %1162 = vmatprep.mubr.bf16.mxu0 %v925
    %1163 = vmatmul.mubr.bf16.gmra.mrb[0].mxu0 %v924
    %v1164 = vpop.f32.mrb[0].mxu0
    %v1165 = vadd.f32 %v963, %v1164
    %v1166 = vpop.f32.mrb[0].mxu0
    %v1167 = vadd.f32 %v967, %v1166
    %v1168 = vpop.f32.mrb[0].mxu0
    %v1169 = vpop.f32.mrb[0].mxu0
    %1170 = vdwg.mxu0
    %v1171 = vmul.f32 %v1167, 0.5
    %v1172 = vmul.f32 %v1171, 1.442695
    %v1173 = vpow.pop %v1172
    %v1174 = vld [vmem:[%s1] sm:$0xff]
    %v1175 = vmul.f32 %v1173, %v1174
    %v1176 = vadd.f32 %v1165, %v1175
    %v1177 = vpack.c.bf16 %v1176, %v1176
    %v1178 = vld [vmem:[#allocation9] sm:$0xff]
    %v1179 = vld [vmem:[#allocation9 + $0x8] sm:$0xff]
    %v1180 = vld [vmem:[#allocation9 + $0x10] sm:$0xff]
    %v1181 = vld [vmem:[#allocation9 + $0x18] sm:$0xff]
    %v1182 = vld [vmem:[#allocation9 + $0x20] sm:$0xff]
    %v1183 = vld [vmem:[#allocation9 + $0x28] sm:$0xff]
    %v1184 = vld [vmem:[#allocation9 + $0x30] sm:$0xff]
    %v1185 = vld [vmem:[#allocation9 + $0x38] sm:$0xff]
    %v1186 = vld [vmem:[#allocation9 + $0x40] sm:$0xff]
    %v1187 = vld [vmem:[#allocation9 + $0x48] sm:$0xff]
    %v1188 = vld [vmem:[#allocation9 + $0x50] sm:$0xff]
    %v1189 = vld [vmem:[#allocation9 + $0x58] sm:$0xff]
    %v1190 = vld [vmem:[#allocation9 + $0x60] sm:$0xff]
    %v1191 = vld [vmem:[#allocation9 + $0x68] sm:$0xff]
    %v1192 = vld [vmem:[#allocation9 + $0x70] sm:$0xff]
    %v1193 = vld [vmem:[#allocation9 + $0x78] sm:$0xff]
    %v1194 = vld [vmem:[%s11] sm:$0x3]
    %v1196 = vlaneseq
    %v1197 = vshrl.u32 %v1196, 7
    %v1198 = vsub.s32 0, %v1197
    %v1199 = vrot.slane %v1194, %v1198
    %v1200 = vlaneseq
    %v1201 = vshrl.u32 %v1200, 7
    %v1202 = vsub.s32 1, %v1201
    %v1203 = vrot.slane %v1194, %v1202
    %v1222 = vunpack.c.l.b16 %v1178
    %v1223 = vunpack.c.h.b16 %v1178
    %v1224 = vunpack.c.l.b16 %v1179
    %v1225 = vunpack.c.h.b16 %v1179
    %v1226 = vunpack.c.l.b16 %v1180
    %v1227 = vunpack.c.h.b16 %v1180
    %v1228 = vunpack.c.l.b16 %v1181
    %v1229 = vunpack.c.h.b16 %v1181
    %v1230 = vunpack.c.l.b16 %v1182
    %v1231 = vunpack.c.h.b16 %v1182
    %v1232 = vunpack.c.l.b16 %v1183
    %v1233 = vunpack.c.h.b16 %v1183
    %v1234 = vunpack.c.l.b16 %v1184
    %v1235 = vunpack.c.h.b16 %v1184
    %v1236 = vunpack.c.l.b16 %v1185
    %v1237 = vunpack.c.h.b16 %v1185
    %v1238 = vunpack.c.l.b16 %v1186
    %v1239 = vunpack.c.h.b16 %v1186
    %v1240 = vunpack.c.l.b16 %v1187
    %v1241 = vunpack.c.h.b16 %v1187
    %v1242 = vunpack.c.l.b16 %v1188
    %v1243 = vunpack.c.h.b16 %v1188
    %v1244 = vunpack.c.l.b16 %v1189
    %v1245 = vunpack.c.h.b16 %v1189
    %v1246 = vunpack.c.l.b16 %v1190
    %v1247 = vunpack.c.h.b16 %v1190
    %v1248 = vunpack.c.l.b16 %v1191
    %v1249 = vunpack.c.h.b16 %v1191
    %v1250 = vunpack.c.l.b16 %v1192
    %v1251 = vunpack.c.h.b16 %v1192
    %v1252 = vunpack.c.l.b16 %v1193
    %v1253 = vunpack.c.h.b16 %v1193
    %v1254 = vpack.c.b16 %v1224, %v1222
    %v1255 = vpack.c.b16 %v1225, %v1223
    %v1256 = vpack.c.b16 %v1228, %v1226
    %v1257 = vpack.c.b16 %v1229, %v1227
    %v1258 = vpack.c.b16 %v1232, %v1230
    %v1259 = vpack.c.b16 %v1233, %v1231
    %v1260 = vpack.c.b16 %v1236, %v1234
    %v1261 = vpack.c.b16 %v1237, %v1235
    %v1262 = vpack.c.b16 %v1240, %v1238
    %v1263 = vpack.c.b16 %v1241, %v1239
    %v1264 = vpack.c.b16 %v1244, %v1242
    %v1265 = vpack.c.b16 %v1245, %v1243
    %v1266 = vpack.c.b16 %v1248, %v1246
    %v1267 = vpack.c.b16 %v1249, %v1247
    %v1268 = vpack.c.b16 %v1252, %v1250
    %v1269 = vpack.c.b16 %v1253, %v1251
    %1286 = vmatprep.subr.bf16.mxu0 %v1255
    %1287 = vmatpush1.bf16.msra.mxu0 %v1254
    %1288 = vmatprep.subr.bf16.mxu0 %v1257
    %1289 = vmatpush1.bf16.msra.mxu0 %v1256
    %1290 = vmatprep.subr.bf16.mxu0 %v1259
    %1291 = vmatpush1.bf16.msra.mxu0 %v1258
    %1292 = vmatprep.subr.bf16.mxu0 %v1261
    %1293 = vmatpush1.bf16.msra.mxu0 %v1260
    %1294 = vmatprep.subr.bf16.mxu0 %v1263
    %1295 = vmatpush1.bf16.msra.mxu0 %v1262
    %1296 = vmatprep.subr.bf16.mxu0 %v1265
    %1297 = vmatpush1.bf16.msra.mxu0 %v1264
    %1298 = vmatprep.subr.bf16.mxu0 %v1267
    %1299 = vmatpush1.bf16.msra.mxu0 %v1266
    %1300 = vmatprep.subr.bf16.mxu0 %v1269
    %1301 = vmatpush1.bf16.msra.mxu0 %v1268
    %1302 = vmatprep.subr.bf16.mxu0 0
    %1303 = vmatpush1.bf16.msra.mxu0 0
    %1304 = vmatprep.subr.bf16.mxu0 0
    %1305 = vmatpush1.bf16.msra.mxu0 0
    %1306 = vmatprep.subr.bf16.mxu0 0
    %1307 = vmatpush1.bf16.msra.mxu0 0
    %1308 = vmatprep.subr.bf16.mxu0 0
    %1309 = vmatpush1.bf16.msra.mxu0 0
    %1310 = vmatprep.subr.bf16.mxu0 0
    %1311 = vmatpush1.bf16.msra.mxu0 0
    %1312 = vmatprep.subr.bf16.mxu0 0
    %1313 = vmatpush1.bf16.msra.mxu0 0
    %1314 = vmatprep.subr.bf16.mxu0 0
    %1315 = vmatpush1.bf16.msra.mxu0 0
    %1316 = vmatprep.subr.bf16.mxu0 0
    %1317 = vmatpush1.bf16.msra.mxu0 0
    %1318 = vmatprep.mubr.bf16.mxu0 0
    %1319 = vmatmul.mubr.bf16.gmra.mrb[0].mxu0 %v1177
    %v1320 = vpop.f32.mrb[0].mxu0
    %v1321 = vadd.f32 %v1199, %v1320
    %v1322 = vpop.f32.mrb[0].mxu0
    %v1323 = vadd.f32 %v1203, %v1322
    %v1324 = vpop.f32.mrb[0].mxu0
    %v1325 = vpop.f32.mrb[0].mxu0
    %1326 = vdwg.mxu0
    %v1327 = vmax.f32 %v1321, 0.0
    %v1328 = vmax.f32 %v1323, 0.0
    %v1329 = vpack.c.bf16 %v1327, %v1327
    %v1330 = vpack.c.bf16 %v1328, %v1328
    %v1331 = vld [vmem:[#allocation10] sm:$0xff]
    %v1332 = vld [vmem:[#allocation10 + $0x8] sm:$0xff]
    %v1333 = vld [vmem:[#allocation10 + $0x10] sm:$0xff]
    %v1334 = vld [vmem:[#allocation10 + $0x18] sm:$0xff]
    %v1335 = vld [vmem:[#allocation10 + $0x20] sm:$0xff]
    %v1336 = vld [vmem:[#allocation10 + $0x28] sm:$0xff]
    %v1337 = vld [vmem:[#allocation10 + $0x30] sm:$0xff]
    %v1338 = vld [vmem:[#allocation10 + $0x38] sm:$0xff]
    %v1339 = vld [vmem:[#allocation10 + $0x40] sm:$0xff]
    %v1340 = vld [vmem:[#allocation10 + $0x48] sm:$0xff]
    %v1341 = vld [vmem:[#allocation10 + $0x50] sm:$0xff]
    %v1342 = vld [vmem:[#allocation10 + $0x58] sm:$0xff]
    %v1343 = vld [vmem:[#allocation10 + $0x60] sm:$0xff]
    %v1344 = vld [vmem:[#allocation10 + $0x68] sm:$0xff]
    %v1345 = vld [vmem:[#allocation10 + $0x70] sm:$0xff]
    %v1346 = vld [vmem:[#allocation10 + $0x78] sm:$0xff]
    %v1347 = vld [vmem:[#allocation10 + $0x80] sm:$0xff]
    %v1348 = vld [vmem:[#allocation10 + $0x88] sm:$0xff]
    %v1349 = vld [vmem:[#allocation10 + $0x90] sm:$0xff]
    %v1350 = vld [vmem:[#allocation10 + $0x98] sm:$0xff]
    %v1351 = vld [vmem:[#allocation10 + $0xa0] sm:$0xff]
    %v1352 = vld [vmem:[#allocation10 + $0xa8] sm:$0xff]
    %v1353 = vld [vmem:[#allocation10 + $0xb0] sm:$0xff]
    %v1354 = vld [vmem:[#allocation10 + $0xb8] sm:$0xff]
    %v1355 = vld [vmem:[#allocation10 + $0xc0] sm:$0xff]
    %v1356 = vld [vmem:[#allocation10 + $0xc8] sm:$0xff]
    %v1357 = vld [vmem:[#allocation10 + $0xd0] sm:$0xff]
    %v1358 = vld [vmem:[#allocation10 + $0xd8] sm:$0xff]
    %v1359 = vld [vmem:[#allocation10 + $0xe0] sm:$0xff]
    %v1360 = vld [vmem:[#allocation10 + $0xe8] sm:$0xff]
    %v1361 = vld [vmem:[#allocation10 + $0xf0] sm:$0xff]
    %v1362 = vld [vmem:[#allocation10 + $0xf8] sm:$0xff]
    %v1363 = vld [vmem:[%s13] sm:$0x3]
    %v1365 = vlaneseq
    %v1366 = vshrl.u32 %v1365, 7
    %v1367 = vsub.s32 0, %v1366
    %v1368 = vrot.slane %v1363, %v1367
    %v1369 = vlaneseq
    %v1370 = vshrl.u32 %v1369, 7
    %v1371 = vsub.s32 1, %v1370
    %v1372 = vrot.slane %v1363, %v1371
    %v1407 = vunpack.c.l.b16 %v1331
    %v1408 = vunpack.c.h.b16 %v1331
    %v1409 = vunpack.c.l.b16 %v1332
    %v1410 = vunpack.c.h.b16 %v1332
    %v1411 = vunpack.c.l.b16 %v1333
    %v1412 = vunpack.c.h.b16 %v1333
    %v1413 = vunpack.c.l.b16 %v1334
    %v1414 = vunpack.c.h.b16 %v1334
    %v1415 = vunpack.c.l.b16 %v1335
    %v1416 = vunpack.c.h.b16 %v1335
    %v1417 = vunpack.c.l.b16 %v1336
    %v1418 = vunpack.c.h.b16 %v1336
    %v1419 = vunpack.c.l.b16 %v1337
    %v1420 = vunpack.c.h.b16 %v1337
    %v1421 = vunpack.c.l.b16 %v1338
    %v1422 = vunpack.c.h.b16 %v1338
    %v1423 = vunpack.c.l.b16 %v1339
    %v1424 = vunpack.c.h.b16 %v1339
    %v1425 = vunpack.c.l.b16 %v1340
    %v1426 = vunpack.c.h.b16 %v1340
    %v1427 = vunpack.c.l.b16 %v1341
    %v1428 = vunpack.c.h.b16 %v1341
    %v1429 = vunpack.c.l.b16 %v1342
    %v1430 = vunpack.c.h.b16 %v1342
    %v1431 = vunpack.c.l.b16 %v1343
    %v1432 = vunpack.c.h.b16 %v1343
    %v1433 = vunpack.c.l.b16 %v1344
    %v1434 = vunpack.c.h.b16 %v1344
    %v1435 = vunpack.c.l.b16 %v1345
    %v1436 = vunpack.c.h.b16 %v1345
    %v1437 = vunpack.c.l.b16 %v1346
    %v1438 = vunpack.c.h.b16 %v1346
    %v1439 = vunpack.c.l.b16 %v1347
    %v1440 = vunpack.c.h.b16 %v1347
    %v1441 = vunpack.c.l.b16 %v1348
    %v1442 = vunpack.c.h.b16 %v1348
    %v1443 = vunpack.c.l.b16 %v1349
    %v1444 = vunpack.c.h.b16 %v1349
    %v1445 = vunpack.c.l.b16 %v1350
    %v1446 = vunpack.c.h.b16 %v1350
    %v1447 = vunpack.c.l.b16 %v1351
    %v1448 = vunpack.c.h.b16 %v1351
    %v1449 = vunpack.c.l.b16 %v1352
    %v1450 = vunpack.c.h.b16 %v1352
    %v1451 = vunpack.c.l.b16 %v1353
    %v1452 = vunpack.c.h.b16 %v1353
    %v1453 = vunpack.c.l.b16 %v1354
    %v1454 = vunpack.c.h.b16 %v1354
    %v1455 = vunpack.c.l.b16 %v1355
    %v1456 = vunpack.c.h.b16 %v1355
    %v1457 = vunpack.c.l.b16 %v1356
    %v1458 = vunpack.c.h.b16 %v1356
    %v1459 = vunpack.c.l.b16 %v1357
    %v1460 = vunpack.c.h.b16 %v1357
    %v1461 = vunpack.c.l.b16 %v1358
    %v1462 = vunpack.c.h.b16 %v1358
    %v1463 = vunpack.c.l.b16 %v1359
    %v1464 = vunpack.c.h.b16 %v1359
    %v1465 = vunpack.c.l.b16 %v1360
    %v1466 = vunpack.c.h.b16 %v1360
    %v1467 = vunpack.c.l.b16 %v1361
    %v1468 = vunpack.c.h.b16 %v1361
    %v1469 = vunpack.c.l.b16 %v1362
    %v1470 = vunpack.c.h.b16 %v1362
    %v1471 = vpack.c.b16 %v1409, %v1407
    %v1472 = vpack.c.b16 %v1410, %v1408
    %v1473 = vpack.c.b16 %v1413, %v1411
    %v1474 = vpack.c.b16 %v1414, %v1412
    %v1475 = vpack.c.b16 %v1417, %v1415
    %v1476 = vpack.c.b16 %v1418, %v1416
    %v1477 = vpack.c.b16 %v1421, %v1419
    %v1478 = vpack.c.b16 %v1422, %v1420
    %v1479 = vpack.c.b16 %v1425, %v1423
    %v1480 = vpack.c.b16 %v1426, %v1424
    %v1481 = vpack.c.b16 %v1429, %v1427
    %v1482 = vpack.c.b16 %v1430, %v1428
    %v1483 = vpack.c.b16 %v1433, %v1431
    %v1484 = vpack.c.b16 %v1434, %v1432
    %v1485 = vpack.c.b16 %v1437, %v1435
    %v1486 = vpack.c.b16 %v1438, %v1436
    %v1487 = vpack.c.b16 %v1441, %v1439
    %v1488 = vpack.c.b16 %v1442, %v1440
    %v1489 = vpack.c.b16 %v1445, %v1443
    %v1490 = vpack.c.b16 %v1446, %v1444
    %v1491 = vpack.c.b16 %v1449, %v1447
    %v1492 = vpack.c.b16 %v1450, %v1448
    %v1493 = vpack.c.b16 %v1453, %v1451
    %v1494 = vpack.c.b16 %v1454, %v1452
    %v1495 = vpack.c.b16 %v1457, %v1455
    %v1496 = vpack.c.b16 %v1458, %v1456
    %v1497 = vpack.c.b16 %v1461, %v1459
    %v1498 = vpack.c.b16 %v1462, %v1460
    %v1499 = vpack.c.b16 %v1465, %v1463
    %v1500 = vpack.c.b16 %v1466, %v1464
    %v1501 = vpack.c.b16 %v1469, %v1467
    %v1502 = vpack.c.b16 %v1470, %v1468
    %1535 = vmatprep.subr.bf16.mxu0 %v1472
    %1536 = vmatpush1.bf16.msra.mxu0 %v1471
    %1537 = vmatprep.subr.bf16.mxu0 %v1474
    %1538 = vmatpush1.bf16.msra.mxu0 %v1473
    %1539 = vmatprep.subr.bf16.mxu0 %v1476
    %1540 = vmatpush1.bf16.msra.mxu0 %v1475
    %1541 = vmatprep.subr.bf16.mxu0 %v1478
    %1542 = vmatpush1.bf16.msra.mxu0 %v1477
    %1543 = vmatprep.subr.bf16.mxu0 %v1480
    %1544 = vmatpush1.bf16.msra.mxu0 %v1479
    %1545 = vmatprep.subr.bf16.mxu0 %v1482
    %1546 = vmatpush1.bf16.msra.mxu0 %v1481
    %1547 = vmatprep.subr.bf16.mxu0 %v1484
    %1548 = vmatpush1.bf16.msra.mxu0 %v1483
    %1549 = vmatprep.subr.bf16.mxu0 %v1486
    %1550 = vmatpush1.bf16.msra.mxu0 %v1485
    %1551 = vmatprep.subr.bf16.mxu0 %v1488
    %1552 = vmatpush1.bf16.msra.mxu0 %v1487
    %1553 = vmatprep.subr.bf16.mxu0 %v1490
    %1554 = vmatpush1.bf16.msra.mxu0 %v1489
    %1555 = vmatprep.subr.bf16.mxu0 %v1492
    %1556 = vmatpush1.bf16.msra.mxu0 %v1491
    %1557 = vmatprep.subr.bf16.mxu0 %v1494
    %1558 = vmatpush1.bf16.msra.mxu0 %v1493
    %1559 = vmatprep.subr.bf16.mxu0 %v1496
    %1560 = vmatpush1.bf16.msra.mxu0 %v1495
    %1561 = vmatprep.subr.bf16.mxu0 %v1498
    %1562 = vmatpush1.bf16.msra.mxu0 %v1497
    %1563 = vmatprep.subr.bf16.mxu0 %v1500
    %1564 = vmatpush1.bf16.msra.mxu0 %v1499
    %1565 = vmatprep.subr.bf16.mxu0 %v1502
    %1566 = vmatpush1.bf16.msra.mxu0 %v1501
    %1567 = vmatprep.mubr.bf16.mxu0 %v1330
    %1568 = vmatmul.mubr.bf16.gmra.mrb[0].mxu0 %v1329
    %v1569 = vpop.f32.mrb[0].mxu0
    %v1570 = vadd.f32 %v1368, %v1569
    %v1571 = vpop.f32.mrb[0].mxu0
    %v1572 = vadd.f32 %v1372, %v1571
    %v1573 = vpop.f32.mrb[0].mxu0
    %v1574 = vpop.f32.mrb[0].mxu0
    %1575 = vdwg.mxu0
    %v1576 = vmax.f32 %v1570, 0.0
    %v1577 = vmax.f32 %v1572, 0.0
    %v1578 = vpack.c.bf16 %v1576, %v1576
    %v1579 = vpack.c.bf16 %v1577, %v1577
    %v1580 = vld [vmem:[#allocation12] sm:$0xff]
    %v1581 = vld [vmem:[#allocation12 + $0x8] sm:$0xff]
    %v1582 = vld [vmem:[#allocation12 + $0x10] sm:$0xff]
    %v1583 = vld [vmem:[#allocation12 + $0x18] sm:$0xff]
    %v1584 = vld [vmem:[#allocation12 + $0x20] sm:$0xff]
    %v1585 = vld [vmem:[#allocation12 + $0x28] sm:$0xff]
    %v1586 = vld [vmem:[#allocation12 + $0x30] sm:$0xff]
    %v1587 = vld [vmem:[#allocation12 + $0x38] sm:$0xff]
    %v1588 = vld [vmem:[#allocation12 + $0x40] sm:$0xff]
    %v1589 = vld [vmem:[#allocation12 + $0x48] sm:$0xff]
    %v1590 = vld [vmem:[#allocation12 + $0x50] sm:$0xff]
    %v1591 = vld [vmem:[#allocation12 + $0x58] sm:$0xff]
    %v1592 = vld [vmem:[#allocation12 + $0x60] sm:$0xff]
    %v1593 = vld [vmem:[#allocation12 + $0x68] sm:$0xff]
    %v1594 = vld [vmem:[#allocation12 + $0x70] sm:$0xff]
    %v1595 = vld [vmem:[#allocation12 + $0x78] sm:$0xff]
    %v1596 = vld [vmem:[#allocation12 + $0x80] sm:$0xff]
    %v1597 = vld [vmem:[#allocation12 + $0x88] sm:$0xff]
    %v1598 = vld [vmem:[#allocation12 + $0x90] sm:$0xff]
    %v1599 = vld [vmem:[#allocation12 + $0x98] sm:$0xff]
    %v1600 = vld [vmem:[#allocation12 + $0xa0] sm:$0xff]
    %v1601 = vld [vmem:[#allocation12 + $0xa8] sm:$0xff]
    %v1602 = vld [vmem:[#allocation12 + $0xb0] sm:$0xff]
    %v1603 = vld [vmem:[#allocation12 + $0xb8] sm:$0xff]
    %v1604 = vld [vmem:[#allocation12 + $0xc0] sm:$0xff]
    %v1605 = vld [vmem:[#allocation12 + $0xc8] sm:$0xff]
    %v1606 = vld [vmem:[#allocation12 + $0xd0] sm:$0xff]
    %v1607 = vld [vmem:[#allocation12 + $0xd8] sm:$0xff]
    %v1608 = vld [vmem:[#allocation12 + $0xe0] sm:$0xff]
    %v1609 = vld [vmem:[#allocation12 + $0xe8] sm:$0xff]
    %v1610 = vld [vmem:[#allocation12 + $0xf0] sm:$0xff]
    %v1611 = vld [vmem:[#allocation12 + $0xf8] sm:$0xff]
    %v1612 = vld [vmem:[%s15] sm:$0x3]
    %v1614 = vlaneseq
    %v1615 = vshrl.u32 %v1614, 7
    %v1616 = vsub.s32 0, %v1615
    %v1617 = vrot.slane %v1612, %v1616
    %v1618 = vlaneseq
    %v1619 = vshrl.u32 %v1618, 7
    %v1620 = vsub.s32 1, %v1619
    %v1621 = vrot.slane %v1612, %v1620
    %v1656 = vunpack.c.l.b16 %v1580
    %v1657 = vunpack.c.h.b16 %v1580
    %v1658 = vunpack.c.l.b16 %v1581
    %v1659 = vunpack.c.h.b16 %v1581
    %v1660 = vunpack.c.l.b16 %v1582
    %v1661 = vunpack.c.h.b16 %v1582
    %v1662 = vunpack.c.l.b16 %v1583
    %v1663 = vunpack.c.h.b16 %v1583
    %v1664 = vunpack.c.l.b16 %v1584
    %v1665 = vunpack.c.h.b16 %v1584
    %v1666 = vunpack.c.l.b16 %v1585
    %v1667 = vunpack.c.h.b16 %v1585
    %v1668 = vunpack.c.l.b16 %v1586
    %v1669 = vunpack.c.h.b16 %v1586
    %v1670 = vunpack.c.l.b16 %v1587
    %v1671 = vunpack.c.h.b16 %v1587
    %v1672 = vunpack.c.l.b16 %v1588
    %v1673 = vunpack.c.h.b16 %v1588
    %v1674 = vunpack.c.l.b16 %v1589
    %v1675 = vunpack.c.h.b16 %v1589
    %v1676 = vunpack.c.l.b16 %v1590
    %v1677 = vunpack.c.h.b16 %v1590
    %v1678 = vunpack.c.l.b16 %v1591
    %v1679 = vunpack.c.h.b16 %v1591
    %v1680 = vunpack.c.l.b16 %v1592
    %v1681 = vunpack.c.h.b16 %v1592
    %v1682 = vunpack.c.l.b16 %v1593
    %v1683 = vunpack.c.h.b16 %v1593
    %v1684 = vunpack.c.l.b16 %v1594
    %v1685 = vunpack.c.h.b16 %v1594
    %v1686 = vunpack.c.l.b16 %v1595
    %v1687 = vunpack.c.h.b16 %v1595
    %v1688 = vunpack.c.l.b16 %v1596
    %v1689 = vunpack.c.h.b16 %v1596
    %v1690 = vunpack.c.l.b16 %v1597
    %v1691 = vunpack.c.h.b16 %v1597
    %v1692 = vunpack.c.l.b16 %v1598
    %v1693 = vunpack.c.h.b16 %v1598
    %v1694 = vunpack.c.l.b16 %v1599
    %v1695 = vunpack.c.h.b16 %v1599
    %v1696 = vunpack.c.l.b16 %v1600
    %v1697 = vunpack.c.h.b16 %v1600
    %v1698 = vunpack.c.l.b16 %v1601
    %v1699 = vunpack.c.h.b16 %v1601
    %v1700 = vunpack.c.l.b16 %v1602
    %v1701 = vunpack.c.h.b16 %v1602
    %v1702 = vunpack.c.l.b16 %v1603
    %v1703 = vunpack.c.h.b16 %v1603
    %v1704 = vunpack.c.l.b16 %v1604
    %v1705 = vunpack.c.h.b16 %v1604
    %v1706 = vunpack.c.l.b16 %v1605
    %v1707 = vunpack.c.h.b16 %v1605
    %v1708 = vunpack.c.l.b16 %v1606
    %v1709 = vunpack.c.h.b16 %v1606
    %v1710 = vunpack.c.l.b16 %v1607
    %v1711 = vunpack.c.h.b16 %v1607
    %v1712 = vunpack.c.l.b16 %v1608
    %v1713 = vunpack.c.h.b16 %v1608
    %v1714 = vunpack.c.l.b16 %v1609
    %v1715 = vunpack.c.h.b16 %v1609
    %v1716 = vunpack.c.l.b16 %v1610
    %v1717 = vunpack.c.h.b16 %v1610
    %v1718 = vunpack.c.l.b16 %v1611
    %v1719 = vunpack.c.h.b16 %v1611
    %v1720 = vpack.c.b16 %v1658, %v1656
    %v1721 = vpack.c.b16 %v1659, %v1657
    %v1722 = vpack.c.b16 %v1662, %v1660
    %v1723 = vpack.c.b16 %v1663, %v1661
    %v1724 = vpack.c.b16 %v1666, %v1664
    %v1725 = vpack.c.b16 %v1667, %v1665
    %v1726 = vpack.c.b16 %v1670, %v1668
    %v1727 = vpack.c.b16 %v1671, %v1669
    %v1728 = vpack.c.b16 %v1674, %v1672
    %v1729 = vpack.c.b16 %v1675, %v1673
    %v1730 = vpack.c.b16 %v1678, %v1676
    %v1731 = vpack.c.b16 %v1679, %v1677
    %v1732 = vpack.c.b16 %v1682, %v1680
    %v1733 = vpack.c.b16 %v1683, %v1681
    %v1734 = vpack.c.b16 %v1686, %v1684
    %v1735 = vpack.c.b16 %v1687, %v1685
    %v1736 = vpack.c.b16 %v1690, %v1688
    %v1737 = vpack.c.b16 %v1691, %v1689
    %v1738 = vpack.c.b16 %v1694, %v1692
    %v1739 = vpack.c.b16 %v1695, %v1693
    %v1740 = vpack.c.b16 %v1698, %v1696
    %v1741 = vpack.c.b16 %v1699, %v1697
    %v1742 = vpack.c.b16 %v1702, %v1700
    %v1743 = vpack.c.b16 %v1703, %v1701
    %v1744 = vpack.c.b16 %v1706, %v1704
    %v1745 = vpack.c.b16 %v1707, %v1705
    %v1746 = vpack.c.b16 %v1710, %v1708
    %v1747 = vpack.c.b16 %v1711, %v1709
    %v1748 = vpack.c.b16 %v1714, %v1712
    %v1749 = vpack.c.b16 %v1715, %v1713
    %v1750 = vpack.c.b16 %v1718, %v1716
    %v1751 = vpack.c.b16 %v1719, %v1717
    %1784 = vmatprep.subr.bf16.mxu0 %v1721
    %1785 = vmatpush1.bf16.msra.mxu0 %v1720
    %1786 = vmatprep.subr.bf16.mxu0 %v1723
    %1787 = vmatpush1.bf16.msra.mxu0 %v1722
    %1788 = vmatprep.subr.bf16.mxu0 %v1725
    %1789 = vmatpush1.bf16.msra.mxu0 %v1724
    %1790 = vmatprep.subr.bf16.mxu0 %v1727
    %1791 = vmatpush1.bf16.msra.mxu0 %v1726
    %1792 = vmatprep.subr.bf16.mxu0 %v1729
    %1793 = vmatpush1.bf16.msra.mxu0 %v1728
    %1794 = vmatprep.subr.bf16.mxu0 %v1731
    %1795 = vmatpush1.bf16.msra.mxu0 %v1730
    %1796 = vmatprep.subr.bf16.mxu0 %v1733
    %1797 = vmatpush1.bf16.msra.mxu0 %v1732
    %1798 = vmatprep.subr.bf16.mxu0 %v1735
    %1799 = vmatpush1.bf16.msra.mxu0 %v1734
    %1800 = vmatprep.subr.bf16.mxu0 %v1737
    %1801 = vmatpush1.bf16.msra.mxu0 %v1736
    %1802 = vmatprep.subr.bf16.mxu0 %v1739
    %1803 = vmatpush1.bf16.msra.mxu0 %v1738
    %1804 = vmatprep.subr.bf16.mxu0 %v1741
    %1805 = vmatpush1.bf16.msra.mxu0 %v1740
    %1806 = vmatprep.subr.bf16.mxu0 %v1743
    %1807 = vmatpush1.bf16.msra.mxu0 %v1742
    %1808 = vmatprep.subr.bf16.mxu0 %v1745
    %1809 = vmatpush1.bf16.msra.mxu0 %v1744
    %1810 = vmatprep.subr.bf16.mxu0 %v1747
    %1811 = vmatpush1.bf16.msra.mxu0 %v1746
    %1812 = vmatprep.subr.bf16.mxu0 %v1749
    %1813 = vmatpush1.bf16.msra.mxu0 %v1748
    %1814 = vmatprep.subr.bf16.mxu0 %v1751
    %1815 = vmatpush1.bf16.msra.mxu0 %v1750
    %1816 = vmatprep.mubr.bf16.mxu0 %v1579
    %1817 = vmatmul.mubr.bf16.gmra.mrb[0].mxu0 %v1578
    %v1818 = vpop.f32.mrb[0].mxu0
    %v1819 = vadd.f32 %v1617, %v1818
    %v1820 = vpop.f32.mrb[0].mxu0
    %v1821 = vadd.f32 %v1621, %v1820
    %v1822 = vpop.f32.mrb[0].mxu0
    %v1823 = vpop.f32.mrb[0].mxu0
    %1824 = vdwg.mxu0
    %v1825 = vmax.f32 %v1819, 0.0
    %v1826 = vmax.f32 %v1821, 0.0
    %v1827 = vpack.c.bf16 %v1825, %v1825
    %v1828 = vpack.c.bf16 %v1826, %v1826
    %v1829 = vld [vmem:[#allocation13] sm:$0xff]
    %v1830 = vld [vmem:[#allocation13 + $0x8] sm:$0xff]
    %v1831 = vld [vmem:[#allocation13 + $0x10] sm:$0xff]
    %v1832 = vld [vmem:[#allocation13 + $0x18] sm:$0xff]
    %v1833 = vld [vmem:[#allocation13 + $0x20] sm:$0xff]
    %v1834 = vld [vmem:[#allocation13 + $0x28] sm:$0xff]
    %v1835 = vld [vmem:[#allocation13 + $0x30] sm:$0xff]
    %v1836 = vld [vmem:[#allocation13 + $0x38] sm:$0xff]
    %v1837 = vld [vmem:[#allocation13 + $0x40] sm:$0xff]
    %v1838 = vld [vmem:[#allocation13 + $0x48] sm:$0xff]
    %v1839 = vld [vmem:[#allocation13 + $0x50] sm:$0xff]
    %v1840 = vld [vmem:[#allocation13 + $0x58] sm:$0xff]
    %v1841 = vld [vmem:[#allocation13 + $0x60] sm:$0xff]
    %v1842 = vld [vmem:[#allocation13 + $0x68] sm:$0xff]
    %v1843 = vld [vmem:[#allocation13 + $0x70] sm:$0xff]
    %v1844 = vld [vmem:[#allocation13 + $0x78] sm:$0xff]
    %v1845 = vld [vmem:[#allocation13 + $0x80] sm:$0xff]
    %v1846 = vld [vmem:[#allocation13 + $0x88] sm:$0xff]
    %v1847 = vld [vmem:[#allocation13 + $0x90] sm:$0xff]
    %v1848 = vld [vmem:[#allocation13 + $0x98] sm:$0xff]
    %v1849 = vld [vmem:[#allocation13 + $0xa0] sm:$0xff]
    %v1850 = vld [vmem:[#allocation13 + $0xa8] sm:$0xff]
    %v1851 = vld [vmem:[#allocation13 + $0xb0] sm:$0xff]
    %v1852 = vld [vmem:[#allocation13 + $0xb8] sm:$0xff]
    %v1853 = vld [vmem:[#allocation13 + $0xc0] sm:$0xff]
    %v1854 = vld [vmem:[#allocation13 + $0xc8] sm:$0xff]
    %v1855 = vld [vmem:[#allocation13 + $0xd0] sm:$0xff]
    %v1856 = vld [vmem:[#allocation13 + $0xd8] sm:$0xff]
    %v1857 = vld [vmem:[#allocation13 + $0xe0] sm:$0xff]
    %v1858 = vld [vmem:[#allocation13 + $0xe8] sm:$0xff]
    %v1859 = vld [vmem:[#allocation13 + $0xf0] sm:$0xff]
    %v1860 = vld [vmem:[#allocation13 + $0xf8] sm:$0xff]
    %v1861 = vld [vmem:[%s17] sm:$0x3]
    %v1863 = vlaneseq
    %v1864 = vshrl.u32 %v1863, 7
    %v1865 = vsub.s32 0, %v1864
    %v1866 = vrot.slane %v1861, %v1865
    %v1867 = vlaneseq
    %v1868 = vshrl.u32 %v1867, 7
    %v1869 = vsub.s32 1, %v1868
    %v1870 = vrot.slane %v1861, %v1869
    %v1905 = vunpack.c.l.b16 %v1829
    %v1906 = vunpack.c.h.b16 %v1829
    %v1907 = vunpack.c.l.b16 %v1830
    %v1908 = vunpack.c.h.b16 %v1830
    %v1909 = vunpack.c.l.b16 %v1831
    %v1910 = vunpack.c.h.b16 %v1831
    %v1911 = vunpack.c.l.b16 %v1832
    %v1912 = vunpack.c.h.b16 %v1832
    %v1913 = vunpack.c.l.b16 %v1833
    %v1914 = vunpack.c.h.b16 %v1833
    %v1915 = vunpack.c.l.b16 %v1834
    %v1916 = vunpack.c.h.b16 %v1834
    %v1917 = vunpack.c.l.b16 %v1835
    %v1918 = vunpack.c.h.b16 %v1835
    %v1919 = vunpack.c.l.b16 %v1836
    %v1920 = vunpack.c.h.b16 %v1836
    %v1921 = vunpack.c.l.b16 %v1837
    %v1922 = vunpack.c.h.b16 %v1837
    %v1923 = vunpack.c.l.b16 %v1838
    %v1924 = vunpack.c.h.b16 %v1838
    %v1925 = vunpack.c.l.b16 %v1839
    %v1926 = vunpack.c.h.b16 %v1839
    %v1927 = vunpack.c.l.b16 %v1840
    %v1928 = vunpack.c.h.b16 %v1840
    %v1929 = vunpack.c.l.b16 %v1841
    %v1930 = vunpack.c.h.b16 %v1841
    %v1931 = vunpack.c.l.b16 %v1842
    %v1932 = vunpack.c.h.b16 %v1842
    %v1933 = vunpack.c.l.b16 %v1843
    %v1934 = vunpack.c.h.b16 %v1843
    %v1935 = vunpack.c.l.b16 %v1844
    %v1936 = vunpack.c.h.b16 %v1844
    %v1937 = vunpack.c.l.b16 %v1845
    %v1938 = vunpack.c.h.b16 %v1845
    %v1939 = vunpack.c.l.b16 %v1846
    %v1940 = vunpack.c.h.b16 %v1846
    %v1941 = vunpack.c.l.b16 %v1847
    %v1942 = vunpack.c.h.b16 %v1847
    %v1943 = vunpack.c.l.b16 %v1848
    %v1944 = vunpack.c.h.b16 %v1848
    %v1945 = vunpack.c.l.b16 %v1849
    %v1946 = vunpack.c.h.b16 %v1849
    %v1947 = vunpack.c.l.b16 %v1850
    %v1948 = vunpack.c.h.b16 %v1850
    %v1949 = vunpack.c.l.b16 %v1851
    %v1950 = vunpack.c.h.b16 %v1851
    %v1951 = vunpack.c.l.b16 %v1852
    %v1952 = vunpack.c.h.b16 %v1852
    %v1953 = vunpack.c.l.b16 %v1853
    %v1954 = vunpack.c.h.b16 %v1853
    %v1955 = vunpack.c.l.b16 %v1854
    %v1956 = vunpack.c.h.b16 %v1854
    %v1957 = vunpack.c.l.b16 %v1855
    %v1958 = vunpack.c.h.b16 %v1855
    %v1959 = vunpack.c.l.b16 %v1856
    %v1960 = vunpack.c.h.b16 %v1856
    %v1961 = vunpack.c.l.b16 %v1857
    %v1962 = vunpack.c.h.b16 %v1857
    %v1963 = vunpack.c.l.b16 %v1858
    %v1964 = vunpack.c.h.b16 %v1858
    %v1965 = vunpack.c.l.b16 %v1859
    %v1966 = vunpack.c.h.b16 %v1859
    %v1967 = vunpack.c.l.b16 %v1860
    %v1968 = vunpack.c.h.b16 %v1860
    %v1969 = vpack.c.b16 %v1907, %v1905
    %v1970 = vpack.c.b16 %v1908, %v1906
    %v1971 = vpack.c.b16 %v1911, %v1909
    %v1972 = vpack.c.b16 %v1912, %v1910
    %v1973 = vpack.c.b16 %v1915, %v1913
    %v1974 = vpack.c.b16 %v1916, %v1914
    %v1975 = vpack.c.b16 %v1919, %v1917
    %v1976 = vpack.c.b16 %v1920, %v1918
    %v1977 = vpack.c.b16 %v1923, %v1921
    %v1978 = vpack.c.b16 %v1924, %v1922
    %v1979 = vpack.c.b16 %v1927, %v1925
    %v1980 = vpack.c.b16 %v1928, %v1926
    %v1981 = vpack.c.b16 %v1931, %v1929
    %v1982 = vpack.c.b16 %v1932, %v1930
    %v1983 = vpack.c.b16 %v1935, %v1933
    %v1984 = vpack.c.b16 %v1936, %v1934
    %v1985 = vpack.c.b16 %v1939, %v1937
    %v1986 = vpack.c.b16 %v1940, %v1938
    %v1987 = vpack.c.b16 %v1943, %v1941
    %v1988 = vpack.c.b16 %v1944, %v1942
    %v1989 = vpack.c.b16 %v1947, %v1945
    %v1990 = vpack.c.b16 %v1948, %v1946
    %v1991 = vpack.c.b16 %v1951, %v1949
    %v1992 = vpack.c.b16 %v1952, %v1950
    %v1993 = vpack.c.b16 %v1955, %v1953
    %v1994 = vpack.c.b16 %v1956, %v1954
    %v1995 = vpack.c.b16 %v1959, %v1957
    %v1996 = vpack.c.b16 %v1960, %v1958
    %v1997 = vpack.c.b16 %v1963, %v1961
    %v1998 = vpack.c.b16 %v1964, %v1962
    %v1999 = vpack.c.b16 %v1967, %v1965
    %v2000 = vpack.c.b16 %v1968, %v1966
    %2033 = vmatprep.subr.bf16.mxu0 %v1970
    %2034 = vmatpush1.bf16.msra.mxu0 %v1969
    %2035 = vmatprep.subr.bf16.mxu0 %v1972
    %2036 = vmatpush1.bf16.msra.mxu0 %v1971
    %2037 = vmatprep.subr.bf16.mxu0 %v1974
    %2038 = vmatpush1.bf16.msra.mxu0 %v1973
    %2039 = vmatprep.subr.bf16.mxu0 %v1976
    %2040 = vmatpush1.bf16.msra.mxu0 %v1975
    %2041 = vmatprep.subr.bf16.mxu0 %v1978
    %2042 = vmatpush1.bf16.msra.mxu0 %v1977
    %2043 = vmatprep.subr.bf16.mxu0 %v1980
    %2044 = vmatpush1.bf16.msra.mxu0 %v1979
    %2045 = vmatprep.subr.bf16.mxu0 %v1982
    %2046 = vmatpush1.bf16.msra.mxu0 %v1981
    %2047 = vmatprep.subr.bf16.mxu0 %v1984
    %2048 = vmatpush1.bf16.msra.mxu0 %v1983
    %2049 = vmatprep.subr.bf16.mxu0 %v1986
    %2050 = vmatpush1.bf16.msra.mxu0 %v1985
    %2051 = vmatprep.subr.bf16.mxu0 %v1988
    %2052 = vmatpush1.bf16.msra.mxu0 %v1987
    %2053 = vmatprep.subr.bf16.mxu0 %v1990
    %2054 = vmatpush1.bf16.msra.mxu0 %v1989
    %2055 = vmatprep.subr.bf16.mxu0 %v1992
    %2056 = vmatpush1.bf16.msra.mxu0 %v1991
    %2057 = vmatprep.subr.bf16.mxu0 %v1994
    %2058 = vmatpush1.bf16.msra.mxu0 %v1993
    %2059 = vmatprep.subr.bf16.mxu0 %v1996
    %2060 = vmatpush1.bf16.msra.mxu0 %v1995
    %2061 = vmatprep.subr.bf16.mxu0 %v1998
    %2062 = vmatpush1.bf16.msra.mxu0 %v1997
    %2063 = vmatprep.subr.bf16.mxu0 %v2000
    %2064 = vmatpush1.bf16.msra.mxu0 %v1999
    %2065 = vmatprep.mubr.bf16.mxu0 %v1828
    %2066 = vmatmul.mubr.bf16.gmra.mrb[0].mxu0 %v1827
    %v2067 = vpop.f32.mrb[0].mxu0
    %v2068 = vadd.f32 %v1866, %v2067
    %v2069 = vpop.f32.mrb[0].mxu0
    %v2070 = vadd.f32 %v1870, %v2069
    %v2071 = vpop.f32.mrb[0].mxu0
    %v2072 = vpop.f32.mrb[0].mxu0
    %2073 = vdwg.mxu0
    %v2074 = vxor.u32 %v2068, 2147483648
    %v2075 = vxor.u32 %v2070, 2147483648
    %v2076 = vmul.f32 %v2074, 1.442695
    %v2077 = vpow.pop %v2076
    %v2078 = vmul.f32 %v2075, 1.442695
    %v2079 = vpow.pop %v2078
    %v2080 = vadd.f32 %v2077, 1.0
    %v2081 = vadd.f32 %v2079, 1.0
    %v2082 = vrcp.pop %v2080
    %v2083 = vmul.f32 1.0, %v2082
    %v2084 = vrcp.pop %v2081
    %v2085 = vmul.f32 1.0, %v2084
    %v2086 = vpack.c.bf16 %v2083, %v2083
    %v2087 = vpack.c.bf16 %v2085, %v2085
    %v2090 = vunpack.c.l.b16 %v2086
    %v2091 = vunpack.c.l.b16 %v2087
    %v2092 = vpack.c.b16 %v2091, %v2090
    %2094 = vst [vmem:[%s18] sm:$0xff] %v2092
    %2095 = vst [vmem:[%s19] sm:$0xff] %v1165
    %2096 = vst [vmem:[%s19 + $0x8] sm:$0xff] %v1167
    // Predicated region
    $region106: #{vae_forward.1} parent=1 // pred_check
      _
    $region107: #{vae_forward.1} parent=1 // pred_check_branch
      %2098 = sbr.rel (0) target = $region109
    $region108: #{vae_forward.1} parent=1 // pred_region
      _
    $region109: #{vae_forward.1} parent=1 // pred_fallthru
      _
    // Predicated region
    $region110: #{vae_forward.1} parent=1 // pred_check
      _
    $region111: #{vae_forward.1} parent=1 // pred_check_branch
      %2100 = sbr.rel (0) target = $region113
    $region112: #{vae_forward.1} parent=1 // pred_region
      _
    $region113: #{vae_forward.1} parent=1 // pred_fallthru
      _
    // Predicated region
    $region114: #{vae_forward.1} parent=1 // pred_check
      _
    $region115: #{vae_forward.1} parent=1 // pred_check_branch
      %2102 = sbr.rel (0) target = $region117
    $region116: #{vae_forward.1} parent=1 // pred_region
      _
    $region117: #{vae_forward.1} parent=1 // pred_fallthru
      _
    // Predicated region
    $region118: #{vae_forward.1} parent=1 // pred_check
      _
    $region119: #{vae_forward.1} parent=1 // pred_check_branch
      %2104 = sbr.rel (0) target = $region121
    $region120: #{vae_forward.1} parent=1 // pred_region
      _
    $region121: #{vae_forward.1} parent=1 // pred_fallthru
      _
    %2105 = vsyncpa [#allocation3], 1
    %2106 = vsyncpa [#allocation5], 1
    %2107 = vsyncpa [#allocation8], 1
    %2108 = vsyncpa [#allocation11], 1
    %2109 = vsyncpa [#allocation14], 1

</llo_original>
